<compile_context>
chip_gen: v5e
topology: v5e:2x2
jax: 0.10.0
libtpu: 0.0.40
codegen_flags: <defaults>
</compile_context>

<pallas_src>
import functools

import jax
import jax.numpy as jnp
from jax.experimental import pallas as pl
from jax.experimental.pallas import tpu as pltpu

# ---------------- small BERTweet-like config ----------------
VOCAB = 100
MAX_POS = 64
HIDDEN = 32
N_HEADS = 4
HEAD_DIM = HIDDEN // N_HEADS
FFN = 64
N_LAYERS = 2
NUM_CLASSES = 2
LN_EPS = 1e-5    # RoBERTa / BERTweet layer_norm_eps
LANE = 128       # lane-dense output padding for the classifier head


# ---------------- fused Pallas kernel ----------------
def _layernorm(x, g, b, eps):
    mu = jnp.mean(x, axis=-1, keepdims=True)
    var = jnp.mean(jnp.square(x - mu), axis=-1, keepdims=True)
    return (x - mu) * jax.lax.rsqrt(var + eps) * g + b


def _fused_encoder_kernel(
    h0_ref, mask_ref,
    emb_g_ref, emb_b_ref,
    qkv_w_ref, qkv_b_ref, wo_ref, bo_ref,
    ln1_g_ref, ln1_b_ref,
    w1_ref, b1_ref, w2_ref, b2_ref,
    ln2_g_ref, ln2_b_ref,
    cls_w_ref, cls_b_ref,
    out_ref,
    *, batch, seq, eps, scale,
):
    # Embedding LayerNorm (no residual).
    h = _layernorm(h0_ref[...], emb_g_ref[...], emb_b_ref[...], eps)  # [B*S, H]
    mask = mask_ref[...]                                              # [B, S] additive

    for l in range(N_LAYERS):
        # --- fused QKV projection: one MXU matmul produces Q|K|V on the lane axis
        qkv = (
            jnp.dot(h, qkv_w_ref[l], preferred_element_type=jnp.float32)
            + qkv_b_ref[l]
        )                                                             # [B*S, 3H]

        # --- attention per (batch, head) on VMEM-resident values (no HBM relayout)
        batch_outs = []
        for b in range(batch):
            rows = slice(b * seq, (b + 1) * seq)
            m_b = mask[b:b + 1, :]                                    # [1, S]
            head_outs = []
            for hd in range(N_HEADS):
                c = hd * HEAD_DIM
                q_bh = qkv[rows, c:c + HEAD_DIM]                      # [S, D]
                k_bh = qkv[rows, HIDDEN + c:HIDDEN + c + HEAD_DIM]    # [S, D]
                v_bh = qkv[rows, 2 * HIDDEN + c:2 * HIDDEN + c + HEAD_DIM]
                s = jax.lax.dot_general(
                    q_bh, k_bh, (((1,), (1,)), ((), ())),
                    preferred_element_type=jnp.float32,
                ) * scale                                             # [S, S]
                s = s + m_b                                           # mask padded keys
                s = s - jnp.max(s, axis=-1, keepdims=True)
                p = jnp.exp(s)
                p = p * pl.reciprocal(
                    jnp.sum(p, axis=-1, keepdims=True), approx=True
                )
                head_outs.append(
                    jnp.dot(p, v_bh, preferred_element_type=jnp.float32)
                )                                                     # [S, D]
            batch_outs.append(jnp.concatenate(head_outs, axis=-1))    # [S, H]
        ao = jnp.concatenate(batch_outs, axis=0)                      # [B*S, H]

        # --- attention output projection + residual LayerNorm
        ao = jnp.dot(ao, wo_ref[l], preferred_element_type=jnp.float32) + bo_ref[l]
        h = _layernorm(ao + h, ln1_g_ref[l], ln1_b_ref[l], eps)

        # --- FFN
        # TODO(synk): RoBERTa/BERTweet use exact erf-GELU; tanh approximation
        # used for robust Mosaic lowering (EUP tanh path).
        f = jnp.dot(h, w1_ref[l], preferred_element_type=jnp.float32) + b1_ref[l]
        f = jax.nn.gelu(f, approximate=True)
        f = jnp.dot(f, w2_ref[l], preferred_element_type=jnp.float32) + b2_ref[l]
        h = _layernorm(f + h, ln2_g_ref[l], ln2_b_ref[l], eps)

    # --- classifier head fused in: gather [CLS] rows (row b*S per batch),
    # project to a lane-dense 128-wide slab (real classes in lanes [0, NUM_CLASSES)).
    pooled = jnp.concatenate(
        [h[b * seq:b * seq + 1, :] for b in range(batch)], axis=0
    )                                                                 # [B, H]
    out_ref[...] = (
        jnp.dot(pooled, cls_w_ref[...], preferred_element_type=jnp.float32)
        + cls_b_ref[...]
    )                                                                 # [B, 128]


# ---------------- pallas_call wrapper ----------------
def _spec2(shape):
    return pl.BlockSpec(shape, lambda i: (0, 0))


def _spec3(shape):
    return pl.BlockSpec(shape, lambda i: (0, 0, 0))


def bertweet_classifier_forward(packed, input_ids, attention_mask):
    B, S = input_ids.shape
    # Embedding gather is data-dependent -> plain JAX glue.
    # TODO(synk): real RoBERTa position ids start at padding_idx + 1 and skip
    # pad tokens; synthetic weights here use positions 0..S-1.
    h0 = (
        packed["word_emb"][input_ids]
        + packed["pos_emb"][jnp.arange(S)][None, :, :]
        + packed["type_emb"][0][None, None, :]
    ).reshape(B * S, HIDDEN).astype(jnp.float32)

    # Additive mask row: 0 for attend, -1e9 for pad keys (broadcast in-kernel).
    mask_add = (1.0 - attention_mask.astype(jnp.float32)) * -1e9     # [B, S]

    L = N_LAYERS
    kernel = functools.partial(
        _fused_encoder_kernel,
        batch=B, seq=S, eps=LN_EPS, scale=1.0 / (HEAD_DIM ** 0.5),
    )
    logits_pad = pl.pallas_call(
        kernel,
        grid=(1,),
        out_shape=jax.ShapeDtypeStruct((B, LANE), jnp.float32),
        in_specs=[
            _spec2((B * S, HIDDEN)),          # h0 (embeddings)
            _spec2((B, S)),                   # additive mask rows
            _spec2((1, HIDDEN)),              # emb LN gamma
            _spec2((1, HIDDEN)),              # emb LN beta
            _spec3((L, HIDDEN, 3 * HIDDEN)),  # fused QKV weight
            _spec3((L, 1, 3 * HIDDEN)),       # fused QKV bias
            _spec3((L, HIDDEN, HIDDEN)),      # attn output weight
            _spec3((L, 1, HIDDEN)),           # attn output bias
            _spec3((L, 1, HIDDEN)),           # LN1 gamma
            _spec3((L, 1, HIDDEN)),           # LN1 beta
            _spec3((L, HIDDEN, FFN)),         # FFN up weight
            _spec3((L, 1, FFN)),              # FFN up bias
            _spec3((L, FFN, HIDDEN)),         # FFN down weight
            _spec3((L, 1, HIDDEN)),           # FFN down bias
            _spec3((L, 1, HIDDEN)),           # LN2 gamma
            _spec3((L, 1, HIDDEN)),           # LN2 beta
            _spec2((HIDDEN, LANE)),           # classifier weight (lane-padded)
            _spec2((1, LANE)),                # classifier bias (lane-padded)
        ],
        out_specs=_spec2((B, LANE)),
        compiler_params=pltpu.CompilerParams(
            dimension_semantics=("arbitrary",)
        ),
    )(
        h0, mask_add,
        packed["emb_ln_g"], packed["emb_ln_b"],
        packed["qkv_w"], packed["qkv_b"], packed["wo"], packed["bo"],
        packed["ln1_g"], packed["ln1_b"],
        packed["w1"], packed["b1"], packed["w2"], packed["b2"],
        packed["ln2_g"], packed["ln2_b"],
        packed["cls_w"], packed["cls_b"],
    )
    # Dropout(0.1) in eval mode is the identity; slice the real classes back out.
    return logits_pad[:, :NUM_CLASSES]


# ---------------- deterministic synthetic parameters ----------------
def init_params(key):
    keys = iter(jax.random.split(key, 8 + N_LAYERS * 12))

    def nrm(shape, std=0.02):
        return std * jax.random.normal(next(keys), shape, dtype=jnp.float32)

    params = {
        "word_emb": nrm((VOCAB, HIDDEN)),
        "pos_emb": nrm((MAX_POS, HIDDEN)),
        "type_emb": nrm((1, HIDDEN)),
        "emb_ln_g": jnp.ones((HIDDEN,), jnp.float32),
        "emb_ln_b": jnp.zeros((HIDDEN,), jnp.float32),
        "cls_w": nrm((HIDDEN, NUM_CLASSES)),
        "cls_b": jnp.zeros((NUM_CLASSES,), jnp.float32),
        "layers": [],
    }
    for _ in range(N_LAYERS):
        params["layers"].append(
            {
                "wq": nrm((HIDDEN, HIDDEN)), "bq": jnp.zeros((HIDDEN,), jnp.float32),
                "wk": nrm((HIDDEN, HIDDEN)), "bk": jnp.zeros((HIDDEN,), jnp.float32),
                "wv": nrm((HIDDEN, HIDDEN)), "bv": jnp.zeros((HIDDEN,), jnp.float32),
                "wo": nrm((HIDDEN, HIDDEN)), "bo": jnp.zeros((HIDDEN,), jnp.float32),
                "ln1_g": jnp.ones((HIDDEN,), jnp.float32),
                "ln1_b": jnp.zeros((HIDDEN,), jnp.float32),
                "w1": nrm((HIDDEN, FFN)), "b1": jnp.zeros((FFN,), jnp.float32),
                "w2": nrm((FFN, HIDDEN)), "b2": jnp.zeros((HIDDEN,), jnp.float32),
                "ln2_g": jnp.ones((HIDDEN,), jnp.float32),
                "ln2_b": jnp.zeros((HIDDEN,), jnp.float32),
            }
        )
    return params


def pack_params(params):
    """Stack per-layer weights and pre-pad the classifier head (done once)."""
    L = len(params["layers"])
    layers = params["layers"]

    def stk(name):
        return jnp.stack([lp[name] for lp in layers], axis=0)

    packed = {
        "word_emb": params["word_emb"],
        "pos_emb": params["pos_emb"],
        "type_emb": params["type_emb"],
        "emb_ln_g": params["emb_ln_g"].reshape(1, HIDDEN),
        "emb_ln_b": params["emb_ln_b"].reshape(1, HIDDEN),
        # Fuse Q|K|V along the output (lane) axis.
        "qkv_w": jnp.stack(
            [jnp.concatenate([lp["wq"], lp["wk"], lp["wv"]], axis=1) for lp in layers]
        ),                                                        # [L, H, 3H]
        "qkv_b": jnp.stack(
            [jnp.concatenate([lp["bq"], lp["bk"], lp["bv"]]).reshape(1, 3 * HIDDEN)
             for lp in layers]
        ),                                                        # [L, 1, 3H]
        "wo": stk("wo"),
        "bo": stk("bo").reshape(L, 1, HIDDEN),
        "ln1_g": stk("ln1_g").reshape(L, 1, HIDDEN),
        "ln1_b": stk("ln1_b").reshape(L, 1, HIDDEN),
        "w1": stk("w1"),
        "b1": stk("b1").reshape(L, 1, FFN),
        "w2": stk("w2"),
        "b2": stk("b2").reshape(L, 1, HIDDEN),
        "ln2_g": stk("ln2_g").reshape(L, 1, HIDDEN),
        "ln2_b": stk("ln2_b").reshape(L, 1, HIDDEN),
        # Classifier padded to a lane-dense 128-wide output slab.
        "cls_w": jnp.zeros((HIDDEN, LANE), jnp.float32)
        .at[:, :NUM_CLASSES].set(params["cls_w"]),
        "cls_b": jnp.zeros((1, LANE), jnp.float32)
        .at[:, :NUM_CLASSES].set(params["cls_b"][None, :]),
    }
    return packed


if __name__ == "__main__":
    key = jax.random.PRNGKey(0)
    pkey, ikey = jax.random.split(key)
    params = init_params(pkey)
    packed = pack_params(params)

    B, S = 2, 8
    input_ids = jax.random.randint(ikey, (B, S), 0, VOCAB, dtype=jnp.int32)
    attention_mask = jnp.ones((B, S), dtype=jnp.int32).at[1, 6:].set(0)

    fwd = jax.jit(bertweet_classifier_forward)
    logits = fwd(packed, input_ids, attention_mask)
    jax.block_until_ready(logits)
    assert logits.shape == (B, NUM_CLASSES)
    print("KERNEL_OK")
</pallas_src>

<mosaic_0001>
module attributes {stable_mosaic.version = 11 : i64} {
  func.func @_fused_encoder_kernel(%arg0: i32, %arg1: memref<16x32xf32, #tpu.memory_space<vmem>>, %arg2: memref<2x8xf32, #tpu.memory_space<vmem>>, %arg3: memref<1x32xf32, #tpu.memory_space<vmem>>, %arg4: memref<1x32xf32, #tpu.memory_space<vmem>>, %arg5: memref<2x32x96xf32, #tpu.memory_space<vmem>>, %arg6: memref<2x1x96xf32, #tpu.memory_space<vmem>>, %arg7: memref<2x32x32xf32, #tpu.memory_space<vmem>>, %arg8: memref<2x1x32xf32, #tpu.memory_space<vmem>>, %arg9: memref<2x1x32xf32, #tpu.memory_space<vmem>>, %arg10: memref<2x1x32xf32, #tpu.memory_space<vmem>>, %arg11: memref<2x32x64xf32, #tpu.memory_space<vmem>>, %arg12: memref<2x1x64xf32, #tpu.memory_space<vmem>>, %arg13: memref<2x64x32xf32, #tpu.memory_space<vmem>>, %arg14: memref<2x1x32xf32, #tpu.memory_space<vmem>>, %arg15: memref<2x1x32xf32, #tpu.memory_space<vmem>>, %arg16: memref<2x1x32xf32, #tpu.memory_space<vmem>>, %arg17: memref<32x128xf32, #tpu.memory_space<vmem>>, %arg18: memref<1x128xf32, #tpu.memory_space<vmem>>, %arg19: memref<2x128xf32, #tpu.memory_space<vmem>>) attributes {dimension_semantics = [#tpu.dimension_semantics<arbitrary>], iteration_bounds = array<i64: 1>, scalar_prefetch = 0 : i64, scratch_operands = 0 : i64, tpu.core_type = #tpu.core_type<tc>, window_params = [{pipeline_mode = #tpu.pipeline_mode<synchronous>, transform_indices = @transform_0, window_bounds = array<i64: 16, 32>}, {pipeline_mode = #tpu.pipeline_mode<synchronous>, transform_indices = @transform_1, window_bounds = array<i64: 2, 8>}, {pipeline_mode = #tpu.pipeline_mode<synchronous>, transform_indices = @transform_2, window_bounds = array<i64: 1, 32>}, {pipeline_mode = #tpu.pipeline_mode<synchronous>, transform_indices = @transform_3, window_bounds = array<i64: 1, 32>}, {pipeline_mode = #tpu.pipeline_mode<synchronous>, transform_indices = @transform_4, window_bounds = array<i64: 2, 32, 96>}, {pipeline_mode = #tpu.pipeline_mode<synchronous>, transform_indices = @transform_5, window_bounds = array<i64: 2, 1, 96>}, {pipeline_mode = #tpu.pipeline_mode<synchronous>, transform_indices = @transform_6, window_bounds = array<i64: 2, 32, 32>}, {pipeline_mode = #tpu.pipeline_mode<synchronous>, transform_indices = @transform_7, window_bounds = array<i64: 2, 1, 32>}, {pipeline_mode = #tpu.pipeline_mode<synchronous>, transform_indices = @transform_8, window_bounds = array<i64: 2, 1, 32>}, {pipeline_mode = #tpu.pipeline_mode<synchronous>, transform_indices = @transform_9, window_bounds = array<i64: 2, 1, 32>}, {pipeline_mode = #tpu.pipeline_mode<synchronous>, transform_indices = @transform_10, window_bounds = array<i64: 2, 32, 64>}, {pipeline_mode = #tpu.pipeline_mode<synchronous>, transform_indices = @transform_11, window_bounds = array<i64: 2, 1, 64>}, {pipeline_mode = #tpu.pipeline_mode<synchronous>, transform_indices = @transform_12, window_bounds = array<i64: 2, 64, 32>}, {pipeline_mode = #tpu.pipeline_mode<synchronous>, transform_indices = @transform_13, window_bounds = array<i64: 2, 1, 32>}, {pipeline_mode = #tpu.pipeline_mode<synchronous>, transform_indices = @transform_14, window_bounds = array<i64: 2, 1, 32>}, {pipeline_mode = #tpu.pipeline_mode<synchronous>, transform_indices = @transform_15, window_bounds = array<i64: 2, 1, 32>}, {pipeline_mode = #tpu.pipeline_mode<synchronous>, transform_indices = @transform_16, window_bounds = array<i64: 32, 128>}, {pipeline_mode = #tpu.pipeline_mode<synchronous>, transform_indices = @transform_17, window_bounds = array<i64: 1, 128>}, {pipeline_mode = #tpu.pipeline_mode<synchronous>, transform_indices = @transform_18, window_bounds = array<i64: 2, 128>}]} {
    %c0 = arith.constant 0 : index
    %c0_0 = arith.constant 0 : index
    %0 = vector.load %arg1[%c0, %c0_0] : memref<16x32xf32, #tpu.memory_space<vmem>>, vector<16x32xf32>
    %c0_1 = arith.constant 0 : index
    %c0_2 = arith.constant 0 : index
    %1 = vector.load %arg3[%c0_1, %c0_2] : memref<1x32xf32, #tpu.memory_space<vmem>>, vector<1x32xf32>
    %c0_3 = arith.constant 0 : index
    %c0_4 = arith.constant 0 : index
    %2 = vector.load %arg4[%c0_3, %c0_4] : memref<1x32xf32, #tpu.memory_space<vmem>>, vector<1x32xf32>
    %cst = arith.constant dense<0.000000e+00> : vector<16xf32>
    %3 = vector.multi_reduction <add>, %0, %cst [1] : vector<16x32xf32> to vector<16xf32>
    %4 = vector.shape_cast %3 : vector<16xf32> to vector<16x1xf32>
    %cst_5 = arith.constant 3.200000e+01 : f32
    %5 = vector.broadcast %cst_5 : f32 to vector<16x1xf32>
    %6 = arith.divf %4, %5 : vector<16x1xf32>
    %7 = vector.broadcast %6 : vector<16x1xf32> to vector<16x32xf32>
    %8 = arith.subf %0, %7 : vector<16x32xf32>
    %9 = arith.mulf %8, %8 : vector<16x32xf32>
    %cst_6 = arith.constant dense<0.000000e+00> : vector<16xf32>
    %10 = vector.multi_reduction <add>, %9, %cst_6 [1] : vector<16x32xf32> to vector<16xf32>
    %11 = vector.shape_cast %10 : vector<16xf32> to vector<16x1xf32>
    %cst_7 = arith.constant 3.200000e+01 : f32
    %12 = vector.broadcast %cst_7 : f32 to vector<16x1xf32>
    %13 = arith.divf %11, %12 : vector<16x1xf32>
    %14 = vector.broadcast %6 : vector<16x1xf32> to vector<16x32xf32>
    %15 = arith.subf %0, %14 : vector<16x32xf32>
    %cst_8 = arith.constant 9.99999974E-6 : f32
    %16 = vector.broadcast %cst_8 : f32 to vector<16x1xf32>
    %17 = arith.addf %13, %16 : vector<16x1xf32>
    %18 = math.rsqrt %17 : vector<16x1xf32>
    %19 = vector.broadcast %18 : vector<16x1xf32> to vector<16x32xf32>
    %20 = arith.mulf %15, %19 : vector<16x32xf32>
    %21 = vector.broadcast %1 : vector<1x32xf32> to vector<16x32xf32>
    %22 = arith.mulf %20, %21 : vector<16x32xf32>
    %23 = vector.broadcast %2 : vector<1x32xf32> to vector<16x32xf32>
    %24 = arith.addf %22, %23 : vector<16x32xf32>
    %c0_9 = arith.constant 0 : index
    %c0_10 = arith.constant 0 : index
    %25 = vector.load %arg2[%c0_9, %c0_10] : memref<2x8xf32, #tpu.memory_space<vmem>>, vector<2x8xf32>
    %c0_11 = arith.constant 0 : index
    %c0_12 = arith.constant 0 : index
    %c0_13 = arith.constant 0 : index
    %26 = vector.load %arg5[%c0_11, %c0_12, %c0_13] : memref<2x32x96xf32, #tpu.memory_space<vmem>>, vector<1x32x96xf32>
    %27 = vector.shape_cast %26 : vector<1x32x96xf32> to vector<32x96xf32>
    %cst_14 = arith.constant dense<0.000000e+00> : vector<16x96xf32>
    %28 = tpu.matmul %24, %27, %cst_14 {dimension_numbers = #tpu.dot_dimension_numbers<[1], [0], [0], [1], [0, 0, 1, 1], [], []>} : vector<16x32xf32>, vector<32x96xf32>, vector<16x96xf32> -> vector<16x96xf32>
    %c0_15 = arith.constant 0 : index
    %c0_16 = arith.constant 0 : index
    %c0_17 = arith.constant 0 : index
    %29 = vector.load %arg6[%c0_15, %c0_16, %c0_17] : memref<2x1x96xf32, #tpu.memory_space<vmem>>, vector<1x1x96xf32>
    %30 = vector.shape_cast %29 : vector<1x1x96xf32> to vector<1x96xf32>
    %31 = vector.broadcast %30 : vector<1x96xf32> to vector<16x96xf32>
    %32 = arith.addf %28, %31 : vector<16x96xf32>
    %33 = vector.extract_strided_slice %25 {offsets = [0, 0], sizes = [1, 8], strides = [1, 1]} : vector<2x8xf32> to vector<1x8xf32>
    %34 = vector.extract_strided_slice %32 {offsets = [0, 0], sizes = [8, 8], strides = [1, 1]} : vector<16x96xf32> to vector<8x8xf32>
    %35 = vector.extract_strided_slice %32 {offsets = [0, 32], sizes = [8, 8], strides = [1, 1]} : vector<16x96xf32> to vector<8x8xf32>
    %36 = vector.extract_strided_slice %32 {offsets = [0, 64], sizes = [8, 8], strides = [1, 1]} : vector<16x96xf32> to vector<8x8xf32>
    %cst_18 = arith.constant dense<0.000000e+00> : vector<8x8xf32>
    %37 = tpu.matmul %34, %35, %cst_18 {dimension_numbers = #tpu.dot_dimension_numbers<[1], [1], [0], [0], [0, 0, 1, 0], [], []>} : vector<8x8xf32>, vector<8x8xf32>, vector<8x8xf32> -> vector<8x8xf32>
    %cst_19 = arith.constant 0.353553385 : f32
    %38 = vector.broadcast %cst_19 : f32 to vector<8x8xf32>
    %39 = arith.mulf %37, %38 : vector<8x8xf32>
    %40 = vector.broadcast %33 : vector<1x8xf32> to vector<8x8xf32>
    %41 = arith.addf %39, %40 : vector<8x8xf32>
    %cst_20 = arith.constant dense<0xFF800000> : vector<8xf32>
    %42 = vector.multi_reduction <maximumf>, %41, %cst_20 [1] : vector<8x8xf32> to vector<8xf32>
    %43 = vector.shape_cast %42 : vector<8xf32> to vector<8x1xf32>
    %44 = vector.broadcast %43 : vector<8x1xf32> to vector<8x8xf32>
    %45 = arith.subf %41, %44 : vector<8x8xf32>
    %46 = math.exp %45 : vector<8x8xf32>
    %cst_21 = arith.constant dense<0.000000e+00> : vector<8xf32>
    %47 = vector.multi_reduction <add>, %46, %cst_21 [1] : vector<8x8xf32> to vector<8xf32>
    %48 = vector.shape_cast %47 : vector<8xf32> to vector<8x1xf32>
    %49 = tpu.reciprocal %48 {approx = true} : vector<8x1xf32> -> vector<8x1xf32>
    %50 = vector.broadcast %49 : vector<8x1xf32> to vector<8x8xf32>
    %51 = arith.mulf %46, %50 : vector<8x8xf32>
    %cst_22 = arith.constant dense<0.000000e+00> : vector<8x8xf32>
    %52 = tpu.matmul %51, %36, %cst_22 {dimension_numbers = #tpu.dot_dimension_numbers<[1], [0], [0], [1], [0, 0, 1, 1], [], []>} : vector<8x8xf32>, vector<8x8xf32>, vector<8x8xf32> -> vector<8x8xf32>
    %53 = vector.extract_strided_slice %32 {offsets = [0, 8], sizes = [8, 8], strides = [1, 1]} : vector<16x96xf32> to vector<8x8xf32>
    %54 = vector.extract_strided_slice %32 {offsets = [0, 40], sizes = [8, 8], strides = [1, 1]} : vector<16x96xf32> to vector<8x8xf32>
    %55 = vector.extract_strided_slice %32 {offsets = [0, 72], sizes = [8, 8], strides = [1, 1]} : vector<16x96xf32> to vector<8x8xf32>
    %cst_23 = arith.constant dense<0.000000e+00> : vector<8x8xf32>
    %56 = tpu.matmul %53, %54, %cst_23 {dimension_numbers = #tpu.dot_dimension_numbers<[1], [1], [0], [0], [0, 0, 1, 0], [], []>} : vector<8x8xf32>, vector<8x8xf32>, vector<8x8xf32> -> vector<8x8xf32>
    %cst_24 = arith.constant 0.353553385 : f32
    %57 = vector.broadcast %cst_24 : f32 to vector<8x8xf32>
    %58 = arith.mulf %56, %57 : vector<8x8xf32>
    %59 = vector.broadcast %33 : vector<1x8xf32> to vector<8x8xf32>
    %60 = arith.addf %58, %59 : vector<8x8xf32>
    %cst_25 = arith.constant dense<0xFF800000> : vector<8xf32>
    %61 = vector.multi_reduction <maximumf>, %60, %cst_25 [1] : vector<8x8xf32> to vector<8xf32>
    %62 = vector.shape_cast %61 : vector<8xf32> to vector<8x1xf32>
    %63 = vector.broadcast %62 : vector<8x1xf32> to vector<8x8xf32>
    %64 = arith.subf %60, %63 : vector<8x8xf32>
    %65 = math.exp %64 : vector<8x8xf32>
    %cst_26 = arith.constant dense<0.000000e+00> : vector<8xf32>
    %66 = vector.multi_reduction <add>, %65, %cst_26 [1] : vector<8x8xf32> to vector<8xf32>
    %67 = vector.shape_cast %66 : vector<8xf32> to vector<8x1xf32>
    %68 = tpu.reciprocal %67 {approx = true} : vector<8x1xf32> -> vector<8x1xf32>
    %69 = vector.broadcast %68 : vector<8x1xf32> to vector<8x8xf32>
    %70 = arith.mulf %65, %69 : vector<8x8xf32>
    %cst_27 = arith.constant dense<0.000000e+00> : vector<8x8xf32>
    %71 = tpu.matmul %70, %55, %cst_27 {dimension_numbers = #tpu.dot_dimension_numbers<[1], [0], [0], [1], [0, 0, 1, 1], [], []>} : vector<8x8xf32>, vector<8x8xf32>, vector<8x8xf32> -> vector<8x8xf32>
    %72 = vector.extract_strided_slice %32 {offsets = [0, 16], sizes = [8, 8], strides = [1, 1]} : vector<16x96xf32> to vector<8x8xf32>
    %73 = vector.extract_strided_slice %32 {offsets = [0, 48], sizes = [8, 8], strides = [1, 1]} : vector<16x96xf32> to vector<8x8xf32>
    %74 = vector.extract_strided_slice %32 {offsets = [0, 80], sizes = [8, 8], strides = [1, 1]} : vector<16x96xf32> to vector<8x8xf32>
    %cst_28 = arith.constant dense<0.000000e+00> : vector<8x8xf32>
    %75 = tpu.matmul %72, %73, %cst_28 {dimension_numbers = #tpu.dot_dimension_numbers<[1], [1], [0], [0], [0, 0, 1, 0], [], []>} : vector<8x8xf32>, vector<8x8xf32>, vector<8x8xf32> -> vector<8x8xf32>
    %cst_29 = arith.constant 0.353553385 : f32
    %76 = vector.broadcast %cst_29 : f32 to vector<8x8xf32>
    %77 = arith.mulf %75, %76 : vector<8x8xf32>
    %78 = vector.broadcast %33 : vector<1x8xf32> to vector<8x8xf32>
    %79 = arith.addf %77, %78 : vector<8x8xf32>
    %cst_30 = arith.constant dense<0xFF800000> : vector<8xf32>
    %80 = vector.multi_reduction <maximumf>, %79, %cst_30 [1] : vector<8x8xf32> to vector<8xf32>
    %81 = vector.shape_cast %80 : vector<8xf32> to vector<8x1xf32>
    %82 = vector.broadcast %81 : vector<8x1xf32> to vector<8x8xf32>
    %83 = arith.subf %79, %82 : vector<8x8xf32>
    %84 = math.exp %83 : vector<8x8xf32>
    %cst_31 = arith.constant dense<0.000000e+00> : vector<8xf32>
    %85 = vector.multi_reduction <add>, %84, %cst_31 [1] : vector<8x8xf32> to vector<8xf32>
    %86 = vector.shape_cast %85 : vector<8xf32> to vector<8x1xf32>
    %87 = tpu.reciprocal %86 {approx = true} : vector<8x1xf32> -> vector<8x1xf32>
    %88 = vector.broadcast %87 : vector<8x1xf32> to vector<8x8xf32>
    %89 = arith.mulf %84, %88 : vector<8x8xf32>
    %cst_32 = arith.constant dense<0.000000e+00> : vector<8x8xf32>
    %90 = tpu.matmul %89, %74, %cst_32 {dimension_numbers = #tpu.dot_dimension_numbers<[1], [0], [0], [1], [0, 0, 1, 1], [], []>} : vector<8x8xf32>, vector<8x8xf32>, vector<8x8xf32> -> vector<8x8xf32>
    %91 = vector.extract_strided_slice %32 {offsets = [0, 24], sizes = [8, 8], strides = [1, 1]} : vector<16x96xf32> to vector<8x8xf32>
    %92 = vector.extract_strided_slice %32 {offsets = [0, 56], sizes = [8, 8], strides = [1, 1]} : vector<16x96xf32> to vector<8x8xf32>
    %93 = vector.extract_strided_slice %32 {offsets = [0, 88], sizes = [8, 8], strides = [1, 1]} : vector<16x96xf32> to vector<8x8xf32>
    %cst_33 = arith.constant dense<0.000000e+00> : vector<8x8xf32>
    %94 = tpu.matmul %91, %92, %cst_33 {dimension_numbers = #tpu.dot_dimension_numbers<[1], [1], [0], [0], [0, 0, 1, 0], [], []>} : vector<8x8xf32>, vector<8x8xf32>, vector<8x8xf32> -> vector<8x8xf32>
    %cst_34 = arith.constant 0.353553385 : f32
    %95 = vector.broadcast %cst_34 : f32 to vector<8x8xf32>
    %96 = arith.mulf %94, %95 : vector<8x8xf32>
    %97 = vector.broadcast %33 : vector<1x8xf32> to vector<8x8xf32>
    %98 = arith.addf %96, %97 : vector<8x8xf32>
    %cst_35 = arith.constant dense<0xFF800000> : vector<8xf32>
    %99 = vector.multi_reduction <maximumf>, %98, %cst_35 [1] : vector<8x8xf32> to vector<8xf32>
    %100 = vector.shape_cast %99 : vector<8xf32> to vector<8x1xf32>
    %101 = vector.broadcast %100 : vector<8x1xf32> to vector<8x8xf32>
    %102 = arith.subf %98, %101 : vector<8x8xf32>
    %103 = math.exp %102 : vector<8x8xf32>
    %cst_36 = arith.constant dense<0.000000e+00> : vector<8xf32>
    %104 = vector.multi_reduction <add>, %103, %cst_36 [1] : vector<8x8xf32> to vector<8xf32>
    %105 = vector.shape_cast %104 : vector<8xf32> to vector<8x1xf32>
    %106 = tpu.reciprocal %105 {approx = true} : vector<8x1xf32> -> vector<8x1xf32>
    %107 = vector.broadcast %106 : vector<8x1xf32> to vector<8x8xf32>
    %108 = arith.mulf %103, %107 : vector<8x8xf32>
    %cst_37 = arith.constant dense<0.000000e+00> : vector<8x8xf32>
    %109 = tpu.matmul %108, %93, %cst_37 {dimension_numbers = #tpu.dot_dimension_numbers<[1], [0], [0], [1], [0, 0, 1, 1], [], []>} : vector<8x8xf32>, vector<8x8xf32>, vector<8x8xf32> -> vector<8x8xf32>
    %110 = tpu.concatenate %52, %71, %90, %109 in 1 : vector<8x8xf32>, vector<8x8xf32>, vector<8x8xf32>, vector<8x8xf32> -> vector<8x32xf32>
    %111 = vector.extract_strided_slice %25 {offsets = [1, 0], sizes = [1, 8], strides = [1, 1]} : vector<2x8xf32> to vector<1x8xf32>
    %112 = vector.extract_strided_slice %32 {offsets = [8, 0], sizes = [8, 8], strides = [1, 1]} : vector<16x96xf32> to vector<8x8xf32>
    %113 = vector.extract_strided_slice %32 {offsets = [8, 32], sizes = [8, 8], strides = [1, 1]} : vector<16x96xf32> to vector<8x8xf32>
    %114 = vector.extract_strided_slice %32 {offsets = [8, 64], sizes = [8, 8], strides = [1, 1]} : vector<16x96xf32> to vector<8x8xf32>
    %cst_38 = arith.constant dense<0.000000e+00> : vector<8x8xf32>
    %115 = tpu.matmul %112, %113, %cst_38 {dimension_numbers = #tpu.dot_dimension_numbers<[1], [1], [0], [0], [0, 0, 1, 0], [], []>} : vector<8x8xf32>, vector<8x8xf32>, vector<8x8xf32> -> vector<8x8xf32>
    %cst_39 = arith.constant 0.353553385 : f32
    %116 = vector.broadcast %cst_39 : f32 to vector<8x8xf32>
    %117 = arith.mulf %115, %116 : vector<8x8xf32>
    %118 = vector.broadcast %111 : vector<1x8xf32> to vector<8x8xf32>
    %119 = arith.addf %117, %118 : vector<8x8xf32>
    %cst_40 = arith.constant dense<0xFF800000> : vector<8xf32>
    %120 = vector.multi_reduction <maximumf>, %119, %cst_40 [1] : vector<8x8xf32> to vector<8xf32>
    %121 = vector.shape_cast %120 : vector<8xf32> to vector<8x1xf32>
    %122 = vector.broadcast %121 : vector<8x1xf32> to vector<8x8xf32>
    %123 = arith.subf %119, %122 : vector<8x8xf32>
    %124 = math.exp %123 : vector<8x8xf32>
    %cst_41 = arith.constant dense<0.000000e+00> : vector<8xf32>
    %125 = vector.multi_reduction <add>, %124, %cst_41 [1] : vector<8x8xf32> to vector<8xf32>
    %126 = vector.shape_cast %125 : vector<8xf32> to vector<8x1xf32>
    %127 = tpu.reciprocal %126 {approx = true} : vector<8x1xf32> -> vector<8x1xf32>
    %128 = vector.broadcast %127 : vector<8x1xf32> to vector<8x8xf32>
    %129 = arith.mulf %124, %128 : vector<8x8xf32>
    %cst_42 = arith.constant dense<0.000000e+00> : vector<8x8xf32>
    %130 = tpu.matmul %129, %114, %cst_42 {dimension_numbers = #tpu.dot_dimension_numbers<[1], [0], [0], [1], [0, 0, 1, 1], [], []>} : vector<8x8xf32>, vector<8x8xf32>, vector<8x8xf32> -> vector<8x8xf32>
    %131 = vector.extract_strided_slice %32 {offsets = [8, 8], sizes = [8, 8], strides = [1, 1]} : vector<16x96xf32> to vector<8x8xf32>
    %132 = vector.extract_strided_slice %32 {offsets = [8, 40], sizes = [8, 8], strides = [1, 1]} : vector<16x96xf32> to vector<8x8xf32>
    %133 = vector.extract_strided_slice %32 {offsets = [8, 72], sizes = [8, 8], strides = [1, 1]} : vector<16x96xf32> to vector<8x8xf32>
    %cst_43 = arith.constant dense<0.000000e+00> : vector<8x8xf32>
    %134 = tpu.matmul %131, %132, %cst_43 {dimension_numbers = #tpu.dot_dimension_numbers<[1], [1], [0], [0], [0, 0, 1, 0], [], []>} : vector<8x8xf32>, vector<8x8xf32>, vector<8x8xf32> -> vector<8x8xf32>
    %cst_44 = arith.constant 0.353553385 : f32
    %135 = vector.broadcast %cst_44 : f32 to vector<8x8xf32>
    %136 = arith.mulf %134, %135 : vector<8x8xf32>
    %137 = vector.broadcast %111 : vector<1x8xf32> to vector<8x8xf32>
    %138 = arith.addf %136, %137 : vector<8x8xf32>
    %cst_45 = arith.constant dense<0xFF800000> : vector<8xf32>
    %139 = vector.multi_reduction <maximumf>, %138, %cst_45 [1] : vector<8x8xf32> to vector<8xf32>
    %140 = vector.shape_cast %139 : vector<8xf32> to vector<8x1xf32>
    %141 = vector.broadcast %140 : vector<8x1xf32> to vector<8x8xf32>
    %142 = arith.subf %138, %141 : vector<8x8xf32>
    %143 = math.exp %142 : vector<8x8xf32>
    %cst_46 = arith.constant dense<0.000000e+00> : vector<8xf32>
    %144 = vector.multi_reduction <add>, %143, %cst_46 [1] : vector<8x8xf32> to vector<8xf32>
    %145 = vector.shape_cast %144 : vector<8xf32> to vector<8x1xf32>
    %146 = tpu.reciprocal %145 {approx = true} : vector<8x1xf32> -> vector<8x1xf32>
    %147 = vector.broadcast %146 : vector<8x1xf32> to vector<8x8xf32>
    %148 = arith.mulf %143, %147 : vector<8x8xf32>
    %cst_47 = arith.constant dense<0.000000e+00> : vector<8x8xf32>
    %149 = tpu.matmul %148, %133, %cst_47 {dimension_numbers = #tpu.dot_dimension_numbers<[1], [0], [0], [1], [0, 0, 1, 1], [], []>} : vector<8x8xf32>, vector<8x8xf32>, vector<8x8xf32> -> vector<8x8xf32>
    %150 = vector.extract_strided_slice %32 {offsets = [8, 16], sizes = [8, 8], strides = [1, 1]} : vector<16x96xf32> to vector<8x8xf32>
    %151 = vector.extract_strided_slice %32 {offsets = [8, 48], sizes = [8, 8], strides = [1, 1]} : vector<16x96xf32> to vector<8x8xf32>
    %152 = vector.extract_strided_slice %32 {offsets = [8, 80], sizes = [8, 8], strides = [1, 1]} : vector<16x96xf32> to vector<8x8xf32>
    %cst_48 = arith.constant dense<0.000000e+00> : vector<8x8xf32>
    %153 = tpu.matmul %150, %151, %cst_48 {dimension_numbers = #tpu.dot_dimension_numbers<[1], [1], [0], [0], [0, 0, 1, 0], [], []>} : vector<8x8xf32>, vector<8x8xf32>, vector<8x8xf32> -> vector<8x8xf32>
    %cst_49 = arith.constant 0.353553385 : f32
    %154 = vector.broadcast %cst_49 : f32 to vector<8x8xf32>
    %155 = arith.mulf %153, %154 : vector<8x8xf32>
    %156 = vector.broadcast %111 : vector<1x8xf32> to vector<8x8xf32>
    %157 = arith.addf %155, %156 : vector<8x8xf32>
    %cst_50 = arith.constant dense<0xFF800000> : vector<8xf32>
    %158 = vector.multi_reduction <maximumf>, %157, %cst_50 [1] : vector<8x8xf32> to vector<8xf32>
    %159 = vector.shape_cast %158 : vector<8xf32> to vector<8x1xf32>
    %160 = vector.broadcast %159 : vector<8x1xf32> to vector<8x8xf32>
    %161 = arith.subf %157, %160 : vector<8x8xf32>
    %162 = math.exp %161 : vector<8x8xf32>
    %cst_51 = arith.constant dense<0.000000e+00> : vector<8xf32>
    %163 = vector.multi_reduction <add>, %162, %cst_51 [1] : vector<8x8xf32> to vector<8xf32>
    %164 = vector.shape_cast %163 : vector<8xf32> to vector<8x1xf32>
    %165 = tpu.reciprocal %164 {approx = true} : vector<8x1xf32> -> vector<8x1xf32>
    %166 = vector.broadcast %165 : vector<8x1xf32> to vector<8x8xf32>
    %167 = arith.mulf %162, %166 : vector<8x8xf32>
    %cst_52 = arith.constant dense<0.000000e+00> : vector<8x8xf32>
    %168 = tpu.matmul %167, %152, %cst_52 {dimension_numbers = #tpu.dot_dimension_numbers<[1], [0], [0], [1], [0, 0, 1, 1], [], []>} : vector<8x8xf32>, vector<8x8xf32>, vector<8x8xf32> -> vector<8x8xf32>
    %169 = vector.extract_strided_slice %32 {offsets = [8, 24], sizes = [8, 8], strides = [1, 1]} : vector<16x96xf32> to vector<8x8xf32>
    %170 = vector.extract_strided_slice %32 {offsets = [8, 56], sizes = [8, 8], strides = [1, 1]} : vector<16x96xf32> to vector<8x8xf32>
    %171 = vector.extract_strided_slice %32 {offsets = [8, 88], sizes = [8, 8], strides = [1, 1]} : vector<16x96xf32> to vector<8x8xf32>
    %cst_53 = arith.constant dense<0.000000e+00> : vector<8x8xf32>
    %172 = tpu.matmul %169, %170, %cst_53 {dimension_numbers = #tpu.dot_dimension_numbers<[1], [1], [0], [0], [0, 0, 1, 0], [], []>} : vector<8x8xf32>, vector<8x8xf32>, vector<8x8xf32> -> vector<8x8xf32>
    %cst_54 = arith.constant 0.353553385 : f32
    %173 = vector.broadcast %cst_54 : f32 to vector<8x8xf32>
    %174 = arith.mulf %172, %173 : vector<8x8xf32>
    %175 = vector.broadcast %111 : vector<1x8xf32> to vector<8x8xf32>
    %176 = arith.addf %174, %175 : vector<8x8xf32>
    %cst_55 = arith.constant dense<0xFF800000> : vector<8xf32>
    %177 = vector.multi_reduction <maximumf>, %176, %cst_55 [1] : vector<8x8xf32> to vector<8xf32>
    %178 = vector.shape_cast %177 : vector<8xf32> to vector<8x1xf32>
    %179 = vector.broadcast %178 : vector<8x1xf32> to vector<8x8xf32>
    %180 = arith.subf %176, %179 : vector<8x8xf32>
    %181 = math.exp %180 : vector<8x8xf32>
    %cst_56 = arith.constant dense<0.000000e+00> : vector<8xf32>
    %182 = vector.multi_reduction <add>, %181, %cst_56 [1] : vector<8x8xf32> to vector<8xf32>
    %183 = vector.shape_cast %182 : vector<8xf32> to vector<8x1xf32>
    %184 = tpu.reciprocal %183 {approx = true} : vector<8x1xf32> -> vector<8x1xf32>
    %185 = vector.broadcast %184 : vector<8x1xf32> to vector<8x8xf32>
    %186 = arith.mulf %181, %185 : vector<8x8xf32>
    %cst_57 = arith.constant dense<0.000000e+00> : vector<8x8xf32>
    %187 = tpu.matmul %186, %171, %cst_57 {dimension_numbers = #tpu.dot_dimension_numbers<[1], [0], [0], [1], [0, 0, 1, 1], [], []>} : vector<8x8xf32>, vector<8x8xf32>, vector<8x8xf32> -> vector<8x8xf32>
    %188 = tpu.concatenate %130, %149, %168, %187 in 1 : vector<8x8xf32>, vector<8x8xf32>, vector<8x8xf32>, vector<8x8xf32> -> vector<8x32xf32>
    %189 = tpu.concatenate %110, %188 in 0 : vector<8x32xf32>, vector<8x32xf32> -> vector<16x32xf32>
    %c0_58 = arith.constant 0 : index
    %c0_59 = arith.constant 0 : index
    %c0_60 = arith.constant 0 : index
    %190 = vector.load %arg7[%c0_58, %c0_59, %c0_60] : memref<2x32x32xf32, #tpu.memory_space<vmem>>, vector<1x32x32xf32>
    %191 = vector.shape_cast %190 : vector<1x32x32xf32> to vector<32x32xf32>
    %cst_61 = arith.constant dense<0.000000e+00> : vector<16x32xf32>
    %192 = tpu.matmul %189, %191, %cst_61 {dimension_numbers = #tpu.dot_dimension_numbers<[1], [0], [0], [1], [0, 0, 1, 1], [], []>} : vector<16x32xf32>, vector<32x32xf32>, vector<16x32xf32> -> vector<16x32xf32>
    %c0_62 = arith.constant 0 : index
    %c0_63 = arith.constant 0 : index
    %c0_64 = arith.constant 0 : index
    %193 = vector.load %arg8[%c0_62, %c0_63, %c0_64] : memref<2x1x32xf32, #tpu.memory_space<vmem>>, vector<1x1x32xf32>
    %194 = vector.shape_cast %193 : vector<1x1x32xf32> to vector<1x32xf32>
    %195 = vector.broadcast %194 : vector<1x32xf32> to vector<16x32xf32>
    %196 = arith.addf %192, %195 : vector<16x32xf32>
    %197 = arith.addf %196, %24 : vector<16x32xf32>
    %c0_65 = arith.constant 0 : index
    %c0_66 = arith.constant 0 : index
    %c0_67 = arith.constant 0 : index
    %198 = vector.load %arg9[%c0_65, %c0_66, %c0_67] : memref<2x1x32xf32, #tpu.memory_space<vmem>>, vector<1x1x32xf32>
    %199 = vector.shape_cast %198 : vector<1x1x32xf32> to vector<1x32xf32>
    %c0_68 = arith.constant 0 : index
    %c0_69 = arith.constant 0 : index
    %c0_70 = arith.constant 0 : index
    %200 = vector.load %arg10[%c0_68, %c0_69, %c0_70] : memref<2x1x32xf32, #tpu.memory_space<vmem>>, vector<1x1x32xf32>
    %201 = vector.shape_cast %200 : vector<1x1x32xf32> to vector<1x32xf32>
    %cst_71 = arith.constant dense<0.000000e+00> : vector<16xf32>
    %202 = vector.multi_reduction <add>, %197, %cst_71 [1] : vector<16x32xf32> to vector<16xf32>
    %203 = vector.shape_cast %202 : vector<16xf32> to vector<16x1xf32>
    %cst_72 = arith.constant 3.200000e+01 : f32
    %204 = vector.broadcast %cst_72 : f32 to vector<16x1xf32>
    %205 = arith.divf %203, %204 : vector<16x1xf32>
    %206 = vector.broadcast %205 : vector<16x1xf32> to vector<16x32xf32>
    %207 = arith.subf %197, %206 : vector<16x32xf32>
    %208 = arith.mulf %207, %207 : vector<16x32xf32>
    %cst_73 = arith.constant dense<0.000000e+00> : vector<16xf32>
    %209 = vector.multi_reduction <add>, %208, %cst_73 [1] : vector<16x32xf32> to vector<16xf32>
    %210 = vector.shape_cast %209 : vector<16xf32> to vector<16x1xf32>
    %cst_74 = arith.constant 3.200000e+01 : f32
    %211 = vector.broadcast %cst_74 : f32 to vector<16x1xf32>
    %212 = arith.divf %210, %211 : vector<16x1xf32>
    %213 = vector.broadcast %205 : vector<16x1xf32> to vector<16x32xf32>
    %214 = arith.subf %197, %213 : vector<16x32xf32>
    %cst_75 = arith.constant 9.99999974E-6 : f32
    %215 = vector.broadcast %cst_75 : f32 to vector<16x1xf32>
    %216 = arith.addf %212, %215 : vector<16x1xf32>
    %217 = math.rsqrt %216 : vector<16x1xf32>
    %218 = vector.broadcast %217 : vector<16x1xf32> to vector<16x32xf32>
    %219 = arith.mulf %214, %218 : vector<16x32xf32>
    %220 = vector.broadcast %199 : vector<1x32xf32> to vector<16x32xf32>
    %221 = arith.mulf %219, %220 : vector<16x32xf32>
    %222 = vector.broadcast %201 : vector<1x32xf32> to vector<16x32xf32>
    %223 = arith.addf %221, %222 : vector<16x32xf32>
    %c0_76 = arith.constant 0 : index
    %c0_77 = arith.constant 0 : index
    %c0_78 = arith.constant 0 : index
    %224 = vector.load %arg11[%c0_76, %c0_77, %c0_78] : memref<2x32x64xf32, #tpu.memory_space<vmem>>, vector<1x32x64xf32>
    %225 = vector.shape_cast %224 : vector<1x32x64xf32> to vector<32x64xf32>
    %cst_79 = arith.constant dense<0.000000e+00> : vector<16x64xf32>
    %226 = tpu.matmul %223, %225, %cst_79 {dimension_numbers = #tpu.dot_dimension_numbers<[1], [0], [0], [1], [0, 0, 1, 1], [], []>} : vector<16x32xf32>, vector<32x64xf32>, vector<16x64xf32> -> vector<16x64xf32>
    %c0_80 = arith.constant 0 : index
    %c0_81 = arith.constant 0 : index
    %c0_82 = arith.constant 0 : index
    %227 = vector.load %arg12[%c0_80, %c0_81, %c0_82] : memref<2x1x64xf32, #tpu.memory_space<vmem>>, vector<1x1x64xf32>
    %228 = vector.shape_cast %227 : vector<1x1x64xf32> to vector<1x64xf32>
    %229 = vector.broadcast %228 : vector<1x64xf32> to vector<16x64xf32>
    %230 = arith.addf %226, %229 : vector<16x64xf32>
    %231 = arith.mulf %230, %230 : vector<16x64xf32>
    %232 = arith.mulf %230, %231 : vector<16x64xf32>
    %cst_83 = arith.constant 4.471500e-02 : f32
    %233 = vector.broadcast %cst_83 : f32 to vector<16x64xf32>
    %234 = arith.mulf %233, %232 : vector<16x64xf32>
    %235 = arith.addf %230, %234 : vector<16x64xf32>
    %cst_84 = arith.constant 0.797884583 : f32
    %236 = vector.broadcast %cst_84 : f32 to vector<16x64xf32>
    %237 = arith.mulf %236, %235 : vector<16x64xf32>
    %238 = math.tanh %237 : vector<16x64xf32>
    %cst_85 = arith.constant 1.000000e+00 : f32
    %239 = vector.broadcast %cst_85 : f32 to vector<16x64xf32>
    %240 = arith.addf %239, %238 : vector<16x64xf32>
    %cst_86 = arith.constant 5.000000e-01 : f32
    %241 = vector.broadcast %cst_86 : f32 to vector<16x64xf32>
    %242 = arith.mulf %241, %240 : vector<16x64xf32>
    %243 = arith.mulf %230, %242 : vector<16x64xf32>
    %c0_87 = arith.constant 0 : index
    %c0_88 = arith.constant 0 : index
    %c0_89 = arith.constant 0 : index
    %244 = vector.load %arg13[%c0_87, %c0_88, %c0_89] : memref<2x64x32xf32, #tpu.memory_space<vmem>>, vector<1x64x32xf32>
    %245 = vector.shape_cast %244 : vector<1x64x32xf32> to vector<64x32xf32>
    %cst_90 = arith.constant dense<0.000000e+00> : vector<16x32xf32>
    %246 = tpu.matmul %243, %245, %cst_90 {dimension_numbers = #tpu.dot_dimension_numbers<[1], [0], [0], [1], [0, 0, 1, 1], [], []>} : vector<16x64xf32>, vector<64x32xf32>, vector<16x32xf32> -> vector<16x32xf32>
    %c0_91 = arith.constant 0 : index
    %c0_92 = arith.constant 0 : index
    %c0_93 = arith.constant 0 : index
    %247 = vector.load %arg14[%c0_91, %c0_92, %c0_93] : memref<2x1x32xf32, #tpu.memory_space<vmem>>, vector<1x1x32xf32>
    %248 = vector.shape_cast %247 : vector<1x1x32xf32> to vector<1x32xf32>
    %249 = vector.broadcast %248 : vector<1x32xf32> to vector<16x32xf32>
    %250 = arith.addf %246, %249 : vector<16x32xf32>
    %251 = arith.addf %250, %223 : vector<16x32xf32>
    %c0_94 = arith.constant 0 : index
    %c0_95 = arith.constant 0 : index
    %c0_96 = arith.constant 0 : index
    %252 = vector.load %arg15[%c0_94, %c0_95, %c0_96] : memref<2x1x32xf32, #tpu.memory_space<vmem>>, vector<1x1x32xf32>
    %253 = vector.shape_cast %252 : vector<1x1x32xf32> to vector<1x32xf32>
    %c0_97 = arith.constant 0 : index
    %c0_98 = arith.constant 0 : index
    %c0_99 = arith.constant 0 : index
    %254 = vector.load %arg16[%c0_97, %c0_98, %c0_99] : memref<2x1x32xf32, #tpu.memory_space<vmem>>, vector<1x1x32xf32>
    %255 = vector.shape_cast %254 : vector<1x1x32xf32> to vector<1x32xf32>
    %cst_100 = arith.constant dense<0.000000e+00> : vector<16xf32>
    %256 = vector.multi_reduction <add>, %251, %cst_100 [1] : vector<16x32xf32> to vector<16xf32>
    %257 = vector.shape_cast %256 : vector<16xf32> to vector<16x1xf32>
    %cst_101 = arith.constant 3.200000e+01 : f32
    %258 = vector.broadcast %cst_101 : f32 to vector<16x1xf32>
    %259 = arith.divf %257, %258 : vector<16x1xf32>
    %260 = vector.broadcast %259 : vector<16x1xf32> to vector<16x32xf32>
    %261 = arith.subf %251, %260 : vector<16x32xf32>
    %262 = arith.mulf %261, %261 : vector<16x32xf32>
    %cst_102 = arith.constant dense<0.000000e+00> : vector<16xf32>
    %263 = vector.multi_reduction <add>, %262, %cst_102 [1] : vector<16x32xf32> to vector<16xf32>
    %264 = vector.shape_cast %263 : vector<16xf32> to vector<16x1xf32>
    %cst_103 = arith.constant 3.200000e+01 : f32
    %265 = vector.broadcast %cst_103 : f32 to vector<16x1xf32>
    %266 = arith.divf %264, %265 : vector<16x1xf32>
    %267 = vector.broadcast %259 : vector<16x1xf32> to vector<16x32xf32>
    %268 = arith.subf %251, %267 : vector<16x32xf32>
    %cst_104 = arith.constant 9.99999974E-6 : f32
    %269 = vector.broadcast %cst_104 : f32 to vector<16x1xf32>
    %270 = arith.addf %266, %269 : vector<16x1xf32>
    %271 = math.rsqrt %270 : vector<16x1xf32>
    %272 = vector.broadcast %271 : vector<16x1xf32> to vector<16x32xf32>
    %273 = arith.mulf %268, %272 : vector<16x32xf32>
    %274 = vector.broadcast %253 : vector<1x32xf32> to vector<16x32xf32>
    %275 = arith.mulf %273, %274 : vector<16x32xf32>
    %276 = vector.broadcast %255 : vector<1x32xf32> to vector<16x32xf32>
    %277 = arith.addf %275, %276 : vector<16x32xf32>
    %c1 = arith.constant 1 : index
    %c0_105 = arith.constant 0 : index
    %c0_106 = arith.constant 0 : index
    %278 = vector.load %arg5[%c1, %c0_105, %c0_106] : memref<2x32x96xf32, #tpu.memory_space<vmem>>, vector<1x32x96xf32>
    %279 = vector.shape_cast %278 : vector<1x32x96xf32> to vector<32x96xf32>
    %cst_107 = arith.constant dense<0.000000e+00> : vector<16x96xf32>
    %280 = tpu.matmul %277, %279, %cst_107 {dimension_numbers = #tpu.dot_dimension_numbers<[1], [0], [0], [1], [0, 0, 1, 1], [], []>} : vector<16x32xf32>, vector<32x96xf32>, vector<16x96xf32> -> vector<16x96xf32>
    %c1_108 = arith.constant 1 : index
    %c0_109 = arith.constant 0 : index
    %c0_110 = arith.constant 0 : index
    %281 = vector.load %arg6[%c1_108, %c0_109, %c0_110] : memref<2x1x96xf32, #tpu.memory_space<vmem>>, vector<1x1x96xf32>
    %282 = vector.shape_cast %281 : vector<1x1x96xf32> to vector<1x96xf32>
    %283 = vector.broadcast %282 : vector<1x96xf32> to vector<16x96xf32>
    %284 = arith.addf %280, %283 : vector<16x96xf32>
    %285 = vector.extract_strided_slice %25 {offsets = [0, 0], sizes = [1, 8], strides = [1, 1]} : vector<2x8xf32> to vector<1x8xf32>
    %286 = vector.extract_strided_slice %284 {offsets = [0, 0], sizes = [8, 8], strides = [1, 1]} : vector<16x96xf32> to vector<8x8xf32>
    %287 = vector.extract_strided_slice %284 {offsets = [0, 32], sizes = [8, 8], strides = [1, 1]} : vector<16x96xf32> to vector<8x8xf32>
    %288 = vector.extract_strided_slice %284 {offsets = [0, 64], sizes = [8, 8], strides = [1, 1]} : vector<16x96xf32> to vector<8x8xf32>
    %cst_111 = arith.constant dense<0.000000e+00> : vector<8x8xf32>
    %289 = tpu.matmul %286, %287, %cst_111 {dimension_numbers = #tpu.dot_dimension_numbers<[1], [1], [0], [0], [0, 0, 1, 0], [], []>} : vector<8x8xf32>, vector<8x8xf32>, vector<8x8xf32> -> vector<8x8xf32>
    %cst_112 = arith.constant 0.353553385 : f32
    %290 = vector.broadcast %cst_112 : f32 to vector<8x8xf32>
    %291 = arith.mulf %289, %290 : vector<8x8xf32>
    %292 = vector.broadcast %285 : vector<1x8xf32> to vector<8x8xf32>
    %293 = arith.addf %291, %292 : vector<8x8xf32>
    %cst_113 = arith.constant dense<0xFF800000> : vector<8xf32>
    %294 = vector.multi_reduction <maximumf>, %293, %cst_113 [1] : vector<8x8xf32> to vector<8xf32>
    %295 = vector.shape_cast %294 : vector<8xf32> to vector<8x1xf32>
    %296 = vector.broadcast %295 : vector<8x1xf32> to vector<8x8xf32>
    %297 = arith.subf %293, %296 : vector<8x8xf32>
    %298 = math.exp %297 : vector<8x8xf32>
    %cst_114 = arith.constant dense<0.000000e+00> : vector<8xf32>
    %299 = vector.multi_reduction <add>, %298, %cst_114 [1] : vector<8x8xf32> to vector<8xf32>
    %300 = vector.shape_cast %299 : vector<8xf32> to vector<8x1xf32>
    %301 = tpu.reciprocal %300 {approx = true} : vector<8x1xf32> -> vector<8x1xf32>
    %302 = vector.broadcast %301 : vector<8x1xf32> to vector<8x8xf32>
    %303 = arith.mulf %298, %302 : vector<8x8xf32>
    %cst_115 = arith.constant dense<0.000000e+00> : vector<8x8xf32>
    %304 = tpu.matmul %303, %288, %cst_115 {dimension_numbers = #tpu.dot_dimension_numbers<[1], [0], [0], [1], [0, 0, 1, 1], [], []>} : vector<8x8xf32>, vector<8x8xf32>, vector<8x8xf32> -> vector<8x8xf32>
    %305 = vector.extract_strided_slice %284 {offsets = [0, 8], sizes = [8, 8], strides = [1, 1]} : vector<16x96xf32> to vector<8x8xf32>
    %306 = vector.extract_strided_slice %284 {offsets = [0, 40], sizes = [8, 8], strides = [1, 1]} : vector<16x96xf32> to vector<8x8xf32>
    %307 = vector.extract_strided_slice %284 {offsets = [0, 72], sizes = [8, 8], strides = [1, 1]} : vector<16x96xf32> to vector<8x8xf32>
    %cst_116 = arith.constant dense<0.000000e+00> : vector<8x8xf32>
    %308 = tpu.matmul %305, %306, %cst_116 {dimension_numbers = #tpu.dot_dimension_numbers<[1], [1], [0], [0], [0, 0, 1, 0], [], []>} : vector<8x8xf32>, vector<8x8xf32>, vector<8x8xf32> -> vector<8x8xf32>
    %cst_117 = arith.constant 0.353553385 : f32
    %309 = vector.broadcast %cst_117 : f32 to vector<8x8xf32>
    %310 = arith.mulf %308, %309 : vector<8x8xf32>
    %311 = vector.broadcast %285 : vector<1x8xf32> to vector<8x8xf32>
    %312 = arith.addf %310, %311 : vector<8x8xf32>
    %cst_118 = arith.constant dense<0xFF800000> : vector<8xf32>
    %313 = vector.multi_reduction <maximumf>, %312, %cst_118 [1] : vector<8x8xf32> to vector<8xf32>
    %314 = vector.shape_cast %313 : vector<8xf32> to vector<8x1xf32>
    %315 = vector.broadcast %314 : vector<8x1xf32> to vector<8x8xf32>
    %316 = arith.subf %312, %315 : vector<8x8xf32>
    %317 = math.exp %316 : vector<8x8xf32>
    %cst_119 = arith.constant dense<0.000000e+00> : vector<8xf32>
    %318 = vector.multi_reduction <add>, %317, %cst_119 [1] : vector<8x8xf32> to vector<8xf32>
    %319 = vector.shape_cast %318 : vector<8xf32> to vector<8x1xf32>
    %320 = tpu.reciprocal %319 {approx = true} : vector<8x1xf32> -> vector<8x1xf32>
    %321 = vector.broadcast %320 : vector<8x1xf32> to vector<8x8xf32>
    %322 = arith.mulf %317, %321 : vector<8x8xf32>
    %cst_120 = arith.constant dense<0.000000e+00> : vector<8x8xf32>
    %323 = tpu.matmul %322, %307, %cst_120 {dimension_numbers = #tpu.dot_dimension_numbers<[1], [0], [0], [1], [0, 0, 1, 1], [], []>} : vector<8x8xf32>, vector<8x8xf32>, vector<8x8xf32> -> vector<8x8xf32>
    %324 = vector.extract_strided_slice %284 {offsets = [0, 16], sizes = [8, 8], strides = [1, 1]} : vector<16x96xf32> to vector<8x8xf32>
    %325 = vector.extract_strided_slice %284 {offsets = [0, 48], sizes = [8, 8], strides = [1, 1]} : vector<16x96xf32> to vector<8x8xf32>
    %326 = vector.extract_strided_slice %284 {offsets = [0, 80], sizes = [8, 8], strides = [1, 1]} : vector<16x96xf32> to vector<8x8xf32>
    %cst_121 = arith.constant dense<0.000000e+00> : vector<8x8xf32>
    %327 = tpu.matmul %324, %325, %cst_121 {dimension_numbers = #tpu.dot_dimension_numbers<[1], [1], [0], [0], [0, 0, 1, 0], [], []>} : vector<8x8xf32>, vector<8x8xf32>, vector<8x8xf32> -> vector<8x8xf32>
    %cst_122 = arith.constant 0.353553385 : f32
    %328 = vector.broadcast %cst_122 : f32 to vector<8x8xf32>
    %329 = arith.mulf %327, %328 : vector<8x8xf32>
    %330 = vector.broadcast %285 : vector<1x8xf32> to vector<8x8xf32>
    %331 = arith.addf %329, %330 : vector<8x8xf32>
    %cst_123 = arith.constant dense<0xFF800000> : vector<8xf32>
    %332 = vector.multi_reduction <maximumf>, %331, %cst_123 [1] : vector<8x8xf32> to vector<8xf32>
    %333 = vector.shape_cast %332 : vector<8xf32> to vector<8x1xf32>
    %334 = vector.broadcast %333 : vector<8x1xf32> to vector<8x8xf32>
    %335 = arith.subf %331, %334 : vector<8x8xf32>
    %336 = math.exp %335 : vector<8x8xf32>
    %cst_124 = arith.constant dense<0.000000e+00> : vector<8xf32>
    %337 = vector.multi_reduction <add>, %336, %cst_124 [1] : vector<8x8xf32> to vector<8xf32>
    %338 = vector.shape_cast %337 : vector<8xf32> to vector<8x1xf32>
    %339 = tpu.reciprocal %338 {approx = true} : vector<8x1xf32> -> vector<8x1xf32>
    %340 = vector.broadcast %339 : vector<8x1xf32> to vector<8x8xf32>
    %341 = arith.mulf %336, %340 : vector<8x8xf32>
    %cst_125 = arith.constant dense<0.000000e+00> : vector<8x8xf32>
    %342 = tpu.matmul %341, %326, %cst_125 {dimension_numbers = #tpu.dot_dimension_numbers<[1], [0], [0], [1], [0, 0, 1, 1], [], []>} : vector<8x8xf32>, vector<8x8xf32>, vector<8x8xf32> -> vector<8x8xf32>
    %343 = vector.extract_strided_slice %284 {offsets = [0, 24], sizes = [8, 8], strides = [1, 1]} : vector<16x96xf32> to vector<8x8xf32>
    %344 = vector.extract_strided_slice %284 {offsets = [0, 56], sizes = [8, 8], strides = [1, 1]} : vector<16x96xf32> to vector<8x8xf32>
    %345 = vector.extract_strided_slice %284 {offsets = [0, 88], sizes = [8, 8], strides = [1, 1]} : vector<16x96xf32> to vector<8x8xf32>
    %cst_126 = arith.constant dense<0.000000e+00> : vector<8x8xf32>
    %346 = tpu.matmul %343, %344, %cst_126 {dimension_numbers = #tpu.dot_dimension_numbers<[1], [1], [0], [0], [0, 0, 1, 0], [], []>} : vector<8x8xf32>, vector<8x8xf32>, vector<8x8xf32> -> vector<8x8xf32>
    %cst_127 = arith.constant 0.353553385 : f32
    %347 = vector.broadcast %cst_127 : f32 to vector<8x8xf32>
    %348 = arith.mulf %346, %347 : vector<8x8xf32>
    %349 = vector.broadcast %285 : vector<1x8xf32> to vector<8x8xf32>
    %350 = arith.addf %348, %349 : vector<8x8xf32>
    %cst_128 = arith.constant dense<0xFF800000> : vector<8xf32>
    %351 = vector.multi_reduction <maximumf>, %350, %cst_128 [1] : vector<8x8xf32> to vector<8xf32>
    %352 = vector.shape_cast %351 : vector<8xf32> to vector<8x1xf32>
    %353 = vector.broadcast %352 : vector<8x1xf32> to vector<8x8xf32>
    %354 = arith.subf %350, %353 : vector<8x8xf32>
    %355 = math.exp %354 : vector<8x8xf32>
    %cst_129 = arith.constant dense<0.000000e+00> : vector<8xf32>
    %356 = vector.multi_reduction <add>, %355, %cst_129 [1] : vector<8x8xf32> to vector<8xf32>
    %357 = vector.shape_cast %356 : vector<8xf32> to vector<8x1xf32>
    %358 = tpu.reciprocal %357 {approx = true} : vector<8x1xf32> -> vector<8x1xf32>
    %359 = vector.broadcast %358 : vector<8x1xf32> to vector<8x8xf32>
    %360 = arith.mulf %355, %359 : vector<8x8xf32>
    %cst_130 = arith.constant dense<0.000000e+00> : vector<8x8xf32>
    %361 = tpu.matmul %360, %345, %cst_130 {dimension_numbers = #tpu.dot_dimension_numbers<[1], [0], [0], [1], [0, 0, 1, 1], [], []>} : vector<8x8xf32>, vector<8x8xf32>, vector<8x8xf32> -> vector<8x8xf32>
    %362 = tpu.concatenate %304, %323, %342, %361 in 1 : vector<8x8xf32>, vector<8x8xf32>, vector<8x8xf32>, vector<8x8xf32> -> vector<8x32xf32>
    %363 = vector.extract_strided_slice %25 {offsets = [1, 0], sizes = [1, 8], strides = [1, 1]} : vector<2x8xf32> to vector<1x8xf32>
    %364 = vector.extract_strided_slice %284 {offsets = [8, 0], sizes = [8, 8], strides = [1, 1]} : vector<16x96xf32> to vector<8x8xf32>
    %365 = vector.extract_strided_slice %284 {offsets = [8, 32], sizes = [8, 8], strides = [1, 1]} : vector<16x96xf32> to vector<8x8xf32>
    %366 = vector.extract_strided_slice %284 {offsets = [8, 64], sizes = [8, 8], strides = [1, 1]} : vector<16x96xf32> to vector<8x8xf32>
    %cst_131 = arith.constant dense<0.000000e+00> : vector<8x8xf32>
    %367 = tpu.matmul %364, %365, %cst_131 {dimension_numbers = #tpu.dot_dimension_numbers<[1], [1], [0], [0], [0, 0, 1, 0], [], []>} : vector<8x8xf32>, vector<8x8xf32>, vector<8x8xf32> -> vector<8x8xf32>
    %cst_132 = arith.constant 0.353553385 : f32
    %368 = vector.broadcast %cst_132 : f32 to vector<8x8xf32>
    %369 = arith.mulf %367, %368 : vector<8x8xf32>
    %370 = vector.broadcast %363 : vector<1x8xf32> to vector<8x8xf32>
    %371 = arith.addf %369, %370 : vector<8x8xf32>
    %cst_133 = arith.constant dense<0xFF800000> : vector<8xf32>
    %372 = vector.multi_reduction <maximumf>, %371, %cst_133 [1] : vector<8x8xf32> to vector<8xf32>
    %373 = vector.shape_cast %372 : vector<8xf32> to vector<8x1xf32>
    %374 = vector.broadcast %373 : vector<8x1xf32> to vector<8x8xf32>
    %375 = arith.subf %371, %374 : vector<8x8xf32>
    %376 = math.exp %375 : vector<8x8xf32>
    %cst_134 = arith.constant dense<0.000000e+00> : vector<8xf32>
    %377 = vector.multi_reduction <add>, %376, %cst_134 [1] : vector<8x8xf32> to vector<8xf32>
    %378 = vector.shape_cast %377 : vector<8xf32> to vector<8x1xf32>
    %379 = tpu.reciprocal %378 {approx = true} : vector<8x1xf32> -> vector<8x1xf32>
    %380 = vector.broadcast %379 : vector<8x1xf32> to vector<8x8xf32>
    %381 = arith.mulf %376, %380 : vector<8x8xf32>
    %cst_135 = arith.constant dense<0.000000e+00> : vector<8x8xf32>
    %382 = tpu.matmul %381, %366, %cst_135 {dimension_numbers = #tpu.dot_dimension_numbers<[1], [0], [0], [1], [0, 0, 1, 1], [], []>} : vector<8x8xf32>, vector<8x8xf32>, vector<8x8xf32> -> vector<8x8xf32>
    %383 = vector.extract_strided_slice %284 {offsets = [8, 8], sizes = [8, 8], strides = [1, 1]} : vector<16x96xf32> to vector<8x8xf32>
    %384 = vector.extract_strided_slice %284 {offsets = [8, 40], sizes = [8, 8], strides = [1, 1]} : vector<16x96xf32> to vector<8x8xf32>
    %385 = vector.extract_strided_slice %284 {offsets = [8, 72], sizes = [8, 8], strides = [1, 1]} : vector<16x96xf32> to vector<8x8xf32>
    %cst_136 = arith.constant dense<0.000000e+00> : vector<8x8xf32>
    %386 = tpu.matmul %383, %384, %cst_136 {dimension_numbers = #tpu.dot_dimension_numbers<[1], [1], [0], [0], [0, 0, 1, 0], [], []>} : vector<8x8xf32>, vector<8x8xf32>, vector<8x8xf32> -> vector<8x8xf32>
    %cst_137 = arith.constant 0.353553385 : f32
    %387 = vector.broadcast %cst_137 : f32 to vector<8x8xf32>
    %388 = arith.mulf %386, %387 : vector<8x8xf32>
    %389 = vector.broadcast %363 : vector<1x8xf32> to vector<8x8xf32>
    %390 = arith.addf %388, %389 : vector<8x8xf32>
    %cst_138 = arith.constant dense<0xFF800000> : vector<8xf32>
    %391 = vector.multi_reduction <maximumf>, %390, %cst_138 [1] : vector<8x8xf32> to vector<8xf32>
    %392 = vector.shape_cast %391 : vector<8xf32> to vector<8x1xf32>
    %393 = vector.broadcast %392 : vector<8x1xf32> to vector<8x8xf32>
    %394 = arith.subf %390, %393 : vector<8x8xf32>
    %395 = math.exp %394 : vector<8x8xf32>
    %cst_139 = arith.constant dense<0.000000e+00> : vector<8xf32>
    %396 = vector.multi_reduction <add>, %395, %cst_139 [1] : vector<8x8xf32> to vector<8xf32>
    %397 = vector.shape_cast %396 : vector<8xf32> to vector<8x1xf32>
    %398 = tpu.reciprocal %397 {approx = true} : vector<8x1xf32> -> vector<8x1xf32>
    %399 = vector.broadcast %398 : vector<8x1xf32> to vector<8x8xf32>
    %400 = arith.mulf %395, %399 : vector<8x8xf32>
    %cst_140 = arith.constant dense<0.000000e+00> : vector<8x8xf32>
    %401 = tpu.matmul %400, %385, %cst_140 {dimension_numbers = #tpu.dot_dimension_numbers<[1], [0], [0], [1], [0, 0, 1, 1], [], []>} : vector<8x8xf32>, vector<8x8xf32>, vector<8x8xf32> -> vector<8x8xf32>
    %402 = vector.extract_strided_slice %284 {offsets = [8, 16], sizes = [8, 8], strides = [1, 1]} : vector<16x96xf32> to vector<8x8xf32>
    %403 = vector.extract_strided_slice %284 {offsets = [8, 48], sizes = [8, 8], strides = [1, 1]} : vector<16x96xf32> to vector<8x8xf32>
    %404 = vector.extract_strided_slice %284 {offsets = [8, 80], sizes = [8, 8], strides = [1, 1]} : vector<16x96xf32> to vector<8x8xf32>
    %cst_141 = arith.constant dense<0.000000e+00> : vector<8x8xf32>
    %405 = tpu.matmul %402, %403, %cst_141 {dimension_numbers = #tpu.dot_dimension_numbers<[1], [1], [0], [0], [0, 0, 1, 0], [], []>} : vector<8x8xf32>, vector<8x8xf32>, vector<8x8xf32> -> vector<8x8xf32>
    %cst_142 = arith.constant 0.353553385 : f32
    %406 = vector.broadcast %cst_142 : f32 to vector<8x8xf32>
    %407 = arith.mulf %405, %406 : vector<8x8xf32>
    %408 = vector.broadcast %363 : vector<1x8xf32> to vector<8x8xf32>
    %409 = arith.addf %407, %408 : vector<8x8xf32>
    %cst_143 = arith.constant dense<0xFF800000> : vector<8xf32>
    %410 = vector.multi_reduction <maximumf>, %409, %cst_143 [1] : vector<8x8xf32> to vector<8xf32>
    %411 = vector.shape_cast %410 : vector<8xf32> to vector<8x1xf32>
    %412 = vector.broadcast %411 : vector<8x1xf32> to vector<8x8xf32>
    %413 = arith.subf %409, %412 : vector<8x8xf32>
    %414 = math.exp %413 : vector<8x8xf32>
    %cst_144 = arith.constant dense<0.000000e+00> : vector<8xf32>
    %415 = vector.multi_reduction <add>, %414, %cst_144 [1] : vector<8x8xf32> to vector<8xf32>
    %416 = vector.shape_cast %415 : vector<8xf32> to vector<8x1xf32>
    %417 = tpu.reciprocal %416 {approx = true} : vector<8x1xf32> -> vector<8x1xf32>
    %418 = vector.broadcast %417 : vector<8x1xf32> to vector<8x8xf32>
    %419 = arith.mulf %414, %418 : vector<8x8xf32>
    %cst_145 = arith.constant dense<0.000000e+00> : vector<8x8xf32>
    %420 = tpu.matmul %419, %404, %cst_145 {dimension_numbers = #tpu.dot_dimension_numbers<[1], [0], [0], [1], [0, 0, 1, 1], [], []>} : vector<8x8xf32>, vector<8x8xf32>, vector<8x8xf32> -> vector<8x8xf32>
    %421 = vector.extract_strided_slice %284 {offsets = [8, 24], sizes = [8, 8], strides = [1, 1]} : vector<16x96xf32> to vector<8x8xf32>
    %422 = vector.extract_strided_slice %284 {offsets = [8, 56], sizes = [8, 8], strides = [1, 1]} : vector<16x96xf32> to vector<8x8xf32>
    %423 = vector.extract_strided_slice %284 {offsets = [8, 88], sizes = [8, 8], strides = [1, 1]} : vector<16x96xf32> to vector<8x8xf32>
    %cst_146 = arith.constant dense<0.000000e+00> : vector<8x8xf32>
    %424 = tpu.matmul %421, %422, %cst_146 {dimension_numbers = #tpu.dot_dimension_numbers<[1], [1], [0], [0], [0, 0, 1, 0], [], []>} : vector<8x8xf32>, vector<8x8xf32>, vector<8x8xf32> -> vector<8x8xf32>
    %cst_147 = arith.constant 0.353553385 : f32
    %425 = vector.broadcast %cst_147 : f32 to vector<8x8xf32>
    %426 = arith.mulf %424, %425 : vector<8x8xf32>
    %427 = vector.broadcast %363 : vector<1x8xf32> to vector<8x8xf32>
    %428 = arith.addf %426, %427 : vector<8x8xf32>
    %cst_148 = arith.constant dense<0xFF800000> : vector<8xf32>
    %429 = vector.multi_reduction <maximumf>, %428, %cst_148 [1] : vector<8x8xf32> to vector<8xf32>
    %430 = vector.shape_cast %429 : vector<8xf32> to vector<8x1xf32>
    %431 = vector.broadcast %430 : vector<8x1xf32> to vector<8x8xf32>
    %432 = arith.subf %428, %431 : vector<8x8xf32>
    %433 = math.exp %432 : vector<8x8xf32>
    %cst_149 = arith.constant dense<0.000000e+00> : vector<8xf32>
    %434 = vector.multi_reduction <add>, %433, %cst_149 [1] : vector<8x8xf32> to vector<8xf32>
    %435 = vector.shape_cast %434 : vector<8xf32> to vector<8x1xf32>
    %436 = tpu.reciprocal %435 {approx = true} : vector<8x1xf32> -> vector<8x1xf32>
    %437 = vector.broadcast %436 : vector<8x1xf32> to vector<8x8xf32>
    %438 = arith.mulf %433, %437 : vector<8x8xf32>
    %cst_150 = arith.constant dense<0.000000e+00> : vector<8x8xf32>
    %439 = tpu.matmul %438, %423, %cst_150 {dimension_numbers = #tpu.dot_dimension_numbers<[1], [0], [0], [1], [0, 0, 1, 1], [], []>} : vector<8x8xf32>, vector<8x8xf32>, vector<8x8xf32> -> vector<8x8xf32>
    %440 = tpu.concatenate %382, %401, %420, %439 in 1 : vector<8x8xf32>, vector<8x8xf32>, vector<8x8xf32>, vector<8x8xf32> -> vector<8x32xf32>
    %441 = tpu.concatenate %362, %440 in 0 : vector<8x32xf32>, vector<8x32xf32> -> vector<16x32xf32>
    %c1_151 = arith.constant 1 : index
    %c0_152 = arith.constant 0 : index
    %c0_153 = arith.constant 0 : index
    %442 = vector.load %arg7[%c1_151, %c0_152, %c0_153] : memref<2x32x32xf32, #tpu.memory_space<vmem>>, vector<1x32x32xf32>
    %443 = vector.shape_cast %442 : vector<1x32x32xf32> to vector<32x32xf32>
    %cst_154 = arith.constant dense<0.000000e+00> : vector<16x32xf32>
    %444 = tpu.matmul %441, %443, %cst_154 {dimension_numbers = #tpu.dot_dimension_numbers<[1], [0], [0], [1], [0, 0, 1, 1], [], []>} : vector<16x32xf32>, vector<32x32xf32>, vector<16x32xf32> -> vector<16x32xf32>
    %c1_155 = arith.constant 1 : index
    %c0_156 = arith.constant 0 : index
    %c0_157 = arith.constant 0 : index
    %445 = vector.load %arg8[%c1_155, %c0_156, %c0_157] : memref<2x1x32xf32, #tpu.memory_space<vmem>>, vector<1x1x32xf32>
    %446 = vector.shape_cast %445 : vector<1x1x32xf32> to vector<1x32xf32>
    %447 = vector.broadcast %446 : vector<1x32xf32> to vector<16x32xf32>
    %448 = arith.addf %444, %447 : vector<16x32xf32>
    %449 = arith.addf %448, %277 : vector<16x32xf32>
    %c1_158 = arith.constant 1 : index
    %c0_159 = arith.constant 0 : index
    %c0_160 = arith.constant 0 : index
    %450 = vector.load %arg9[%c1_158, %c0_159, %c0_160] : memref<2x1x32xf32, #tpu.memory_space<vmem>>, vector<1x1x32xf32>
    %451 = vector.shape_cast %450 : vector<1x1x32xf32> to vector<1x32xf32>
    %c1_161 = arith.constant 1 : index
    %c0_162 = arith.constant 0 : index
    %c0_163 = arith.constant 0 : index
    %452 = vector.load %arg10[%c1_161, %c0_162, %c0_163] : memref<2x1x32xf32, #tpu.memory_space<vmem>>, vector<1x1x32xf32>
    %453 = vector.shape_cast %452 : vector<1x1x32xf32> to vector<1x32xf32>
    %cst_164 = arith.constant dense<0.000000e+00> : vector<16xf32>
    %454 = vector.multi_reduction <add>, %449, %cst_164 [1] : vector<16x32xf32> to vector<16xf32>
    %455 = vector.shape_cast %454 : vector<16xf32> to vector<16x1xf32>
    %cst_165 = arith.constant 3.200000e+01 : f32
    %456 = vector.broadcast %cst_165 : f32 to vector<16x1xf32>
    %457 = arith.divf %455, %456 : vector<16x1xf32>
    %458 = vector.broadcast %457 : vector<16x1xf32> to vector<16x32xf32>
    %459 = arith.subf %449, %458 : vector<16x32xf32>
    %460 = arith.mulf %459, %459 : vector<16x32xf32>
    %cst_166 = arith.constant dense<0.000000e+00> : vector<16xf32>
    %461 = vector.multi_reduction <add>, %460, %cst_166 [1] : vector<16x32xf32> to vector<16xf32>
    %462 = vector.shape_cast %461 : vector<16xf32> to vector<16x1xf32>
    %cst_167 = arith.constant 3.200000e+01 : f32
    %463 = vector.broadcast %cst_167 : f32 to vector<16x1xf32>
    %464 = arith.divf %462, %463 : vector<16x1xf32>
    %465 = vector.broadcast %457 : vector<16x1xf32> to vector<16x32xf32>
    %466 = arith.subf %449, %465 : vector<16x32xf32>
    %cst_168 = arith.constant 9.99999974E-6 : f32
    %467 = vector.broadcast %cst_168 : f32 to vector<16x1xf32>
    %468 = arith.addf %464, %467 : vector<16x1xf32>
    %469 = math.rsqrt %468 : vector<16x1xf32>
    %470 = vector.broadcast %469 : vector<16x1xf32> to vector<16x32xf32>
    %471 = arith.mulf %466, %470 : vector<16x32xf32>
    %472 = vector.broadcast %451 : vector<1x32xf32> to vector<16x32xf32>
    %473 = arith.mulf %471, %472 : vector<16x32xf32>
    %474 = vector.broadcast %453 : vector<1x32xf32> to vector<16x32xf32>
    %475 = arith.addf %473, %474 : vector<16x32xf32>
    %c1_169 = arith.constant 1 : index
    %c0_170 = arith.constant 0 : index
    %c0_171 = arith.constant 0 : index
    %476 = vector.load %arg11[%c1_169, %c0_170, %c0_171] : memref<2x32x64xf32, #tpu.memory_space<vmem>>, vector<1x32x64xf32>
    %477 = vector.shape_cast %476 : vector<1x32x64xf32> to vector<32x64xf32>
    %cst_172 = arith.constant dense<0.000000e+00> : vector<16x64xf32>
    %478 = tpu.matmul %475, %477, %cst_172 {dimension_numbers = #tpu.dot_dimension_numbers<[1], [0], [0], [1], [0, 0, 1, 1], [], []>} : vector<16x32xf32>, vector<32x64xf32>, vector<16x64xf32> -> vector<16x64xf32>
    %c1_173 = arith.constant 1 : index
    %c0_174 = arith.constant 0 : index
    %c0_175 = arith.constant 0 : index
    %479 = vector.load %arg12[%c1_173, %c0_174, %c0_175] : memref<2x1x64xf32, #tpu.memory_space<vmem>>, vector<1x1x64xf32>
    %480 = vector.shape_cast %479 : vector<1x1x64xf32> to vector<1x64xf32>
    %481 = vector.broadcast %480 : vector<1x64xf32> to vector<16x64xf32>
    %482 = arith.addf %478, %481 : vector<16x64xf32>
    %483 = arith.mulf %482, %482 : vector<16x64xf32>
    %484 = arith.mulf %482, %483 : vector<16x64xf32>
    %cst_176 = arith.constant 4.471500e-02 : f32
    %485 = vector.broadcast %cst_176 : f32 to vector<16x64xf32>
    %486 = arith.mulf %485, %484 : vector<16x64xf32>
    %487 = arith.addf %482, %486 : vector<16x64xf32>
    %cst_177 = arith.constant 0.797884583 : f32
    %488 = vector.broadcast %cst_177 : f32 to vector<16x64xf32>
    %489 = arith.mulf %488, %487 : vector<16x64xf32>
    %490 = math.tanh %489 : vector<16x64xf32>
    %cst_178 = arith.constant 1.000000e+00 : f32
    %491 = vector.broadcast %cst_178 : f32 to vector<16x64xf32>
    %492 = arith.addf %491, %490 : vector<16x64xf32>
    %cst_179 = arith.constant 5.000000e-01 : f32
    %493 = vector.broadcast %cst_179 : f32 to vector<16x64xf32>
    %494 = arith.mulf %493, %492 : vector<16x64xf32>
    %495 = arith.mulf %482, %494 : vector<16x64xf32>
    %c1_180 = arith.constant 1 : index
    %c0_181 = arith.constant 0 : index
    %c0_182 = arith.constant 0 : index
    %496 = vector.load %arg13[%c1_180, %c0_181, %c0_182] : memref<2x64x32xf32, #tpu.memory_space<vmem>>, vector<1x64x32xf32>
    %497 = vector.shape_cast %496 : vector<1x64x32xf32> to vector<64x32xf32>
    %cst_183 = arith.constant dense<0.000000e+00> : vector<16x32xf32>
    %498 = tpu.matmul %495, %497, %cst_183 {dimension_numbers = #tpu.dot_dimension_numbers<[1], [0], [0], [1], [0, 0, 1, 1], [], []>} : vector<16x64xf32>, vector<64x32xf32>, vector<16x32xf32> -> vector<16x32xf32>
    %c1_184 = arith.constant 1 : index
    %c0_185 = arith.constant 0 : index
    %c0_186 = arith.constant 0 : index
    %499 = vector.load %arg14[%c1_184, %c0_185, %c0_186] : memref<2x1x32xf32, #tpu.memory_space<vmem>>, vector<1x1x32xf32>
    %500 = vector.shape_cast %499 : vector<1x1x32xf32> to vector<1x32xf32>
    %501 = vector.broadcast %500 : vector<1x32xf32> to vector<16x32xf32>
    %502 = arith.addf %498, %501 : vector<16x32xf32>
    %503 = arith.addf %502, %475 : vector<16x32xf32>
    %c1_187 = arith.constant 1 : index
    %c0_188 = arith.constant 0 : index
    %c0_189 = arith.constant 0 : index
    %504 = vector.load %arg15[%c1_187, %c0_188, %c0_189] : memref<2x1x32xf32, #tpu.memory_space<vmem>>, vector<1x1x32xf32>
    %505 = vector.shape_cast %504 : vector<1x1x32xf32> to vector<1x32xf32>
    %c1_190 = arith.constant 1 : index
    %c0_191 = arith.constant 0 : index
    %c0_192 = arith.constant 0 : index
    %506 = vector.load %arg16[%c1_190, %c0_191, %c0_192] : memref<2x1x32xf32, #tpu.memory_space<vmem>>, vector<1x1x32xf32>
    %507 = vector.shape_cast %506 : vector<1x1x32xf32> to vector<1x32xf32>
    %cst_193 = arith.constant dense<0.000000e+00> : vector<16xf32>
    %508 = vector.multi_reduction <add>, %503, %cst_193 [1] : vector<16x32xf32> to vector<16xf32>
    %509 = vector.shape_cast %508 : vector<16xf32> to vector<16x1xf32>
    %cst_194 = arith.constant 3.200000e+01 : f32
    %510 = vector.broadcast %cst_194 : f32 to vector<16x1xf32>
    %511 = arith.divf %509, %510 : vector<16x1xf32>
    %512 = vector.broadcast %511 : vector<16x1xf32> to vector<16x32xf32>
    %513 = arith.subf %503, %512 : vector<16x32xf32>
    %514 = arith.mulf %513, %513 : vector<16x32xf32>
    %cst_195 = arith.constant dense<0.000000e+00> : vector<16xf32>
    %515 = vector.multi_reduction <add>, %514, %cst_195 [1] : vector<16x32xf32> to vector<16xf32>
    %516 = vector.shape_cast %515 : vector<16xf32> to vector<16x1xf32>
    %cst_196 = arith.constant 3.200000e+01 : f32
    %517 = vector.broadcast %cst_196 : f32 to vector<16x1xf32>
    %518 = arith.divf %516, %517 : vector<16x1xf32>
    %519 = vector.broadcast %511 : vector<16x1xf32> to vector<16x32xf32>
    %520 = arith.subf %503, %519 : vector<16x32xf32>
    %cst_197 = arith.constant 9.99999974E-6 : f32
    %521 = vector.broadcast %cst_197 : f32 to vector<16x1xf32>
    %522 = arith.addf %518, %521 : vector<16x1xf32>
    %523 = math.rsqrt %522 : vector<16x1xf32>
    %524 = vector.broadcast %523 : vector<16x1xf32> to vector<16x32xf32>
    %525 = arith.mulf %520, %524 : vector<16x32xf32>
    %526 = vector.broadcast %505 : vector<1x32xf32> to vector<16x32xf32>
    %527 = arith.mulf %525, %526 : vector<16x32xf32>
    %528 = vector.broadcast %507 : vector<1x32xf32> to vector<16x32xf32>
    %529 = arith.addf %527, %528 : vector<16x32xf32>
    %530 = vector.extract_strided_slice %529 {offsets = [0, 0], sizes = [1, 32], strides = [1, 1]} : vector<16x32xf32> to vector<1x32xf32>
    %531 = vector.extract_strided_slice %529 {offsets = [8, 0], sizes = [1, 32], strides = [1, 1]} : vector<16x32xf32> to vector<1x32xf32>
    %532 = tpu.concatenate %530, %531 in 0 : vector<1x32xf32>, vector<1x32xf32> -> vector<2x32xf32>
    %c0_198 = arith.constant 0 : index
    %c0_199 = arith.constant 0 : index
    %533 = vector.load %arg17[%c0_198, %c0_199] : memref<32x128xf32, #tpu.memory_space<vmem>>, vector<32x128xf32>
    %cst_200 = arith.constant dense<0.000000e+00> : vector<2x128xf32>
    %534 = tpu.matmul %532, %533, %cst_200 {dimension_numbers = #tpu.dot_dimension_numbers<[1], [0], [0], [1], [0, 0, 1, 1], [], []>} : vector<2x32xf32>, vector<32x128xf32>, vector<2x128xf32> -> vector<2x128xf32>
    %c0_201 = arith.constant 0 : index
    %c0_202 = arith.constant 0 : index
    %535 = vector.load %arg18[%c0_201, %c0_202] : memref<1x128xf32, #tpu.memory_space<vmem>>, vector<1x128xf32>
    %536 = vector.broadcast %535 : vector<1x128xf32> to vector<2x128xf32>
    %537 = arith.addf %534, %536 : vector<2x128xf32>
    %c0_203 = arith.constant 0 : index
    %c0_204 = arith.constant 0 : index
    %538 = vector.load %arg19[%c0_203, %c0_204] : memref<2x128xf32, #tpu.memory_space<vmem>>, vector<2x128xf32>
    tpu.vector_store %arg19[%c0_203, %c0_204], %537 {strides = array<i32>} : memref<2x128xf32, #tpu.memory_space<vmem>>, vector<2x128xf32>,
    return
  }
  func.func @transform_0(%arg0: i32) -> (i32, i32) {
    %c0_i32 = arith.constant 0 : i32
    %c0_i32_0 = arith.constant 0 : i32
    %c0_i32_1 = arith.constant 0 : i32
    return %c0_i32, %c0_i32_0 : i32, i32
  }
  func.func @transform_1(%arg0: i32) -> (i32, i32) {
    %c0_i32 = arith.constant 0 : i32
    %c0_i32_0 = arith.constant 0 : i32
    %c0_i32_1 = arith.constant 0 : i32
    return %c0_i32, %c0_i32_0 : i32, i32
  }
  func.func @transform_2(%arg0: i32) -> (i32, i32) {
    %c0_i32 = arith.constant 0 : i32
    %c0_i32_0 = arith.constant 0 : i32
    %c0_i32_1 = arith.constant 0 : i32
    return %c0_i32, %c0_i32_0 : i32, i32
  }
  func.func @transform_3(%arg0: i32) -> (i32, i32) {
    %c0_i32 = arith.constant 0 : i32
    %c0_i32_0 = arith.constant 0 : i32
    %c0_i32_1 = arith.constant 0 : i32
    return %c0_i32, %c0_i32_0 : i32, i32
  }
  func.func @transform_4(%arg0: i32) -> (i32, i32, i32) {
    %c0_i32 = arith.constant 0 : i32
    %c0_i32_0 = arith.constant 0 : i32
    %c0_i32_1 = arith.constant 0 : i32
    %c0_i32_2 = arith.constant 0 : i32
    return %c0_i32, %c0_i32_0, %c0_i32_1 : i32, i32, i32
  }
  func.func @transform_5(%arg0: i32) -> (i32, i32, i32) {
    %c0_i32 = arith.constant 0 : i32
    %c0_i32_0 = arith.constant 0 : i32
    %c0_i32_1 = arith.constant 0 : i32
    %c0_i32_2 = arith.constant 0 : i32
    return %c0_i32, %c0_i32_0, %c0_i32_1 : i32, i32, i32
  }
  func.func @transform_6(%arg0: i32) -> (i32, i32, i32) {
    %c0_i32 = arith.constant 0 : i32
    %c0_i32_0 = arith.constant 0 : i32
    %c0_i32_1 = arith.constant 0 : i32
    %c0_i32_2 = arith.constant 0 : i32
    return %c0_i32, %c0_i32_0, %c0_i32_1 : i32, i32, i32
  }
  func.func @transform_7(%arg0: i32) -> (i32, i32, i32) {
    %c0_i32 = arith.constant 0 : i32
    %c0_i32_0 = arith.constant 0 : i32
    %c0_i32_1 = arith.constant 0 : i32
    %c0_i32_2 = arith.constant 0 : i32
    return %c0_i32, %c0_i32_0, %c0_i32_1 : i32, i32, i32
  }
  func.func @transform_8(%arg0: i32) -> (i32, i32, i32) {
    %c0_i32 = arith.constant 0 : i32
    %c0_i32_0 = arith.constant 0 : i32
    %c0_i32_1 = arith.constant 0 : i32
    %c0_i32_2 = arith.constant 0 : i32
    return %c0_i32, %c0_i32_0, %c0_i32_1 : i32, i32, i32
  }
  func.func @transform_9(%arg0: i32) -> (i32, i32, i32) {
    %c0_i32 = arith.constant 0 : i32
    %c0_i32_0 = arith.constant 0 : i32
    %c0_i32_1 = arith.constant 0 : i32
    %c0_i32_2 = arith.constant 0 : i32
    return %c0_i32, %c0_i32_0, %c0_i32_1 : i32, i32, i32
  }
  func.func @transform_10(%arg0: i32) -> (i32, i32, i32) {
    %c0_i32 = arith.constant 0 : i32
    %c0_i32_0 = arith.constant 0 : i32
    %c0_i32_1 = arith.constant 0 : i32
    %c0_i32_2 = arith.constant 0 : i32
    return %c0_i32, %c0_i32_0, %c0_i32_1 : i32, i32, i32
  }
  func.func @transform_11(%arg0: i32) -> (i32, i32, i32) {
    %c0_i32 = arith.constant 0 : i32
    %c0_i32_0 = arith.constant 0 : i32
    %c0_i32_1 = arith.constant 0 : i32
    %c0_i32_2 = arith.constant 0 : i32
    return %c0_i32, %c0_i32_0, %c0_i32_1 : i32, i32, i32
  }
  func.func @transform_12(%arg0: i32) -> (i32, i32, i32) {
    %c0_i32 = arith.constant 0 : i32
    %c0_i32_0 = arith.constant 0 : i32
    %c0_i32_1 = arith.constant 0 : i32
    %c0_i32_2 = arith.constant 0 : i32
    return %c0_i32, %c0_i32_0, %c0_i32_1 : i32, i32, i32
  }
  func.func @transform_13(%arg0: i32) -> (i32, i32, i32) {
    %c0_i32 = arith.constant 0 : i32
    %c0_i32_0 = arith.constant 0 : i32
    %c0_i32_1 = arith.constant 0 : i32
    %c0_i32_2 = arith.constant 0 : i32
    return %c0_i32, %c0_i32_0, %c0_i32_1 : i32, i32, i32
  }
  func.func @transform_14(%arg0: i32) -> (i32, i32, i32) {
    %c0_i32 = arith.constant 0 : i32
    %c0_i32_0 = arith.constant 0 : i32
    %c0_i32_1 = arith.constant 0 : i32
    %c0_i32_2 = arith.constant 0 : i32
    return %c0_i32, %c0_i32_0, %c0_i32_1 : i32, i32, i32
  }
  func.func @transform_15(%arg0: i32) -> (i32, i32, i32) {
    %c0_i32 = arith.constant 0 : i32
    %c0_i32_0 = arith.constant 0 : i32
    %c0_i32_1 = arith.constant 0 : i32
    %c0_i32_2 = arith.constant 0 : i32
    return %c0_i32, %c0_i32_0, %c0_i32_1 : i32, i32, i32
  }
  func.func @transform_16(%arg0: i32) -> (i32, i32) {
    %c0_i32 = arith.constant 0 : i32
    %c0_i32_0 = arith.constant 0 : i32
    %c0_i32_1 = arith.constant 0 : i32
    return %c0_i32, %c0_i32_0 : i32, i32
  }
  func.func @transform_17(%arg0: i32) -> (i32, i32) {
    %c0_i32 = arith.constant 0 : i32
    %c0_i32_0 = arith.constant 0 : i32
    %c0_i32_1 = arith.constant 0 : i32
    return %c0_i32, %c0_i32_0 : i32, i32
  }
  func.func @transform_18(%arg0: i32) -> (i32, i32) {
    %c0_i32 = arith.constant 0 : i32
    %c0_i32_0 = arith.constant 0 : i32
    %c0_i32_1 = arith.constant 0 : i32
    return %c0_i32, %c0_i32_0 : i32, i32
  }
}

</mosaic_0001>

<llo_original>
// kernel: bertweet_classifier_forward.1
$region0: #{bertweet_classifier_forward.1}
  #allocation0 [shape = 'u32[]', space=smem, size = 0x4, offset = 0x4, fixed_abs, tag = 'smem constant byte address 0x4 - core index']
  #allocation1 [shape = 'u32[72,128]{1,0:T(1,128)}', space=vmem, size = 0x9000, scoped, tag = 'internal scratch']
  %s0 = inlined_call_operand.vmem [shape: f32[16,32], index: 0, kind: input, shape index: {}]
  %s1 = inlined_call_operand.vmem [shape: f32[2,8], index: 1, kind: input, shape index: {}]
  %s2 = inlined_call_operand.vmem [shape: f32[1,32], index: 2, kind: input, shape index: {}]
  %s3 = inlined_call_operand.vmem [shape: f32[1,32], index: 3, kind: input, shape index: {}]
  %s4 = inlined_call_operand.vmem [shape: f32[2,32,96], index: 4, kind: input, shape index: {}]
  %s5 = inlined_call_operand.vmem [shape: f32[2,1,96], index: 5, kind: input, shape index: {}]
  %s6 = inlined_call_operand.vmem [shape: f32[2,32,32], index: 6, kind: input, shape index: {}]
  %s7 = inlined_call_operand.vmem [shape: f32[2,1,32], index: 7, kind: input, shape index: {}]
  %s8 = inlined_call_operand.vmem [shape: f32[2,1,32], index: 8, kind: input, shape index: {}]
  %s9 = inlined_call_operand.vmem [shape: f32[2,1,32], index: 9, kind: input, shape index: {}]
  %s10 = inlined_call_operand.vmem [shape: f32[2,32,64], index: 10, kind: input, shape index: {}]
  %s11 = inlined_call_operand.vmem [shape: f32[2,1,64], index: 11, kind: input, shape index: {}]
  %s12 = inlined_call_operand.vmem [shape: f32[2,64,32], index: 12, kind: input, shape index: {}]
  %s13 = inlined_call_operand.vmem [shape: f32[2,1,32], index: 13, kind: input, shape index: {}]
  %s14 = inlined_call_operand.vmem [shape: f32[2,1,32], index: 14, kind: input, shape index: {}]
  %s15 = inlined_call_operand.vmem [shape: f32[2,1,32], index: 15, kind: input, shape index: {}]
  %s16 = inlined_call_operand.vmem [shape: f32[32,128], index: 16, kind: input, shape index: {}]
  %s17 = inlined_call_operand.vmem [shape: f32[1,128], index: 17, kind: input, shape index: {}]
  %s18 = inlined_call_operand.hbm [shape: f32[2,128], index: 18, kind: output, shape index: {}]
  %s19 = sld [smem:[#allocation0]]
  $region82: #{bertweet_classifier_forward.1} parent=0
    _
  %s21 = ssub.s32 1, %s19
  %s22 = scalar_select 0, %s21, %s19
  $region1: #{bertweet_classifier_forward.1} parent=0
    #allocation2 [shape = 'u8[1024]{0}', space=vmem, size = 0x400, scoped, tag = 'output window, operand 0, single buffered']
    #allocation3 [shape = 's32[1]{0}', space=sflag, size = 0x4, scoped, tag = 'scoped memory for bertweet_classifier_forward.1']
    %23 = vsyncpa [#allocation3], 0
    // Predicated region
    $region2: #{bertweet_classifier_forward.1} parent=1 // pred_check
      _
    $region3: #{bertweet_classifier_forward.1} parent=1 // pred_check_branch
      %25 = sbr.rel (0) target = $region5
    $region4: #{bertweet_classifier_forward.1} parent=1 // pred_region
      _
    $region5: #{bertweet_classifier_forward.1} parent=1 // pred_fallthru
      _
    // Predicated region
    $region6: #{bertweet_classifier_forward.1} parent=1 // pred_check
      _
    $region7: #{bertweet_classifier_forward.1} parent=1 // pred_check_branch
      %27 = sbr.rel (0) target = $region9
    $region8: #{bertweet_classifier_forward.1} parent=1 // pred_region
      _
    $region9: #{bertweet_classifier_forward.1} parent=1 // pred_fallthru
      _
    // Predicated region
    $region10: #{bertweet_classifier_forward.1} parent=1 // pred_check
      _
    $region11: #{bertweet_classifier_forward.1} parent=1 // pred_check_branch
      %29 = sbr.rel (0) target = $region13
    $region12: #{bertweet_classifier_forward.1} parent=1 // pred_region
      _
    $region13: #{bertweet_classifier_forward.1} parent=1 // pred_fallthru
      _
    // Predicated region
    $region14: #{bertweet_classifier_forward.1} parent=1 // pred_check
      _
    $region15: #{bertweet_classifier_forward.1} parent=1 // pred_check_branch
      %31 = sbr.rel (0) target = $region17
    $region16: #{bertweet_classifier_forward.1} parent=1 // pred_region
      _
    $region17: #{bertweet_classifier_forward.1} parent=1 // pred_fallthru
      _
    // Predicated region
    $region18: #{bertweet_classifier_forward.1} parent=1 // pred_check
      _
    $region19: #{bertweet_classifier_forward.1} parent=1 // pred_check_branch
      %33 = sbr.rel (0) target = $region21
    $region20: #{bertweet_classifier_forward.1} parent=1 // pred_region
      _
    $region21: #{bertweet_classifier_forward.1} parent=1 // pred_fallthru
      _
    // Predicated region
    $region22: #{bertweet_classifier_forward.1} parent=1 // pred_check
      _
    $region23: #{bertweet_classifier_forward.1} parent=1 // pred_check_branch
      %35 = sbr.rel (0) target = $region25
    $region24: #{bertweet_classifier_forward.1} parent=1 // pred_region
      _
    $region25: #{bertweet_classifier_forward.1} parent=1 // pred_fallthru
      _
    // Predicated region
    $region26: #{bertweet_classifier_forward.1} parent=1 // pred_check
      _
    $region27: #{bertweet_classifier_forward.1} parent=1 // pred_check_branch
      %37 = sbr.rel (0) target = $region29
    $region28: #{bertweet_classifier_forward.1} parent=1 // pred_region
      _
    $region29: #{bertweet_classifier_forward.1} parent=1 // pred_fallthru
      _
    // Predicated region
    $region30: #{bertweet_classifier_forward.1} parent=1 // pred_check
      _
    $region31: #{bertweet_classifier_forward.1} parent=1 // pred_check_branch
      %39 = sbr.rel (0) target = $region33
    $region32: #{bertweet_classifier_forward.1} parent=1 // pred_region
      _
    $region33: #{bertweet_classifier_forward.1} parent=1 // pred_fallthru
      _
    // Predicated region
    $region34: #{bertweet_classifier_forward.1} parent=1 // pred_check
      _
    $region35: #{bertweet_classifier_forward.1} parent=1 // pred_check_branch
      %41 = sbr.rel (0) target = $region37
    $region36: #{bertweet_classifier_forward.1} parent=1 // pred_region
      _
    $region37: #{bertweet_classifier_forward.1} parent=1 // pred_fallthru
      _
    // Predicated region
    $region38: #{bertweet_classifier_forward.1} parent=1 // pred_check
      _
    $region39: #{bertweet_classifier_forward.1} parent=1 // pred_check_branch
      %43 = sbr.rel (0) target = $region41
    $region40: #{bertweet_classifier_forward.1} parent=1 // pred_region
      _
    $region41: #{bertweet_classifier_forward.1} parent=1 // pred_fallthru
      _
    // Predicated region
    $region42: #{bertweet_classifier_forward.1} parent=1 // pred_check
      _
    $region43: #{bertweet_classifier_forward.1} parent=1 // pred_check_branch
      %45 = sbr.rel (0) target = $region45
    $region44: #{bertweet_classifier_forward.1} parent=1 // pred_region
      _
    $region45: #{bertweet_classifier_forward.1} parent=1 // pred_fallthru
      _
    // Predicated region
    $region46: #{bertweet_classifier_forward.1} parent=1 // pred_check
      _
    $region47: #{bertweet_classifier_forward.1} parent=1 // pred_check_branch
      %47 = sbr.rel (0) target = $region49
    $region48: #{bertweet_classifier_forward.1} parent=1 // pred_region
      _
    $region49: #{bertweet_classifier_forward.1} parent=1 // pred_fallthru
      _
    // Predicated region
    $region50: #{bertweet_classifier_forward.1} parent=1 // pred_check
      _
    $region51: #{bertweet_classifier_forward.1} parent=1 // pred_check_branch
      %49 = sbr.rel (0) target = $region53
    $region52: #{bertweet_classifier_forward.1} parent=1 // pred_region
      _
    $region53: #{bertweet_classifier_forward.1} parent=1 // pred_fallthru
      _
    // Predicated region
    $region54: #{bertweet_classifier_forward.1} parent=1 // pred_check
      _
    $region55: #{bertweet_classifier_forward.1} parent=1 // pred_check_branch
      %51 = sbr.rel (0) target = $region57
    $region56: #{bertweet_classifier_forward.1} parent=1 // pred_region
      _
    $region57: #{bertweet_classifier_forward.1} parent=1 // pred_fallthru
      _
    // Predicated region
    $region58: #{bertweet_classifier_forward.1} parent=1 // pred_check
      _
    $region59: #{bertweet_classifier_forward.1} parent=1 // pred_check_branch
      %53 = sbr.rel (0) target = $region61
    $region60: #{bertweet_classifier_forward.1} parent=1 // pred_region
      _
    $region61: #{bertweet_classifier_forward.1} parent=1 // pred_fallthru
      _
    // Predicated region
    $region62: #{bertweet_classifier_forward.1} parent=1 // pred_check
      _
    $region63: #{bertweet_classifier_forward.1} parent=1 // pred_check_branch
      %55 = sbr.rel (0) target = $region65
    $region64: #{bertweet_classifier_forward.1} parent=1 // pred_region
      _
    $region65: #{bertweet_classifier_forward.1} parent=1 // pred_fallthru
      _
    // Predicated region
    $region66: #{bertweet_classifier_forward.1} parent=1 // pred_check
      _
    $region67: #{bertweet_classifier_forward.1} parent=1 // pred_check_branch
      %57 = sbr.rel (0) target = $region69
    $region68: #{bertweet_classifier_forward.1} parent=1 // pred_region
      _
    $region69: #{bertweet_classifier_forward.1} parent=1 // pred_fallthru
      _
    // Predicated region
    $region70: #{bertweet_classifier_forward.1} parent=1 // pred_check
      _
    $region71: #{bertweet_classifier_forward.1} parent=1 // pred_check_branch
      %59 = sbr.rel (0) target = $region73
    $region72: #{bertweet_classifier_forward.1} parent=1 // pred_region
      _
    $region73: #{bertweet_classifier_forward.1} parent=1 // pred_fallthru
      _
    %v60 = vld [vmem:[%s0] sm:$0xff]
    %v61 = vld [vmem:[%s0 + $0x8] sm:$0xff]
    %v62 = vld [vmem:[%s2] sm:$0x1]
    %v63 = vld [vmem:[%s3] sm:$0x1]
    %vm64 = vcmask 261120
    %v65 = vsel %vm64, %v60, 0.0
    %66 = vadd.xlane.f32.xlu0 %v65
    %v67 = vpop.xlane.xlu0 %66
    %v68 = vsel %vm64, %v61, 0.0
    %69 = vadd.xlane.f32.xlu0 %v68
    %v70 = vpop.xlane.xlu0 %69
    %v71 = vrcp.pop 32.0
    %v72 = vmul.f32 32.0, %v71
    %v73 = vsub.f32 1.0, %v72
    %v74 = vmul.f32 %v71, %v73
    %v75 = vadd.f32 %v71, %v74
    %vm76 = vweird.f32 %v71
    %v77 = vsel %vm76, %v71, %v75
    %v78 = vmul.f32 %v67, %v77
    %v79 = vmul.f32 %v70, %v77
    %v80 = vsub.f32 %v60, %v78
    %v81 = vsub.f32 %v61, %v79
    %v82 = vmul.f32 %v80, %v80
    %v83 = vmul.f32 %v81, %v81
    %v84 = vsel %vm64, %v82, 0.0
    %85 = vadd.xlane.f32.xlu0 %v84
    %v86 = vpop.xlane.xlu0 %85
    %v87 = vsel %vm64, %v83, 0.0
    %88 = vadd.xlane.f32.xlu0 %v87
    %v89 = vpop.xlane.xlu0 %88
    %v90 = vmul.f32 %v86, %v77
    %v91 = vmul.f32 %v89, %v77
    %v92 = vadd.f32 %v90, 1e-05
    %v93 = vadd.f32 %v91, 1e-05
    %v94 = vrsqrt.pop %v92
    %v95 = vmul.f32 %v94, %v92
    %v96 = vmul.f32 %v95, %v94
    %v97 = vmul.f32 0.5, %v96
    %v98 = vsub.f32 1.5, %v97
    %v99 = vmul.f32 %v94, %v98
    %vm100 = vweird.f32 %v92
    %vm101 = vweird.f32 %v94
    %vm102 = vmor %vm100, %vm101
    %v103 = vsel %vm102, %v94, %v99
    %v104 = vrsqrt.pop %v93
    %v105 = vmul.f32 %v104, %v93
    %v106 = vmul.f32 %v105, %v104
    %v107 = vmul.f32 0.5, %v106
    %v108 = vsub.f32 1.5, %v107
    %v109 = vmul.f32 %v104, %v108
    %vm110 = vweird.f32 %v93
    %vm111 = vweird.f32 %v104
    %vm112 = vmor %vm110, %vm111
    %v113 = vsel %vm112, %v104, %v109
    %v114 = vmul.f32 %v80, %v103
    %v115 = vmul.f32 %v81, %v113
    %v117 = vperm.slane %v62, 0
    %v119 = vmul.f32 %v114, %v117
    %v120 = vmul.f32 %v115, %v117
    %v122 = vperm.slane %v63, 0
    %v124 = vadd.f32 %v119, %v122
    %v125 = vadd.f32 %v120, %v122
    %v126 = vld [vmem:[%s1] sm:$0x3]
    %v127 = vld [vmem:[%s4] sm:$0xff]
    %v128 = vld [vmem:[%s4 + $0x8] sm:$0xff]
    %v129 = vld [vmem:[%s4 + $0x10] sm:$0xff]
    %v130 = vld [vmem:[%s4 + $0x18] sm:$0xff]
    %v131 = vld [vmem:[%s5] sm:$0x1]
    %v133 = vperm.slane %v131, 0
    %v136 = vsel %vm64, %v124, 0
    %v139 = vsel %vm64, %v125, 0
    %141 = vmatpush.msra.mxu0 0.0
    %142 = vmatpush.msra.mxu0 0.0
    %143 = vmatpush.msra.mxu0 0.0
    %144 = vmatpush.msra.mxu0 0.0
    %145 = vmatpush.msra.mxu0 0.0
    %146 = vmatpush.msra.mxu0 0.0
    %147 = vmatpush.msra.mxu0 0.0
    %148 = vmatpush.msra.mxu0 0.0
    %149 = vmatpush.msra.mxu0 0.0
    %150 = vmatpush.msra.mxu0 0.0
    %151 = vmatpush.msra.mxu0 0.0
    %152 = vmatpush.msra.mxu0 0.0
    %153 = vmatpush.msra.mxu0 %v130
    %154 = vmatpush.msra.mxu0 %v129
    %155 = vmatpush.msra.mxu0 %v128
    %156 = vmatpush.msra.mxu0 %v127
    %157 = vmatmul.f32.gmra.mxu0 %v136
    %v158 = vpop.f32.mrf.mxu0
    %v159 = vadd.f32 %v133, %v158
    %160 = vmatmul.f32.gmra.mxu0 %v139
    %v161 = vpop.f32.mrf.mxu0
    %v162 = vadd.f32 %v133, %v161
    %163 = vdwg.mxu0
    %165 = vrot.lane.b32.xlu0 %v159, 96
    %v166 = vpop.permute.xlu0 %165
    %vm167 = vcmask 64512
    %v168 = vsel %vm167, %v159, 0
    %v170 = vsel %vm167, %v166, 0
    %172 = vmatpush.xpose.msra.mxu0 0.0
    %173 = vmatpush.xpose.msra.mxu0 0.0
    %174 = vmatpush.xpose.msra.mxu0 0.0
    %175 = vmatpush.xpose.msra.mxu0 0.0
    %176 = vmatpush.xpose.msra.mxu0 0.0
    %177 = vmatpush.xpose.msra.mxu0 0.0
    %178 = vmatpush.xpose.msra.mxu0 0.0
    %179 = vmatpush.xpose.msra.mxu0 0.0
    %180 = vmatpush.xpose.msra.mxu0 0.0
    %181 = vmatpush.xpose.msra.mxu0 0.0
    %182 = vmatpush.xpose.msra.mxu0 0.0
    %183 = vmatpush.xpose.msra.mxu0 0.0
    %184 = vmatpush.xpose.msra.mxu0 0.0
    %185 = vmatpush.xpose.msra.mxu0 0.0
    %186 = vmatpush.xpose.msra.mxu0 0.0
    %187 = vmatpush.xpose.msra.mxu0 %v170
    %188 = vmatmul.f32.gmra.mxu0 %v168
    %v189 = vpop.f32.mrf.mxu0
    %v190 = vadd.f32 0.0, %v189
    %191 = vdwg.mxu0
    %v192 = vmul.f32 %v190, 0.35355338
    %v193 = vperm.slane %v126, 0
    %v194 = vadd.f32 %v192, %v193
    %v195 = vsel %vm167, %v194, -inf
    %196 = vmax.xlane.f32.xlu0 %v195
    %v197 = vpop.xlane.xlu0 %196
    %v198 = vsub.f32 %v194, %v197
    %v199 = vmul.f32 %v198, 1.442695
    %v200 = vpow.pop %v199
    %v201 = vsel %vm167, %v200, 0.0
    %202 = vadd.xlane.f32.xlu0 %v201
    %v203 = vpop.xlane.xlu0 %202
    %v204 = vrcp.pop %v203
    %v205 = vmul.f32 %v200, %v204
    %206 = vrot.lane.b32.xlu0 %v159, 64
    %v207 = vpop.permute.xlu0 %206
    %v210 = vsel %vm167, %v205, 0
    %212 = vmatpush.msra.mxu0 0.0
    %213 = vmatpush.msra.mxu0 0.0
    %214 = vmatpush.msra.mxu0 0.0
    %215 = vmatpush.msra.mxu0 0.0
    %216 = vmatpush.msra.mxu0 0.0
    %217 = vmatpush.msra.mxu0 0.0
    %218 = vmatpush.msra.mxu0 0.0
    %219 = vmatpush.msra.mxu0 0.0
    %220 = vmatpush.msra.mxu0 0.0
    %221 = vmatpush.msra.mxu0 0.0
    %222 = vmatpush.msra.mxu0 0.0
    %223 = vmatpush.msra.mxu0 0.0
    %224 = vmatpush.msra.mxu0 0.0
    %225 = vmatpush.msra.mxu0 0.0
    %226 = vmatpush.msra.mxu0 0.0
    %227 = vmatpush.msra.mxu0 %v207
    %228 = vmatmul.f32.gmra.mxu0 %v210
    %v229 = vpop.f32.mrf.mxu0
    %v230 = vadd.f32 0.0, %v229
    %231 = vdwg.mxu0
    %232 = vrot.lane.b32.xlu0 %v159, 120
    %v233 = vpop.permute.xlu0 %232
    %234 = vrot.lane.b32.xlu0 %v159, 88
    %v235 = vpop.permute.xlu0 %234
    %v236 = vsel %vm167, %v233, 0
    %v238 = vsel %vm167, %v235, 0
    %240 = vmatpush.xpose.msra.mxu0 0.0
    %241 = vmatpush.xpose.msra.mxu0 0.0
    %242 = vmatpush.xpose.msra.mxu0 0.0
    %243 = vmatpush.xpose.msra.mxu0 0.0
    %244 = vmatpush.xpose.msra.mxu0 0.0
    %245 = vmatpush.xpose.msra.mxu0 0.0
    %246 = vmatpush.xpose.msra.mxu0 0.0
    %247 = vmatpush.xpose.msra.mxu0 0.0
    %248 = vmatpush.xpose.msra.mxu0 0.0
    %249 = vmatpush.xpose.msra.mxu0 0.0
    %250 = vmatpush.xpose.msra.mxu0 0.0
    %251 = vmatpush.xpose.msra.mxu0 0.0
    %252 = vmatpush.xpose.msra.mxu0 0.0
    %253 = vmatpush.xpose.msra.mxu0 0.0
    %254 = vmatpush.xpose.msra.mxu0 0.0
    %255 = vmatpush.xpose.msra.mxu0 %v238
    %256 = vmatmul.f32.gmra.mxu0 %v236
    %v257 = vpop.f32.mrf.mxu0
    %v258 = vadd.f32 0.0, %v257
    %259 = vdwg.mxu0
    %v260 = vmul.f32 %v258, 0.35355338
    %v261 = vadd.f32 %v260, %v193
    %v262 = vsel %vm167, %v261, -inf
    %263 = vmax.xlane.f32.xlu0 %v262
    %v264 = vpop.xlane.xlu0 %263
    %v265 = vsub.f32 %v261, %v264
    %v266 = vmul.f32 %v265, 1.442695
    %v267 = vpow.pop %v266
    %v268 = vsel %vm167, %v267, 0.0
    %269 = vadd.xlane.f32.xlu0 %v268
    %v270 = vpop.xlane.xlu0 %269
    %v271 = vrcp.pop %v270
    %v272 = vmul.f32 %v267, %v271
    %273 = vrot.lane.b32.xlu0 %v159, 56
    %v274 = vpop.permute.xlu0 %273
    %v277 = vsel %vm167, %v272, 0
    %279 = vmatpush.msra.mxu0 0.0
    %280 = vmatpush.msra.mxu0 0.0
    %281 = vmatpush.msra.mxu0 0.0
    %282 = vmatpush.msra.mxu0 0.0
    %283 = vmatpush.msra.mxu0 0.0
    %284 = vmatpush.msra.mxu0 0.0
    %285 = vmatpush.msra.mxu0 0.0
    %286 = vmatpush.msra.mxu0 0.0
    %287 = vmatpush.msra.mxu0 0.0
    %288 = vmatpush.msra.mxu0 0.0
    %289 = vmatpush.msra.mxu0 0.0
    %290 = vmatpush.msra.mxu0 0.0
    %291 = vmatpush.msra.mxu0 0.0
    %292 = vmatpush.msra.mxu0 0.0
    %293 = vmatpush.msra.mxu0 0.0
    %294 = vmatpush.msra.mxu0 %v274
    %295 = vmatmul.f32.gmra.mxu0 %v277
    %v296 = vpop.f32.mrf.mxu0
    %v297 = vadd.f32 0.0, %v296
    %298 = vdwg.mxu0
    %299 = vrot.lane.b32.xlu0 %v159, 112
    %v300 = vpop.permute.xlu0 %299
    %301 = vrot.lane.b32.xlu0 %v159, 80
    %v302 = vpop.permute.xlu0 %301
    %v303 = vsel %vm167, %v300, 0
    %v305 = vsel %vm167, %v302, 0
    %307 = vmatpush.xpose.msra.mxu0 0.0
    %308 = vmatpush.xpose.msra.mxu0 0.0
    %309 = vmatpush.xpose.msra.mxu0 0.0
    %310 = vmatpush.xpose.msra.mxu0 0.0
    %311 = vmatpush.xpose.msra.mxu0 0.0
    %312 = vmatpush.xpose.msra.mxu0 0.0
    %313 = vmatpush.xpose.msra.mxu0 0.0
    %314 = vmatpush.xpose.msra.mxu0 0.0
    %315 = vmatpush.xpose.msra.mxu0 0.0
    %316 = vmatpush.xpose.msra.mxu0 0.0
    %317 = vmatpush.xpose.msra.mxu0 0.0
    %318 = vmatpush.xpose.msra.mxu0 0.0
    %319 = vmatpush.xpose.msra.mxu0 0.0
    %320 = vmatpush.xpose.msra.mxu0 0.0
    %321 = vmatpush.xpose.msra.mxu0 0.0
    %322 = vmatpush.xpose.msra.mxu0 %v305
    %323 = vmatmul.f32.gmra.mxu0 %v303
    %v324 = vpop.f32.mrf.mxu0
    %v325 = vadd.f32 0.0, %v324
    %326 = vdwg.mxu0
    %v327 = vmul.f32 %v325, 0.35355338
    %v328 = vadd.f32 %v327, %v193
    %v329 = vsel %vm167, %v328, -inf
    %330 = vmax.xlane.f32.xlu0 %v329
    %v331 = vpop.xlane.xlu0 %330
    %v332 = vsub.f32 %v328, %v331
    %v333 = vmul.f32 %v332, 1.442695
    %v334 = vpow.pop %v333
    %v335 = vsel %vm167, %v334, 0.0
    %336 = vadd.xlane.f32.xlu0 %v335
    %v337 = vpop.xlane.xlu0 %336
    %v338 = vrcp.pop %v337
    %v339 = vmul.f32 %v334, %v338
    %340 = vrot.lane.b32.xlu0 %v159, 48
    %v341 = vpop.permute.xlu0 %340
    %v344 = vsel %vm167, %v339, 0
    %346 = vmatpush.msra.mxu0 0.0
    %347 = vmatpush.msra.mxu0 0.0
    %348 = vmatpush.msra.mxu0 0.0
    %349 = vmatpush.msra.mxu0 0.0
    %350 = vmatpush.msra.mxu0 0.0
    %351 = vmatpush.msra.mxu0 0.0
    %352 = vmatpush.msra.mxu0 0.0
    %353 = vmatpush.msra.mxu0 0.0
    %354 = vmatpush.msra.mxu0 0.0
    %355 = vmatpush.msra.mxu0 0.0
    %356 = vmatpush.msra.mxu0 0.0
    %357 = vmatpush.msra.mxu0 0.0
    %358 = vmatpush.msra.mxu0 0.0
    %359 = vmatpush.msra.mxu0 0.0
    %360 = vmatpush.msra.mxu0 0.0
    %361 = vmatpush.msra.mxu0 %v341
    %362 = vmatmul.f32.gmra.mxu0 %v344
    %v363 = vpop.f32.mrf.mxu0
    %v364 = vadd.f32 0.0, %v363
    %365 = vdwg.mxu0
    %366 = vrot.lane.b32.xlu0 %v159, 104
    %v367 = vpop.permute.xlu0 %366
    %368 = vrot.lane.b32.xlu0 %v159, 72
    %v369 = vpop.permute.xlu0 %368
    %v370 = vsel %vm167, %v367, 0
    %v372 = vsel %vm167, %v369, 0
    %374 = vmatpush.xpose.msra.mxu0 0.0
    %375 = vmatpush.xpose.msra.mxu0 0.0
    %376 = vmatpush.xpose.msra.mxu0 0.0
    %377 = vmatpush.xpose.msra.mxu0 0.0
    %378 = vmatpush.xpose.msra.mxu0 0.0
    %379 = vmatpush.xpose.msra.mxu0 0.0
    %380 = vmatpush.xpose.msra.mxu0 0.0
    %381 = vmatpush.xpose.msra.mxu0 0.0
    %382 = vmatpush.xpose.msra.mxu0 0.0
    %383 = vmatpush.xpose.msra.mxu0 0.0
    %384 = vmatpush.xpose.msra.mxu0 0.0
    %385 = vmatpush.xpose.msra.mxu0 0.0
    %386 = vmatpush.xpose.msra.mxu0 0.0
    %387 = vmatpush.xpose.msra.mxu0 0.0
    %388 = vmatpush.xpose.msra.mxu0 0.0
    %389 = vmatpush.xpose.msra.mxu0 %v372
    %390 = vmatmul.f32.gmra.mxu0 %v370
    %v391 = vpop.f32.mrf.mxu0
    %v392 = vadd.f32 0.0, %v391
    %393 = vdwg.mxu0
    %v394 = vmul.f32 %v392, 0.35355338
    %v395 = vadd.f32 %v394, %v193
    %v396 = vsel %vm167, %v395, -inf
    %397 = vmax.xlane.f32.xlu0 %v396
    %v398 = vpop.xlane.xlu0 %397
    %v399 = vsub.f32 %v395, %v398
    %v400 = vmul.f32 %v399, 1.442695
    %v401 = vpow.pop %v400
    %v402 = vsel %vm167, %v401, 0.0
    %403 = vadd.xlane.f32.xlu0 %v402
    %v404 = vpop.xlane.xlu0 %403
    %v405 = vrcp.pop %v404
    %v406 = vmul.f32 %v401, %v405
    %407 = vrot.lane.b32.xlu0 %v159, 40
    %v408 = vpop.permute.xlu0 %407
    %v411 = vsel %vm167, %v406, 0
    %413 = vmatpush.msra.mxu0 0.0
    %414 = vmatpush.msra.mxu0 0.0
    %415 = vmatpush.msra.mxu0 0.0
    %416 = vmatpush.msra.mxu0 0.0
    %417 = vmatpush.msra.mxu0 0.0
    %418 = vmatpush.msra.mxu0 0.0
    %419 = vmatpush.msra.mxu0 0.0
    %420 = vmatpush.msra.mxu0 0.0
    %421 = vmatpush.msra.mxu0 0.0
    %422 = vmatpush.msra.mxu0 0.0
    %423 = vmatpush.msra.mxu0 0.0
    %424 = vmatpush.msra.mxu0 0.0
    %425 = vmatpush.msra.mxu0 0.0
    %426 = vmatpush.msra.mxu0 0.0
    %427 = vmatpush.msra.mxu0 0.0
    %428 = vmatpush.msra.mxu0 %v408
    %429 = vmatmul.f32.gmra.mxu0 %v411
    %v430 = vpop.f32.mrf.mxu0
    %v431 = vadd.f32 0.0, %v430
    %432 = vdwg.mxu0
    %434 = vrot.lane.b32.xlu0 %v297, 8
    %v435 = vpop.permute.xlu0 %434
    %438 = vrot.lane.b32.xlu0 %v364, 16
    %v439 = vpop.permute.xlu0 %438
    %442 = vrot.lane.b32.xlu0 %v431, 24
    %v443 = vpop.permute.xlu0 %442
    %v445 = vsel %vm167, %v230, %v435
    %vm446 = vcmask 130048
    %v447 = vsel %vm446, %v445, %v439
    %vm448 = vcmask 195584
    %v449 = vsel %vm448, %v447, %v443
    %451 = vrot.lane.b32.xlu0 %v162, 96
    %v452 = vpop.permute.xlu0 %451
    %v453 = vsel %vm167, %v162, 0
    %v455 = vsel %vm167, %v452, 0
    %457 = vmatpush.xpose.msra.mxu0 0.0
    %458 = vmatpush.xpose.msra.mxu0 0.0
    %459 = vmatpush.xpose.msra.mxu0 0.0
    %460 = vmatpush.xpose.msra.mxu0 0.0
    %461 = vmatpush.xpose.msra.mxu0 0.0
    %462 = vmatpush.xpose.msra.mxu0 0.0
    %463 = vmatpush.xpose.msra.mxu0 0.0
    %464 = vmatpush.xpose.msra.mxu0 0.0
    %465 = vmatpush.xpose.msra.mxu0 0.0
    %466 = vmatpush.xpose.msra.mxu0 0.0
    %467 = vmatpush.xpose.msra.mxu0 0.0
    %468 = vmatpush.xpose.msra.mxu0 0.0
    %469 = vmatpush.xpose.msra.mxu0 0.0
    %470 = vmatpush.xpose.msra.mxu0 0.0
    %471 = vmatpush.xpose.msra.mxu0 0.0
    %472 = vmatpush.xpose.msra.mxu0 %v455
    %473 = vmatmul.f32.gmra.mxu0 %v453
    %v474 = vpop.f32.mrf.mxu0
    %v475 = vadd.f32 0.0, %v474
    %476 = vdwg.mxu0
    %v477 = vmul.f32 %v475, 0.35355338
    %v478 = vperm.slane %v126, 1
    %v479 = vadd.f32 %v477, %v478
    %v480 = vsel %vm167, %v479, -inf
    %481 = vmax.xlane.f32.xlu0 %v480
    %v482 = vpop.xlane.xlu0 %481
    %v483 = vsub.f32 %v479, %v482
    %v484 = vmul.f32 %v483, 1.442695
    %v485 = vpow.pop %v484
    %v486 = vsel %vm167, %v485, 0.0
    %487 = vadd.xlane.f32.xlu0 %v486
    %v488 = vpop.xlane.xlu0 %487
    %v489 = vrcp.pop %v488
    %v490 = vmul.f32 %v485, %v489
    %491 = vrot.lane.b32.xlu0 %v162, 64
    %v492 = vpop.permute.xlu0 %491
    %v495 = vsel %vm167, %v490, 0
    %497 = vmatpush.msra.mxu0 0.0
    %498 = vmatpush.msra.mxu0 0.0
    %499 = vmatpush.msra.mxu0 0.0
    %500 = vmatpush.msra.mxu0 0.0
    %501 = vmatpush.msra.mxu0 0.0
    %502 = vmatpush.msra.mxu0 0.0
    %503 = vmatpush.msra.mxu0 0.0
    %504 = vmatpush.msra.mxu0 0.0
    %505 = vmatpush.msra.mxu0 0.0
    %506 = vmatpush.msra.mxu0 0.0
    %507 = vmatpush.msra.mxu0 0.0
    %508 = vmatpush.msra.mxu0 0.0
    %509 = vmatpush.msra.mxu0 0.0
    %510 = vmatpush.msra.mxu0 0.0
    %511 = vmatpush.msra.mxu0 0.0
    %512 = vmatpush.msra.mxu0 %v492
    %513 = vmatmul.f32.gmra.mxu0 %v495
    %v514 = vpop.f32.mrf.mxu0
    %v515 = vadd.f32 0.0, %v514
    %516 = vdwg.mxu0
    %517 = vrot.lane.b32.xlu0 %v162, 120
    %v518 = vpop.permute.xlu0 %517
    %519 = vrot.lane.b32.xlu0 %v162, 88
    %v520 = vpop.permute.xlu0 %519
    %v521 = vsel %vm167, %v518, 0
    %v523 = vsel %vm167, %v520, 0
    %525 = vmatpush.xpose.msra.mxu0 0.0
    %526 = vmatpush.xpose.msra.mxu0 0.0
    %527 = vmatpush.xpose.msra.mxu0 0.0
    %528 = vmatpush.xpose.msra.mxu0 0.0
    %529 = vmatpush.xpose.msra.mxu0 0.0
    %530 = vmatpush.xpose.msra.mxu0 0.0
    %531 = vmatpush.xpose.msra.mxu0 0.0
    %532 = vmatpush.xpose.msra.mxu0 0.0
    %533 = vmatpush.xpose.msra.mxu0 0.0
    %534 = vmatpush.xpose.msra.mxu0 0.0
    %535 = vmatpush.xpose.msra.mxu0 0.0
    %536 = vmatpush.xpose.msra.mxu0 0.0
    %537 = vmatpush.xpose.msra.mxu0 0.0
    %538 = vmatpush.xpose.msra.mxu0 0.0
    %539 = vmatpush.xpose.msra.mxu0 0.0
    %540 = vmatpush.xpose.msra.mxu0 %v523
    %541 = vmatmul.f32.gmra.mxu0 %v521
    %v542 = vpop.f32.mrf.mxu0
    %v543 = vadd.f32 0.0, %v542
    %544 = vdwg.mxu0
    %v545 = vmul.f32 %v543, 0.35355338
    %v546 = vadd.f32 %v545, %v478
    %v547 = vsel %vm167, %v546, -inf
    %548 = vmax.xlane.f32.xlu0 %v547
    %v549 = vpop.xlane.xlu0 %548
    %v550 = vsub.f32 %v546, %v549
    %v551 = vmul.f32 %v550, 1.442695
    %v552 = vpow.pop %v551
    %v553 = vsel %vm167, %v552, 0.0
    %554 = vadd.xlane.f32.xlu0 %v553
    %v555 = vpop.xlane.xlu0 %554
    %v556 = vrcp.pop %v555
    %v557 = vmul.f32 %v552, %v556
    %558 = vrot.lane.b32.xlu0 %v162, 56
    %v559 = vpop.permute.xlu0 %558
    %v562 = vsel %vm167, %v557, 0
    %564 = vmatpush.msra.mxu0 0.0
    %565 = vmatpush.msra.mxu0 0.0
    %566 = vmatpush.msra.mxu0 0.0
    %567 = vmatpush.msra.mxu0 0.0
    %568 = vmatpush.msra.mxu0 0.0
    %569 = vmatpush.msra.mxu0 0.0
    %570 = vmatpush.msra.mxu0 0.0
    %571 = vmatpush.msra.mxu0 0.0
    %572 = vmatpush.msra.mxu0 0.0
    %573 = vmatpush.msra.mxu0 0.0
    %574 = vmatpush.msra.mxu0 0.0
    %575 = vmatpush.msra.mxu0 0.0
    %576 = vmatpush.msra.mxu0 0.0
    %577 = vmatpush.msra.mxu0 0.0
    %578 = vmatpush.msra.mxu0 0.0
    %579 = vmatpush.msra.mxu0 %v559
    %580 = vmatmul.f32.gmra.mxu0 %v562
    %v581 = vpop.f32.mrf.mxu0
    %v582 = vadd.f32 0.0, %v581
    %583 = vdwg.mxu0
    %584 = vrot.lane.b32.xlu0 %v162, 112
    %v585 = vpop.permute.xlu0 %584
    %586 = vrot.lane.b32.xlu0 %v162, 80
    %v587 = vpop.permute.xlu0 %586
    %v588 = vsel %vm167, %v585, 0
    %v590 = vsel %vm167, %v587, 0
    %592 = vmatpush.xpose.msra.mxu0 0.0
    %593 = vmatpush.xpose.msra.mxu0 0.0
    %594 = vmatpush.xpose.msra.mxu0 0.0
    %595 = vmatpush.xpose.msra.mxu0 0.0
    %596 = vmatpush.xpose.msra.mxu0 0.0
    %597 = vmatpush.xpose.msra.mxu0 0.0
    %598 = vmatpush.xpose.msra.mxu0 0.0
    %599 = vmatpush.xpose.msra.mxu0 0.0
    %600 = vmatpush.xpose.msra.mxu0 0.0
    %601 = vmatpush.xpose.msra.mxu0 0.0
    %602 = vmatpush.xpose.msra.mxu0 0.0
    %603 = vmatpush.xpose.msra.mxu0 0.0
    %604 = vmatpush.xpose.msra.mxu0 0.0
    %605 = vmatpush.xpose.msra.mxu0 0.0
    %606 = vmatpush.xpose.msra.mxu0 0.0
    %607 = vmatpush.xpose.msra.mxu0 %v590
    %608 = vmatmul.f32.gmra.mxu0 %v588
    %v609 = vpop.f32.mrf.mxu0
    %v610 = vadd.f32 0.0, %v609
    %611 = vdwg.mxu0
    %v612 = vmul.f32 %v610, 0.35355338
    %v613 = vadd.f32 %v612, %v478
    %v614 = vsel %vm167, %v613, -inf
    %615 = vmax.xlane.f32.xlu0 %v614
    %v616 = vpop.xlane.xlu0 %615
    %v617 = vsub.f32 %v613, %v616
    %v618 = vmul.f32 %v617, 1.442695
    %v619 = vpow.pop %v618
    %v620 = vsel %vm167, %v619, 0.0
    %621 = vadd.xlane.f32.xlu0 %v620
    %v622 = vpop.xlane.xlu0 %621
    %v623 = vrcp.pop %v622
    %v624 = vmul.f32 %v619, %v623
    %625 = vrot.lane.b32.xlu0 %v162, 48
    %v626 = vpop.permute.xlu0 %625
    %v629 = vsel %vm167, %v624, 0
    %631 = vmatpush.msra.mxu0 0.0
    %632 = vmatpush.msra.mxu0 0.0
    %633 = vmatpush.msra.mxu0 0.0
    %634 = vmatpush.msra.mxu0 0.0
    %635 = vmatpush.msra.mxu0 0.0
    %636 = vmatpush.msra.mxu0 0.0
    %637 = vmatpush.msra.mxu0 0.0
    %638 = vmatpush.msra.mxu0 0.0
    %639 = vmatpush.msra.mxu0 0.0
    %640 = vmatpush.msra.mxu0 0.0
    %641 = vmatpush.msra.mxu0 0.0
    %642 = vmatpush.msra.mxu0 0.0
    %643 = vmatpush.msra.mxu0 0.0
    %644 = vmatpush.msra.mxu0 0.0
    %645 = vmatpush.msra.mxu0 0.0
    %646 = vmatpush.msra.mxu0 %v626
    %647 = vmatmul.f32.gmra.mxu0 %v629
    %v648 = vpop.f32.mrf.mxu0
    %v649 = vadd.f32 0.0, %v648
    %650 = vdwg.mxu0
    %651 = vrot.lane.b32.xlu0 %v162, 104
    %v652 = vpop.permute.xlu0 %651
    %653 = vrot.lane.b32.xlu0 %v162, 72
    %v654 = vpop.permute.xlu0 %653
    %v655 = vsel %vm167, %v652, 0
    %v657 = vsel %vm167, %v654, 0
    %659 = vmatpush.xpose.msra.mxu0 0.0
    %660 = vmatpush.xpose.msra.mxu0 0.0
    %661 = vmatpush.xpose.msra.mxu0 0.0
    %662 = vmatpush.xpose.msra.mxu0 0.0
    %663 = vmatpush.xpose.msra.mxu0 0.0
    %664 = vmatpush.xpose.msra.mxu0 0.0
    %665 = vmatpush.xpose.msra.mxu0 0.0
    %666 = vmatpush.xpose.msra.mxu0 0.0
    %667 = vmatpush.xpose.msra.mxu0 0.0
    %668 = vmatpush.xpose.msra.mxu0 0.0
    %669 = vmatpush.xpose.msra.mxu0 0.0
    %670 = vmatpush.xpose.msra.mxu0 0.0
    %671 = vmatpush.xpose.msra.mxu0 0.0
    %672 = vmatpush.xpose.msra.mxu0 0.0
    %673 = vmatpush.xpose.msra.mxu0 0.0
    %674 = vmatpush.xpose.msra.mxu0 %v657
    %675 = vmatmul.f32.gmra.mxu0 %v655
    %v676 = vpop.f32.mrf.mxu0
    %v677 = vadd.f32 0.0, %v676
    %678 = vdwg.mxu0
    %v679 = vmul.f32 %v677, 0.35355338
    %v680 = vadd.f32 %v679, %v478
    %v681 = vsel %vm167, %v680, -inf
    %682 = vmax.xlane.f32.xlu0 %v681
    %v683 = vpop.xlane.xlu0 %682
    %v684 = vsub.f32 %v680, %v683
    %v685 = vmul.f32 %v684, 1.442695
    %v686 = vpow.pop %v685
    %v687 = vsel %vm167, %v686, 0.0
    %688 = vadd.xlane.f32.xlu0 %v687
    %v689 = vpop.xlane.xlu0 %688
    %v690 = vrcp.pop %v689
    %v691 = vmul.f32 %v686, %v690
    %692 = vrot.lane.b32.xlu0 %v162, 40
    %v693 = vpop.permute.xlu0 %692
    %v696 = vsel %vm167, %v691, 0
    %698 = vmatpush.msra.mxu0 0.0
    %699 = vmatpush.msra.mxu0 0.0
    %700 = vmatpush.msra.mxu0 0.0
    %701 = vmatpush.msra.mxu0 0.0
    %702 = vmatpush.msra.mxu0 0.0
    %703 = vmatpush.msra.mxu0 0.0
    %704 = vmatpush.msra.mxu0 0.0
    %705 = vmatpush.msra.mxu0 0.0
    %706 = vmatpush.msra.mxu0 0.0
    %707 = vmatpush.msra.mxu0 0.0
    %708 = vmatpush.msra.mxu0 0.0
    %709 = vmatpush.msra.mxu0 0.0
    %710 = vmatpush.msra.mxu0 0.0
    %711 = vmatpush.msra.mxu0 0.0
    %712 = vmatpush.msra.mxu0 0.0
    %713 = vmatpush.msra.mxu0 %v693
    %714 = vmatmul.f32.gmra.mxu0 %v696
    %v715 = vpop.f32.mrf.mxu0
    %v716 = vadd.f32 0.0, %v715
    %717 = vdwg.mxu0
    %719 = vrot.lane.b32.xlu0 %v582, 8
    %v720 = vpop.permute.xlu0 %719
    %723 = vrot.lane.b32.xlu0 %v649, 16
    %v724 = vpop.permute.xlu0 %723
    %727 = vrot.lane.b32.xlu0 %v716, 24
    %v728 = vpop.permute.xlu0 %727
    %v730 = vsel %vm167, %v515, %v720
    %v731 = vsel %vm446, %v730, %v724
    %v732 = vsel %vm448, %v731, %v728
    %v733 = vld [vmem:[%s6] sm:$0xff]
    %v734 = vld [vmem:[%s6 + $0x8] sm:$0xff]
    %v735 = vld [vmem:[%s6 + $0x10] sm:$0xff]
    %v736 = vld [vmem:[%s6 + $0x18] sm:$0xff]
    %v737 = vld [vmem:[%s7] sm:$0x1]
    %v739 = vperm.slane %v737, 0
    %v742 = vsel %vm64, %v449, 0
    %v745 = vsel %vm64, %v732, 0
    %747 = vmatpush.msra.mxu0 0.0
    %748 = vmatpush.msra.mxu0 0.0
    %749 = vmatpush.msra.mxu0 0.0
    %750 = vmatpush.msra.mxu0 0.0
    %751 = vmatpush.msra.mxu0 0.0
    %752 = vmatpush.msra.mxu0 0.0
    %753 = vmatpush.msra.mxu0 0.0
    %754 = vmatpush.msra.mxu0 0.0
    %755 = vmatpush.msra.mxu0 0.0
    %756 = vmatpush.msra.mxu0 0.0
    %757 = vmatpush.msra.mxu0 0.0
    %758 = vmatpush.msra.mxu0 0.0
    %759 = vmatpush.msra.mxu0 %v736
    %760 = vmatpush.msra.mxu0 %v735
    %761 = vmatpush.msra.mxu0 %v734
    %762 = vmatpush.msra.mxu0 %v733
    %763 = vmatmul.f32.gmra.mxu0 %v742
    %v764 = vpop.f32.mrf.mxu0
    %v765 = vadd.f32 %v739, %v764
    %766 = vmatmul.f32.gmra.mxu0 %v745
    %v767 = vpop.f32.mrf.mxu0
    %v768 = vadd.f32 %v739, %v767
    %769 = vdwg.mxu0
    %v770 = vadd.f32 %v765, %v124
    %v771 = vadd.f32 %v768, %v125
    %v772 = vld [vmem:[%s8] sm:$0x1]
    %v773 = vld [vmem:[%s9] sm:$0x1]
    %v774 = vsel %vm64, %v770, 0.0
    %775 = vadd.xlane.f32.xlu0 %v774
    %v776 = vpop.xlane.xlu0 %775
    %v777 = vsel %vm64, %v771, 0.0
    %778 = vadd.xlane.f32.xlu0 %v777
    %v779 = vpop.xlane.xlu0 %778
    %v780 = vmul.f32 %v776, %v77
    %v781 = vmul.f32 %v779, %v77
    %v782 = vsub.f32 %v770, %v780
    %v783 = vsub.f32 %v771, %v781
    %v784 = vmul.f32 %v782, %v782
    %v785 = vmul.f32 %v783, %v783
    %v786 = vsel %vm64, %v784, 0.0
    %787 = vadd.xlane.f32.xlu0 %v786
    %v788 = vpop.xlane.xlu0 %787
    %v789 = vsel %vm64, %v785, 0.0
    %790 = vadd.xlane.f32.xlu0 %v789
    %v791 = vpop.xlane.xlu0 %790
    %v792 = vmul.f32 %v788, %v77
    %v793 = vmul.f32 %v791, %v77
    %v794 = vadd.f32 %v792, 1e-05
    %v795 = vadd.f32 %v793, 1e-05
    %v796 = vrsqrt.pop %v794
    %v797 = vmul.f32 %v796, %v794
    %v798 = vmul.f32 %v797, %v796
    %v799 = vmul.f32 0.5, %v798
    %v800 = vsub.f32 1.5, %v799
    %v801 = vmul.f32 %v796, %v800
    %vm802 = vweird.f32 %v794
    %vm803 = vweird.f32 %v796
    %vm804 = vmor %vm802, %vm803
    %v805 = vsel %vm804, %v796, %v801
    %v806 = vrsqrt.pop %v795
    %v807 = vmul.f32 %v806, %v795
    %v808 = vmul.f32 %v807, %v806
    %v809 = vmul.f32 0.5, %v808
    %v810 = vsub.f32 1.5, %v809
    %v811 = vmul.f32 %v806, %v810
    %vm812 = vweird.f32 %v795
    %vm813 = vweird.f32 %v806
    %vm814 = vmor %vm812, %vm813
    %v815 = vsel %vm814, %v806, %v811
    %v816 = vmul.f32 %v782, %v805
    %v817 = vmul.f32 %v783, %v815
    %v819 = vperm.slane %v772, 0
    %v821 = vmul.f32 %v816, %v819
    %v822 = vmul.f32 %v817, %v819
    %v824 = vperm.slane %v773, 0
    %v826 = vadd.f32 %v821, %v824
    %v827 = vadd.f32 %v822, %v824
    %v828 = vld [vmem:[%s10] sm:$0xff]
    %v829 = vld [vmem:[%s10 + $0x8] sm:$0xff]
    %v830 = vld [vmem:[%s10 + $0x10] sm:$0xff]
    %v831 = vld [vmem:[%s10 + $0x18] sm:$0xff]
    %v832 = vld [vmem:[%s11] sm:$0x1]
    %v834 = vperm.slane %v832, 0
    %v837 = vsel %vm64, %v826, 0
    %v840 = vsel %vm64, %v827, 0
    %842 = vmatpush.msra.mxu0 0.0
    %843 = vmatpush.msra.mxu0 0.0
    %844 = vmatpush.msra.mxu0 0.0
    %845 = vmatpush.msra.mxu0 0.0
    %846 = vmatpush.msra.mxu0 0.0
    %847 = vmatpush.msra.mxu0 0.0
    %848 = vmatpush.msra.mxu0 0.0
    %849 = vmatpush.msra.mxu0 0.0
    %850 = vmatpush.msra.mxu0 0.0
    %851 = vmatpush.msra.mxu0 0.0
    %852 = vmatpush.msra.mxu0 0.0
    %853 = vmatpush.msra.mxu0 0.0
    %854 = vmatpush.msra.mxu0 %v831
    %855 = vmatpush.msra.mxu0 %v830
    %856 = vmatpush.msra.mxu0 %v829
    %857 = vmatpush.msra.mxu0 %v828
    %858 = vmatmul.f32.gmra.mxu0 %v837
    %v859 = vpop.f32.mrf.mxu0
    %v860 = vadd.f32 %v834, %v859
    %861 = vmatmul.f32.gmra.mxu0 %v840
    %v862 = vpop.f32.mrf.mxu0
    %v863 = vadd.f32 %v834, %v862
    %864 = vdwg.mxu0
    %v865 = vmul.f32 %v860, %v860
    %v866 = vmul.f32 %v863, %v863
    %v867 = vmul.f32 %v860, %v865
    %v868 = vmul.f32 %v863, %v866
    %v869 = vmul.f32 %v867, 0.044715
    %v870 = vmul.f32 %v868, 0.044715
    %v871 = vadd.f32 %v860, %v869
    %v872 = vadd.f32 %v863, %v870
    %v873 = vmul.f32 %v871, 0.7978846
    %v874 = vmul.f32 %v872, 0.7978846
    %v875 = vtanh.pop %v873
    %v876 = vtanh.pop %v874
    %v877 = vadd.f32 %v875, 1.0
    %v878 = vadd.f32 %v876, 1.0
    %v879 = vmul.f32 %v877, 0.5
    %v880 = vmul.f32 %v878, 0.5
    %v881 = vmul.f32 %v860, %v879
    %v882 = vmul.f32 %v863, %v880
    %v883 = vld [vmem:[%s12] sm:$0xff]
    %v884 = vld [vmem:[%s12 + $0x8] sm:$0xff]
    %v885 = vld [vmem:[%s12 + $0x10] sm:$0xff]
    %v886 = vld [vmem:[%s12 + $0x18] sm:$0xff]
    %v887 = vld [vmem:[%s12 + $0x20] sm:$0xff]
    %v888 = vld [vmem:[%s12 + $0x28] sm:$0xff]
    %v889 = vld [vmem:[%s12 + $0x30] sm:$0xff]
    %v890 = vld [vmem:[%s12 + $0x38] sm:$0xff]
    %v891 = vld [vmem:[%s13] sm:$0x1]
    %v893 = vperm.slane %v891, 0
    %vm895 = vcmask 523264
    %v897 = vsel %vm895, %v881, 0
    %v900 = vsel %vm895, %v882, 0
    %902 = vmatpush.msra.mxu0 0.0
    %903 = vmatpush.msra.mxu0 0.0
    %904 = vmatpush.msra.mxu0 0.0
    %905 = vmatpush.msra.mxu0 0.0
    %906 = vmatpush.msra.mxu0 0.0
    %907 = vmatpush.msra.mxu0 0.0
    %908 = vmatpush.msra.mxu0 0.0
    %909 = vmatpush.msra.mxu0 0.0
    %910 = vmatpush.msra.mxu0 %v890
    %911 = vmatpush.msra.mxu0 %v889
    %912 = vmatpush.msra.mxu0 %v888
    %913 = vmatpush.msra.mxu0 %v887
    %914 = vmatpush.msra.mxu0 %v886
    %915 = vmatpush.msra.mxu0 %v885
    %916 = vmatpush.msra.mxu0 %v884
    %917 = vmatpush.msra.mxu0 %v883
    %918 = vmatmul.f32.gmra.mxu0 %v897
    %v919 = vpop.f32.mrf.mxu0
    %v920 = vadd.f32 %v893, %v919
    %921 = vmatmul.f32.gmra.mxu0 %v900
    %v922 = vpop.f32.mrf.mxu0
    %v923 = vadd.f32 %v893, %v922
    %924 = vdwg.mxu0
    %v925 = vadd.f32 %v920, %v826
    %v926 = vadd.f32 %v923, %v827
    %v927 = vld [vmem:[%s14] sm:$0x1]
    %v928 = vld [vmem:[%s15] sm:$0x1]
    %v929 = vsel %vm64, %v925, 0.0
    %930 = vadd.xlane.f32.xlu0 %v929
    %v931 = vpop.xlane.xlu0 %930
    %v932 = vsel %vm64, %v926, 0.0
    %933 = vadd.xlane.f32.xlu0 %v932
    %v934 = vpop.xlane.xlu0 %933
    %v935 = vmul.f32 %v931, %v77
    %v936 = vmul.f32 %v934, %v77
    %v937 = vsub.f32 %v925, %v935
    %v938 = vsub.f32 %v926, %v936
    %v939 = vmul.f32 %v937, %v937
    %v940 = vmul.f32 %v938, %v938
    %v941 = vsel %vm64, %v939, 0.0
    %942 = vadd.xlane.f32.xlu0 %v941
    %v943 = vpop.xlane.xlu0 %942
    %v944 = vsel %vm64, %v940, 0.0
    %945 = vadd.xlane.f32.xlu0 %v944
    %v946 = vpop.xlane.xlu0 %945
    %v947 = vmul.f32 %v943, %v77
    %v948 = vmul.f32 %v946, %v77
    %v949 = vadd.f32 %v947, 1e-05
    %v950 = vadd.f32 %v948, 1e-05
    %v951 = vrsqrt.pop %v949
    %v952 = vmul.f32 %v951, %v949
    %v953 = vmul.f32 %v952, %v951
    %v954 = vmul.f32 0.5, %v953
    %v955 = vsub.f32 1.5, %v954
    %v956 = vmul.f32 %v951, %v955
    %vm957 = vweird.f32 %v949
    %vm958 = vweird.f32 %v951
    %vm959 = vmor %vm957, %vm958
    %v960 = vsel %vm959, %v951, %v956
    %v961 = vrsqrt.pop %v950
    %v962 = vmul.f32 %v961, %v950
    %v963 = vmul.f32 %v962, %v961
    %v964 = vmul.f32 0.5, %v963
    %v965 = vsub.f32 1.5, %v964
    %v966 = vmul.f32 %v961, %v965
    %vm967 = vweird.f32 %v950
    %vm968 = vweird.f32 %v961
    %vm969 = vmor %vm967, %vm968
    %v970 = vsel %vm969, %v961, %v966
    %v971 = vmul.f32 %v937, %v960
    %v972 = vmul.f32 %v938, %v970
    %v974 = vperm.slane %v927, 0
    %v976 = vmul.f32 %v971, %v974
    %v977 = vmul.f32 %v972, %v974
    %v979 = vperm.slane %v928, 0
    %v981 = vadd.f32 %v976, %v979
    %v982 = vadd.f32 %v977, %v979
    %s983 = scalar_lea.vmem %s4, 32
    %v984 = vld [vmem:[%s983] sm:$0xff]
    %v985 = vld [vmem:[%s983 + $0x8] sm:$0xff]
    %v986 = vld [vmem:[%s983 + $0x10] sm:$0xff]
    %v987 = vld [vmem:[%s983 + $0x18] sm:$0xff]
    %s988 = scalar_lea.vmem %s5, 1
    %v989 = vld [vmem:[%s988] sm:$0x1]
    %v991 = vperm.slane %v989, 0
    %v994 = vsel %vm64, %v981, 0
    %v997 = vsel %vm64, %v982, 0
    %999 = vmatpush.msra.mxu0 0.0
    %1000 = vmatpush.msra.mxu0 0.0
    %1001 = vmatpush.msra.mxu0 0.0
    %1002 = vmatpush.msra.mxu0 0.0
    %1003 = vmatpush.msra.mxu0 0.0
    %1004 = vmatpush.msra.mxu0 0.0
    %1005 = vmatpush.msra.mxu0 0.0
    %1006 = vmatpush.msra.mxu0 0.0
    %1007 = vmatpush.msra.mxu0 0.0
    %1008 = vmatpush.msra.mxu0 0.0
    %1009 = vmatpush.msra.mxu0 0.0
    %1010 = vmatpush.msra.mxu0 0.0
    %1011 = vmatpush.msra.mxu0 %v987
    %1012 = vmatpush.msra.mxu0 %v986
    %1013 = vmatpush.msra.mxu0 %v985
    %1014 = vmatpush.msra.mxu0 %v984
    %1015 = vmatmul.f32.gmra.mxu0 %v994
    %v1016 = vpop.f32.mrf.mxu0
    %v1017 = vadd.f32 %v991, %v1016
    %1018 = vmatmul.f32.gmra.mxu0 %v997
    %v1019 = vpop.f32.mrf.mxu0
    %v1020 = vadd.f32 %v991, %v1019
    %1021 = vdwg.mxu0
    %1023 = vrot.lane.b32.xlu0 %v1017, 96
    %v1024 = vpop.permute.xlu0 %1023
    %v1025 = vsel %vm167, %v1017, 0
    %v1027 = vsel %vm167, %v1024, 0
    %1029 = vmatpush.xpose.msra.mxu0 0.0
    %1030 = vmatpush.xpose.msra.mxu0 0.0
    %1031 = vmatpush.xpose.msra.mxu0 0.0
    %1032 = vmatpush.xpose.msra.mxu0 0.0
    %1033 = vmatpush.xpose.msra.mxu0 0.0
    %1034 = vmatpush.xpose.msra.mxu0 0.0
    %1035 = vmatpush.xpose.msra.mxu0 0.0
    %1036 = vmatpush.xpose.msra.mxu0 0.0
    %1037 = vmatpush.xpose.msra.mxu0 0.0
    %1038 = vmatpush.xpose.msra.mxu0 0.0
    %1039 = vmatpush.xpose.msra.mxu0 0.0
    %1040 = vmatpush.xpose.msra.mxu0 0.0
    %1041 = vmatpush.xpose.msra.mxu0 0.0
    %1042 = vmatpush.xpose.msra.mxu0 0.0
    %1043 = vmatpush.xpose.msra.mxu0 0.0
    %1044 = vmatpush.xpose.msra.mxu0 %v1027
    %1045 = vmatmul.f32.gmra.mxu0 %v1025
    %v1046 = vpop.f32.mrf.mxu0
    %v1047 = vadd.f32 0.0, %v1046
    %1048 = vdwg.mxu0
    %v1049 = vmul.f32 %v1047, 0.35355338
    %v1050 = vadd.f32 %v1049, %v193
    %v1051 = vsel %vm167, %v1050, -inf
    %1052 = vmax.xlane.f32.xlu0 %v1051
    %v1053 = vpop.xlane.xlu0 %1052
    %v1054 = vsub.f32 %v1050, %v1053
    %v1055 = vmul.f32 %v1054, 1.442695
    %v1056 = vpow.pop %v1055
    %v1057 = vsel %vm167, %v1056, 0.0
    %1058 = vadd.xlane.f32.xlu0 %v1057
    %v1059 = vpop.xlane.xlu0 %1058
    %v1060 = vrcp.pop %v1059
    %v1061 = vmul.f32 %v1056, %v1060
    %1062 = vrot.lane.b32.xlu0 %v1017, 64
    %v1063 = vpop.permute.xlu0 %1062
    %v1066 = vsel %vm167, %v1061, 0
    %1068 = vmatpush.msra.mxu0 0.0
    %1069 = vmatpush.msra.mxu0 0.0
    %1070 = vmatpush.msra.mxu0 0.0
    %1071 = vmatpush.msra.mxu0 0.0
    %1072 = vmatpush.msra.mxu0 0.0
    %1073 = vmatpush.msra.mxu0 0.0
    %1074 = vmatpush.msra.mxu0 0.0
    %1075 = vmatpush.msra.mxu0 0.0
    %1076 = vmatpush.msra.mxu0 0.0
    %1077 = vmatpush.msra.mxu0 0.0
    %1078 = vmatpush.msra.mxu0 0.0
    %1079 = vmatpush.msra.mxu0 0.0
    %1080 = vmatpush.msra.mxu0 0.0
    %1081 = vmatpush.msra.mxu0 0.0
    %1082 = vmatpush.msra.mxu0 0.0
    %1083 = vmatpush.msra.mxu0 %v1063
    %1084 = vmatmul.f32.gmra.mxu0 %v1066
    %v1085 = vpop.f32.mrf.mxu0
    %v1086 = vadd.f32 0.0, %v1085
    %1087 = vdwg.mxu0
    %1088 = vrot.lane.b32.xlu0 %v1017, 120
    %v1089 = vpop.permute.xlu0 %1088
    %1090 = vrot.lane.b32.xlu0 %v1017, 88
    %v1091 = vpop.permute.xlu0 %1090
    %v1092 = vsel %vm167, %v1089, 0
    %v1094 = vsel %vm167, %v1091, 0
    %1096 = vmatpush.xpose.msra.mxu0 0.0
    %1097 = vmatpush.xpose.msra.mxu0 0.0
    %1098 = vmatpush.xpose.msra.mxu0 0.0
    %1099 = vmatpush.xpose.msra.mxu0 0.0
    %1100 = vmatpush.xpose.msra.mxu0 0.0
    %1101 = vmatpush.xpose.msra.mxu0 0.0
    %1102 = vmatpush.xpose.msra.mxu0 0.0
    %1103 = vmatpush.xpose.msra.mxu0 0.0
    %1104 = vmatpush.xpose.msra.mxu0 0.0
    %1105 = vmatpush.xpose.msra.mxu0 0.0
    %1106 = vmatpush.xpose.msra.mxu0 0.0
    %1107 = vmatpush.xpose.msra.mxu0 0.0
    %1108 = vmatpush.xpose.msra.mxu0 0.0
    %1109 = vmatpush.xpose.msra.mxu0 0.0
    %1110 = vmatpush.xpose.msra.mxu0 0.0
    %1111 = vmatpush.xpose.msra.mxu0 %v1094
    %1112 = vmatmul.f32.gmra.mxu0 %v1092
    %v1113 = vpop.f32.mrf.mxu0
    %v1114 = vadd.f32 0.0, %v1113
    %1115 = vdwg.mxu0
    %v1116 = vmul.f32 %v1114, 0.35355338
    %v1117 = vadd.f32 %v1116, %v193
    %v1118 = vsel %vm167, %v1117, -inf
    %1119 = vmax.xlane.f32.xlu0 %v1118
    %v1120 = vpop.xlane.xlu0 %1119
    %v1121 = vsub.f32 %v1117, %v1120
    %v1122 = vmul.f32 %v1121, 1.442695
    %v1123 = vpow.pop %v1122
    %v1124 = vsel %vm167, %v1123, 0.0
    %1125 = vadd.xlane.f32.xlu0 %v1124
    %v1126 = vpop.xlane.xlu0 %1125
    %v1127 = vrcp.pop %v1126
    %v1128 = vmul.f32 %v1123, %v1127
    %1129 = vrot.lane.b32.xlu0 %v1017, 56
    %v1130 = vpop.permute.xlu0 %1129
    %v1133 = vsel %vm167, %v1128, 0
    %1135 = vmatpush.msra.mxu0 0.0
    %1136 = vmatpush.msra.mxu0 0.0
    %1137 = vmatpush.msra.mxu0 0.0
    %1138 = vmatpush.msra.mxu0 0.0
    %1139 = vmatpush.msra.mxu0 0.0
    %1140 = vmatpush.msra.mxu0 0.0
    %1141 = vmatpush.msra.mxu0 0.0
    %1142 = vmatpush.msra.mxu0 0.0
    %1143 = vmatpush.msra.mxu0 0.0
    %1144 = vmatpush.msra.mxu0 0.0
    %1145 = vmatpush.msra.mxu0 0.0
    %1146 = vmatpush.msra.mxu0 0.0
    %1147 = vmatpush.msra.mxu0 0.0
    %1148 = vmatpush.msra.mxu0 0.0
    %1149 = vmatpush.msra.mxu0 0.0
    %1150 = vmatpush.msra.mxu0 %v1130
    %1151 = vmatmul.f32.gmra.mxu0 %v1133
    %v1152 = vpop.f32.mrf.mxu0
    %v1153 = vadd.f32 0.0, %v1152
    %1154 = vdwg.mxu0
    %1155 = vrot.lane.b32.xlu0 %v1017, 112
    %v1156 = vpop.permute.xlu0 %1155
    %1157 = vrot.lane.b32.xlu0 %v1017, 80
    %v1158 = vpop.permute.xlu0 %1157
    %v1159 = vsel %vm167, %v1156, 0
    %v1161 = vsel %vm167, %v1158, 0
    %1163 = vmatpush.xpose.msra.mxu0 0.0
    %1164 = vmatpush.xpose.msra.mxu0 0.0
    %1165 = vmatpush.xpose.msra.mxu0 0.0
    %1166 = vmatpush.xpose.msra.mxu0 0.0
    %1167 = vmatpush.xpose.msra.mxu0 0.0
    %1168 = vmatpush.xpose.msra.mxu0 0.0
    %1169 = vmatpush.xpose.msra.mxu0 0.0
    %1170 = vmatpush.xpose.msra.mxu0 0.0
    %1171 = vmatpush.xpose.msra.mxu0 0.0
    %1172 = vmatpush.xpose.msra.mxu0 0.0
    %1173 = vmatpush.xpose.msra.mxu0 0.0
    %1174 = vmatpush.xpose.msra.mxu0 0.0
    %1175 = vmatpush.xpose.msra.mxu0 0.0
    %1176 = vmatpush.xpose.msra.mxu0 0.0
    %1177 = vmatpush.xpose.msra.mxu0 0.0
    %1178 = vmatpush.xpose.msra.mxu0 %v1161
    %1179 = vmatmul.f32.gmra.mxu0 %v1159
    %v1180 = vpop.f32.mrf.mxu0
    %v1181 = vadd.f32 0.0, %v1180
    %1182 = vdwg.mxu0
    %v1183 = vmul.f32 %v1181, 0.35355338
    %v1184 = vadd.f32 %v1183, %v193
    %v1185 = vsel %vm167, %v1184, -inf
    %1186 = vmax.xlane.f32.xlu0 %v1185
    %v1187 = vpop.xlane.xlu0 %1186
    %v1188 = vsub.f32 %v1184, %v1187
    %v1189 = vmul.f32 %v1188, 1.442695
    %v1190 = vpow.pop %v1189
    %v1191 = vsel %vm167, %v1190, 0.0
    %1192 = vadd.xlane.f32.xlu0 %v1191
    %v1193 = vpop.xlane.xlu0 %1192
    %v1194 = vrcp.pop %v1193
    %v1195 = vmul.f32 %v1190, %v1194
    %1196 = vrot.lane.b32.xlu0 %v1017, 48
    %v1197 = vpop.permute.xlu0 %1196
    %v1200 = vsel %vm167, %v1195, 0
    %1202 = vmatpush.msra.mxu0 0.0
    %1203 = vmatpush.msra.mxu0 0.0
    %1204 = vmatpush.msra.mxu0 0.0
    %1205 = vmatpush.msra.mxu0 0.0
    %1206 = vmatpush.msra.mxu0 0.0
    %1207 = vmatpush.msra.mxu0 0.0
    %1208 = vmatpush.msra.mxu0 0.0
    %1209 = vmatpush.msra.mxu0 0.0
    %1210 = vmatpush.msra.mxu0 0.0
    %1211 = vmatpush.msra.mxu0 0.0
    %1212 = vmatpush.msra.mxu0 0.0
    %1213 = vmatpush.msra.mxu0 0.0
    %1214 = vmatpush.msra.mxu0 0.0
    %1215 = vmatpush.msra.mxu0 0.0
    %1216 = vmatpush.msra.mxu0 0.0
    %1217 = vmatpush.msra.mxu0 %v1197
    %1218 = vmatmul.f32.gmra.mxu0 %v1200
    %v1219 = vpop.f32.mrf.mxu0
    %v1220 = vadd.f32 0.0, %v1219
    %1221 = vdwg.mxu0
    %1222 = vrot.lane.b32.xlu0 %v1017, 104
    %v1223 = vpop.permute.xlu0 %1222
    %1224 = vrot.lane.b32.xlu0 %v1017, 72
    %v1225 = vpop.permute.xlu0 %1224
    %v1226 = vsel %vm167, %v1223, 0
    %v1228 = vsel %vm167, %v1225, 0
    %1230 = vmatpush.xpose.msra.mxu0 0.0
    %1231 = vmatpush.xpose.msra.mxu0 0.0
    %1232 = vmatpush.xpose.msra.mxu0 0.0
    %1233 = vmatpush.xpose.msra.mxu0 0.0
    %1234 = vmatpush.xpose.msra.mxu0 0.0
    %1235 = vmatpush.xpose.msra.mxu0 0.0
    %1236 = vmatpush.xpose.msra.mxu0 0.0
    %1237 = vmatpush.xpose.msra.mxu0 0.0
    %1238 = vmatpush.xpose.msra.mxu0 0.0
    %1239 = vmatpush.xpose.msra.mxu0 0.0
    %1240 = vmatpush.xpose.msra.mxu0 0.0
    %1241 = vmatpush.xpose.msra.mxu0 0.0
    %1242 = vmatpush.xpose.msra.mxu0 0.0
    %1243 = vmatpush.xpose.msra.mxu0 0.0
    %1244 = vmatpush.xpose.msra.mxu0 0.0
    %1245 = vmatpush.xpose.msra.mxu0 %v1228
    %1246 = vmatmul.f32.gmra.mxu0 %v1226
    %v1247 = vpop.f32.mrf.mxu0
    %v1248 = vadd.f32 0.0, %v1247
    %1249 = vdwg.mxu0
    %v1250 = vmul.f32 %v1248, 0.35355338
    %v1251 = vadd.f32 %v1250, %v193
    %v1252 = vsel %vm167, %v1251, -inf
    %1253 = vmax.xlane.f32.xlu0 %v1252
    %v1254 = vpop.xlane.xlu0 %1253
    %v1255 = vsub.f32 %v1251, %v1254
    %v1256 = vmul.f32 %v1255, 1.442695
    %v1257 = vpow.pop %v1256
    %v1258 = vsel %vm167, %v1257, 0.0
    %1259 = vadd.xlane.f32.xlu0 %v1258
    %v1260 = vpop.xlane.xlu0 %1259
    %v1261 = vrcp.pop %v1260
    %v1262 = vmul.f32 %v1257, %v1261
    %1263 = vrot.lane.b32.xlu0 %v1017, 40
    %v1264 = vpop.permute.xlu0 %1263
    %v1267 = vsel %vm167, %v1262, 0
    %1269 = vmatpush.msra.mxu0 0.0
    %1270 = vmatpush.msra.mxu0 0.0
    %1271 = vmatpush.msra.mxu0 0.0
    %1272 = vmatpush.msra.mxu0 0.0
    %1273 = vmatpush.msra.mxu0 0.0
    %1274 = vmatpush.msra.mxu0 0.0
    %1275 = vmatpush.msra.mxu0 0.0
    %1276 = vmatpush.msra.mxu0 0.0
    %1277 = vmatpush.msra.mxu0 0.0
    %1278 = vmatpush.msra.mxu0 0.0
    %1279 = vmatpush.msra.mxu0 0.0
    %1280 = vmatpush.msra.mxu0 0.0
    %1281 = vmatpush.msra.mxu0 0.0
    %1282 = vmatpush.msra.mxu0 0.0
    %1283 = vmatpush.msra.mxu0 0.0
    %1284 = vmatpush.msra.mxu0 %v1264
    %1285 = vmatmul.f32.gmra.mxu0 %v1267
    %v1286 = vpop.f32.mrf.mxu0
    %v1287 = vadd.f32 0.0, %v1286
    %1288 = vdwg.mxu0
    %1290 = vrot.lane.b32.xlu0 %v1153, 8
    %v1291 = vpop.permute.xlu0 %1290
    %1294 = vrot.lane.b32.xlu0 %v1220, 16
    %v1295 = vpop.permute.xlu0 %1294
    %1298 = vrot.lane.b32.xlu0 %v1287, 24
    %v1299 = vpop.permute.xlu0 %1298
    %v1301 = vsel %vm167, %v1086, %v1291
    %v1302 = vsel %vm446, %v1301, %v1295
    %v1303 = vsel %vm448, %v1302, %v1299
    %1305 = vrot.lane.b32.xlu0 %v1020, 96
    %v1306 = vpop.permute.xlu0 %1305
    %v1307 = vsel %vm167, %v1020, 0
    %v1309 = vsel %vm167, %v1306, 0
    %1311 = vmatpush.xpose.msra.mxu0 0.0
    %1312 = vmatpush.xpose.msra.mxu0 0.0
    %1313 = vmatpush.xpose.msra.mxu0 0.0
    %1314 = vmatpush.xpose.msra.mxu0 0.0
    %1315 = vmatpush.xpose.msra.mxu0 0.0
    %1316 = vmatpush.xpose.msra.mxu0 0.0
    %1317 = vmatpush.xpose.msra.mxu0 0.0
    %1318 = vmatpush.xpose.msra.mxu0 0.0
    %1319 = vmatpush.xpose.msra.mxu0 0.0
    %1320 = vmatpush.xpose.msra.mxu0 0.0
    %1321 = vmatpush.xpose.msra.mxu0 0.0
    %1322 = vmatpush.xpose.msra.mxu0 0.0
    %1323 = vmatpush.xpose.msra.mxu0 0.0
    %1324 = vmatpush.xpose.msra.mxu0 0.0
    %1325 = vmatpush.xpose.msra.mxu0 0.0
    %1326 = vmatpush.xpose.msra.mxu0 %v1309
    %1327 = vmatmul.f32.gmra.mxu0 %v1307
    %v1328 = vpop.f32.mrf.mxu0
    %v1329 = vadd.f32 0.0, %v1328
    %1330 = vdwg.mxu0
    %v1331 = vmul.f32 %v1329, 0.35355338
    %v1332 = vadd.f32 %v1331, %v478
    %v1333 = vsel %vm167, %v1332, -inf
    %1334 = vmax.xlane.f32.xlu0 %v1333
    %v1335 = vpop.xlane.xlu0 %1334
    %v1336 = vsub.f32 %v1332, %v1335
    %v1337 = vmul.f32 %v1336, 1.442695
    %v1338 = vpow.pop %v1337
    %v1339 = vsel %vm167, %v1338, 0.0
    %1340 = vadd.xlane.f32.xlu0 %v1339
    %v1341 = vpop.xlane.xlu0 %1340
    %v1342 = vrcp.pop %v1341
    %v1343 = vmul.f32 %v1338, %v1342
    %1344 = vrot.lane.b32.xlu0 %v1020, 64
    %v1345 = vpop.permute.xlu0 %1344
    %v1348 = vsel %vm167, %v1343, 0
    %1350 = vmatpush.msra.mxu0 0.0
    %1351 = vmatpush.msra.mxu0 0.0
    %1352 = vmatpush.msra.mxu0 0.0
    %1353 = vmatpush.msra.mxu0 0.0
    %1354 = vmatpush.msra.mxu0 0.0
    %1355 = vmatpush.msra.mxu0 0.0
    %1356 = vmatpush.msra.mxu0 0.0
    %1357 = vmatpush.msra.mxu0 0.0
    %1358 = vmatpush.msra.mxu0 0.0
    %1359 = vmatpush.msra.mxu0 0.0
    %1360 = vmatpush.msra.mxu0 0.0
    %1361 = vmatpush.msra.mxu0 0.0
    %1362 = vmatpush.msra.mxu0 0.0
    %1363 = vmatpush.msra.mxu0 0.0
    %1364 = vmatpush.msra.mxu0 0.0
    %1365 = vmatpush.msra.mxu0 %v1345
    %1366 = vmatmul.f32.gmra.mxu0 %v1348
    %v1367 = vpop.f32.mrf.mxu0
    %v1368 = vadd.f32 0.0, %v1367
    %1369 = vdwg.mxu0
    %1370 = vrot.lane.b32.xlu0 %v1020, 120
    %v1371 = vpop.permute.xlu0 %1370
    %1372 = vrot.lane.b32.xlu0 %v1020, 88
    %v1373 = vpop.permute.xlu0 %1372
    %v1374 = vsel %vm167, %v1371, 0
    %v1376 = vsel %vm167, %v1373, 0
    %1378 = vmatpush.xpose.msra.mxu0 0.0
    %1379 = vmatpush.xpose.msra.mxu0 0.0
    %1380 = vmatpush.xpose.msra.mxu0 0.0
    %1381 = vmatpush.xpose.msra.mxu0 0.0
    %1382 = vmatpush.xpose.msra.mxu0 0.0
    %1383 = vmatpush.xpose.msra.mxu0 0.0
    %1384 = vmatpush.xpose.msra.mxu0 0.0
    %1385 = vmatpush.xpose.msra.mxu0 0.0
    %1386 = vmatpush.xpose.msra.mxu0 0.0
    %1387 = vmatpush.xpose.msra.mxu0 0.0
    %1388 = vmatpush.xpose.msra.mxu0 0.0
    %1389 = vmatpush.xpose.msra.mxu0 0.0
    %1390 = vmatpush.xpose.msra.mxu0 0.0
    %1391 = vmatpush.xpose.msra.mxu0 0.0
    %1392 = vmatpush.xpose.msra.mxu0 0.0
    %1393 = vmatpush.xpose.msra.mxu0 %v1376
    %1394 = vmatmul.f32.gmra.mxu0 %v1374
    %v1395 = vpop.f32.mrf.mxu0
    %v1396 = vadd.f32 0.0, %v1395
    %1397 = vdwg.mxu0
    %v1398 = vmul.f32 %v1396, 0.35355338
    %v1399 = vadd.f32 %v1398, %v478
    %v1400 = vsel %vm167, %v1399, -inf
    %1401 = vmax.xlane.f32.xlu0 %v1400
    %v1402 = vpop.xlane.xlu0 %1401
    %v1403 = vsub.f32 %v1399, %v1402
    %v1404 = vmul.f32 %v1403, 1.442695
    %v1405 = vpow.pop %v1404
    %v1406 = vsel %vm167, %v1405, 0.0
    %1407 = vadd.xlane.f32.xlu0 %v1406
    %v1408 = vpop.xlane.xlu0 %1407
    %v1409 = vrcp.pop %v1408
    %v1410 = vmul.f32 %v1405, %v1409
    %1411 = vrot.lane.b32.xlu0 %v1020, 56
    %v1412 = vpop.permute.xlu0 %1411
    %v1415 = vsel %vm167, %v1410, 0
    %1417 = vmatpush.msra.mxu0 0.0
    %1418 = vmatpush.msra.mxu0 0.0
    %1419 = vmatpush.msra.mxu0 0.0
    %1420 = vmatpush.msra.mxu0 0.0
    %1421 = vmatpush.msra.mxu0 0.0
    %1422 = vmatpush.msra.mxu0 0.0
    %1423 = vmatpush.msra.mxu0 0.0
    %1424 = vmatpush.msra.mxu0 0.0
    %1425 = vmatpush.msra.mxu0 0.0
    %1426 = vmatpush.msra.mxu0 0.0
    %1427 = vmatpush.msra.mxu0 0.0
    %1428 = vmatpush.msra.mxu0 0.0
    %1429 = vmatpush.msra.mxu0 0.0
    %1430 = vmatpush.msra.mxu0 0.0
    %1431 = vmatpush.msra.mxu0 0.0
    %1432 = vmatpush.msra.mxu0 %v1412
    %1433 = vmatmul.f32.gmra.mxu0 %v1415
    %v1434 = vpop.f32.mrf.mxu0
    %v1435 = vadd.f32 0.0, %v1434
    %1436 = vdwg.mxu0
    %1437 = vrot.lane.b32.xlu0 %v1020, 112
    %v1438 = vpop.permute.xlu0 %1437
    %1439 = vrot.lane.b32.xlu0 %v1020, 80
    %v1440 = vpop.permute.xlu0 %1439
    %v1441 = vsel %vm167, %v1438, 0
    %v1443 = vsel %vm167, %v1440, 0
    %1445 = vmatpush.xpose.msra.mxu0 0.0
    %1446 = vmatpush.xpose.msra.mxu0 0.0
    %1447 = vmatpush.xpose.msra.mxu0 0.0
    %1448 = vmatpush.xpose.msra.mxu0 0.0
    %1449 = vmatpush.xpose.msra.mxu0 0.0
    %1450 = vmatpush.xpose.msra.mxu0 0.0
    %1451 = vmatpush.xpose.msra.mxu0 0.0
    %1452 = vmatpush.xpose.msra.mxu0 0.0
    %1453 = vmatpush.xpose.msra.mxu0 0.0
    %1454 = vmatpush.xpose.msra.mxu0 0.0
    %1455 = vmatpush.xpose.msra.mxu0 0.0
    %1456 = vmatpush.xpose.msra.mxu0 0.0
    %1457 = vmatpush.xpose.msra.mxu0 0.0
    %1458 = vmatpush.xpose.msra.mxu0 0.0
    %1459 = vmatpush.xpose.msra.mxu0 0.0
    %1460 = vmatpush.xpose.msra.mxu0 %v1443
    %1461 = vmatmul.f32.gmra.mxu0 %v1441
    %v1462 = vpop.f32.mrf.mxu0
    %v1463 = vadd.f32 0.0, %v1462
    %1464 = vdwg.mxu0
    %v1465 = vmul.f32 %v1463, 0.35355338
    %v1466 = vadd.f32 %v1465, %v478
    %v1467 = vsel %vm167, %v1466, -inf
    %1468 = vmax.xlane.f32.xlu0 %v1467
    %v1469 = vpop.xlane.xlu0 %1468
    %v1470 = vsub.f32 %v1466, %v1469
    %v1471 = vmul.f32 %v1470, 1.442695
    %v1472 = vpow.pop %v1471
    %v1473 = vsel %vm167, %v1472, 0.0
    %1474 = vadd.xlane.f32.xlu0 %v1473
    %v1475 = vpop.xlane.xlu0 %1474
    %v1476 = vrcp.pop %v1475
    %v1477 = vmul.f32 %v1472, %v1476
    %1478 = vrot.lane.b32.xlu0 %v1020, 48
    %v1479 = vpop.permute.xlu0 %1478
    %v1482 = vsel %vm167, %v1477, 0
    %1484 = vmatpush.msra.mxu0 0.0
    %1485 = vmatpush.msra.mxu0 0.0
    %1486 = vmatpush.msra.mxu0 0.0
    %1487 = vmatpush.msra.mxu0 0.0
    %1488 = vmatpush.msra.mxu0 0.0
    %1489 = vmatpush.msra.mxu0 0.0
    %1490 = vmatpush.msra.mxu0 0.0
    %1491 = vmatpush.msra.mxu0 0.0
    %1492 = vmatpush.msra.mxu0 0.0
    %1493 = vmatpush.msra.mxu0 0.0
    %1494 = vmatpush.msra.mxu0 0.0
    %1495 = vmatpush.msra.mxu0 0.0
    %1496 = vmatpush.msra.mxu0 0.0
    %1497 = vmatpush.msra.mxu0 0.0
    %1498 = vmatpush.msra.mxu0 0.0
    %1499 = vmatpush.msra.mxu0 %v1479
    %1500 = vmatmul.f32.gmra.mxu0 %v1482
    %v1501 = vpop.f32.mrf.mxu0
    %v1502 = vadd.f32 0.0, %v1501
    %1503 = vdwg.mxu0
    %1504 = vrot.lane.b32.xlu0 %v1020, 104
    %v1505 = vpop.permute.xlu0 %1504
    %1506 = vrot.lane.b32.xlu0 %v1020, 72
    %v1507 = vpop.permute.xlu0 %1506
    %v1508 = vsel %vm167, %v1505, 0
    %v1510 = vsel %vm167, %v1507, 0
    %1512 = vmatpush.xpose.msra.mxu0 0.0
    %1513 = vmatpush.xpose.msra.mxu0 0.0
    %1514 = vmatpush.xpose.msra.mxu0 0.0
    %1515 = vmatpush.xpose.msra.mxu0 0.0
    %1516 = vmatpush.xpose.msra.mxu0 0.0
    %1517 = vmatpush.xpose.msra.mxu0 0.0
    %1518 = vmatpush.xpose.msra.mxu0 0.0
    %1519 = vmatpush.xpose.msra.mxu0 0.0
    %1520 = vmatpush.xpose.msra.mxu0 0.0
    %1521 = vmatpush.xpose.msra.mxu0 0.0
    %1522 = vmatpush.xpose.msra.mxu0 0.0
    %1523 = vmatpush.xpose.msra.mxu0 0.0
    %1524 = vmatpush.xpose.msra.mxu0 0.0
    %1525 = vmatpush.xpose.msra.mxu0 0.0
    %1526 = vmatpush.xpose.msra.mxu0 0.0
    %1527 = vmatpush.xpose.msra.mxu0 %v1510
    %1528 = vmatmul.f32.gmra.mxu0 %v1508
    %v1529 = vpop.f32.mrf.mxu0
    %v1530 = vadd.f32 0.0, %v1529
    %1531 = vdwg.mxu0
    %v1532 = vmul.f32 %v1530, 0.35355338
    %v1533 = vadd.f32 %v1532, %v478
    %v1534 = vsel %vm167, %v1533, -inf
    %1535 = vmax.xlane.f32.xlu0 %v1534
    %v1536 = vpop.xlane.xlu0 %1535
    %v1537 = vsub.f32 %v1533, %v1536
    %v1538 = vmul.f32 %v1537, 1.442695
    %v1539 = vpow.pop %v1538
    %v1540 = vsel %vm167, %v1539, 0.0
    %1541 = vadd.xlane.f32.xlu0 %v1540
    %v1542 = vpop.xlane.xlu0 %1541
    %v1543 = vrcp.pop %v1542
    %v1544 = vmul.f32 %v1539, %v1543
    %1545 = vrot.lane.b32.xlu0 %v1020, 40
    %v1546 = vpop.permute.xlu0 %1545
    %v1549 = vsel %vm167, %v1544, 0
    %1551 = vmatpush.msra.mxu0 0.0
    %1552 = vmatpush.msra.mxu0 0.0
    %1553 = vmatpush.msra.mxu0 0.0
    %1554 = vmatpush.msra.mxu0 0.0
    %1555 = vmatpush.msra.mxu0 0.0
    %1556 = vmatpush.msra.mxu0 0.0
    %1557 = vmatpush.msra.mxu0 0.0
    %1558 = vmatpush.msra.mxu0 0.0
    %1559 = vmatpush.msra.mxu0 0.0
    %1560 = vmatpush.msra.mxu0 0.0
    %1561 = vmatpush.msra.mxu0 0.0
    %1562 = vmatpush.msra.mxu0 0.0
    %1563 = vmatpush.msra.mxu0 0.0
    %1564 = vmatpush.msra.mxu0 0.0
    %1565 = vmatpush.msra.mxu0 0.0
    %1566 = vmatpush.msra.mxu0 %v1546
    %1567 = vmatmul.f32.gmra.mxu0 %v1549
    %v1568 = vpop.f32.mrf.mxu0
    %v1569 = vadd.f32 0.0, %v1568
    %1570 = vdwg.mxu0
    %1572 = vrot.lane.b32.xlu0 %v1435, 8
    %v1573 = vpop.permute.xlu0 %1572
    %1576 = vrot.lane.b32.xlu0 %v1502, 16
    %v1577 = vpop.permute.xlu0 %1576
    %1580 = vrot.lane.b32.xlu0 %v1569, 24
    %v1581 = vpop.permute.xlu0 %1580
    %v1583 = vsel %vm167, %v1368, %v1573
    %v1584 = vsel %vm446, %v1583, %v1577
    %v1585 = vsel %vm448, %v1584, %v1581
    %s1586 = scalar_lea.vmem %s6, 32
    %v1587 = vld [vmem:[%s1586] sm:$0xff]
    %v1588 = vld [vmem:[%s1586 + $0x8] sm:$0xff]
    %v1589 = vld [vmem:[%s1586 + $0x10] sm:$0xff]
    %v1590 = vld [vmem:[%s1586 + $0x18] sm:$0xff]
    %s1591 = scalar_lea.vmem %s7, 1
    %v1592 = vld [vmem:[%s1591] sm:$0x1]
    %v1594 = vperm.slane %v1592, 0
    %v1597 = vsel %vm64, %v1303, 0
    %v1600 = vsel %vm64, %v1585, 0
    %1602 = vmatpush.msra.mxu0 0.0
    %1603 = vmatpush.msra.mxu0 0.0
    %1604 = vmatpush.msra.mxu0 0.0
    %1605 = vmatpush.msra.mxu0 0.0
    %1606 = vmatpush.msra.mxu0 0.0
    %1607 = vmatpush.msra.mxu0 0.0
    %1608 = vmatpush.msra.mxu0 0.0
    %1609 = vmatpush.msra.mxu0 0.0
    %1610 = vmatpush.msra.mxu0 0.0
    %1611 = vmatpush.msra.mxu0 0.0
    %1612 = vmatpush.msra.mxu0 0.0
    %1613 = vmatpush.msra.mxu0 0.0
    %1614 = vmatpush.msra.mxu0 %v1590
    %1615 = vmatpush.msra.mxu0 %v1589
    %1616 = vmatpush.msra.mxu0 %v1588
    %1617 = vmatpush.msra.mxu0 %v1587
    %1618 = vmatmul.f32.gmra.mxu0 %v1597
    %v1619 = vpop.f32.mrf.mxu0
    %v1620 = vadd.f32 %v1594, %v1619
    %1621 = vmatmul.f32.gmra.mxu0 %v1600
    %v1622 = vpop.f32.mrf.mxu0
    %v1623 = vadd.f32 %v1594, %v1622
    %1624 = vdwg.mxu0
    %v1625 = vadd.f32 %v1620, %v981
    %v1626 = vadd.f32 %v1623, %v982
    %s1627 = scalar_lea.vmem %s8, 1
    %v1628 = vld [vmem:[%s1627] sm:$0x1]
    %s1629 = scalar_lea.vmem %s9, 1
    %v1630 = vld [vmem:[%s1629] sm:$0x1]
    %v1631 = vsel %vm64, %v1625, 0.0
    %1632 = vadd.xlane.f32.xlu0 %v1631
    %v1633 = vpop.xlane.xlu0 %1632
    %v1634 = vsel %vm64, %v1626, 0.0
    %1635 = vadd.xlane.f32.xlu0 %v1634
    %v1636 = vpop.xlane.xlu0 %1635
    %v1637 = vmul.f32 %v1633, %v77
    %v1638 = vmul.f32 %v1636, %v77
    %v1639 = vsub.f32 %v1625, %v1637
    %v1640 = vsub.f32 %v1626, %v1638
    %v1641 = vmul.f32 %v1639, %v1639
    %v1642 = vmul.f32 %v1640, %v1640
    %v1643 = vsel %vm64, %v1641, 0.0
    %1644 = vadd.xlane.f32.xlu0 %v1643
    %v1645 = vpop.xlane.xlu0 %1644
    %v1646 = vsel %vm64, %v1642, 0.0
    %1647 = vadd.xlane.f32.xlu0 %v1646
    %v1648 = vpop.xlane.xlu0 %1647
    %v1649 = vmul.f32 %v1645, %v77
    %v1650 = vmul.f32 %v1648, %v77
    %v1651 = vadd.f32 %v1649, 1e-05
    %v1652 = vadd.f32 %v1650, 1e-05
    %v1653 = vrsqrt.pop %v1651
    %v1654 = vmul.f32 %v1653, %v1651
    %v1655 = vmul.f32 %v1654, %v1653
    %v1656 = vmul.f32 0.5, %v1655
    %v1657 = vsub.f32 1.5, %v1656
    %v1658 = vmul.f32 %v1653, %v1657
    %vm1659 = vweird.f32 %v1651
    %vm1660 = vweird.f32 %v1653
    %vm1661 = vmor %vm1659, %vm1660
    %v1662 = vsel %vm1661, %v1653, %v1658
    %v1663 = vrsqrt.pop %v1652
    %v1664 = vmul.f32 %v1663, %v1652
    %v1665 = vmul.f32 %v1664, %v1663
    %v1666 = vmul.f32 0.5, %v1665
    %v1667 = vsub.f32 1.5, %v1666
    %v1668 = vmul.f32 %v1663, %v1667
    %vm1669 = vweird.f32 %v1652
    %vm1670 = vweird.f32 %v1663
    %vm1671 = vmor %vm1669, %vm1670
    %v1672 = vsel %vm1671, %v1663, %v1668
    %v1673 = vmul.f32 %v1639, %v1662
    %v1674 = vmul.f32 %v1640, %v1672
    %v1676 = vperm.slane %v1628, 0
    %v1678 = vmul.f32 %v1673, %v1676
    %v1679 = vmul.f32 %v1674, %v1676
    %v1681 = vperm.slane %v1630, 0
    %v1683 = vadd.f32 %v1678, %v1681
    %v1684 = vadd.f32 %v1679, %v1681
    %s1685 = scalar_lea.vmem %s10, 32
    %v1686 = vld [vmem:[%s1685] sm:$0xff]
    %v1687 = vld [vmem:[%s1685 + $0x8] sm:$0xff]
    %v1688 = vld [vmem:[%s1685 + $0x10] sm:$0xff]
    %v1689 = vld [vmem:[%s1685 + $0x18] sm:$0xff]
    %s1690 = scalar_lea.vmem %s11, 1
    %v1691 = vld [vmem:[%s1690] sm:$0x1]
    %v1693 = vperm.slane %v1691, 0
    %v1696 = vsel %vm64, %v1683, 0
    %v1699 = vsel %vm64, %v1684, 0
    %1701 = vmatpush.msra.mxu0 0.0
    %1702 = vmatpush.msra.mxu0 0.0
    %1703 = vmatpush.msra.mxu0 0.0
    %1704 = vmatpush.msra.mxu0 0.0
    %1705 = vmatpush.msra.mxu0 0.0
    %1706 = vmatpush.msra.mxu0 0.0
    %1707 = vmatpush.msra.mxu0 0.0
    %1708 = vmatpush.msra.mxu0 0.0
    %1709 = vmatpush.msra.mxu0 0.0
    %1710 = vmatpush.msra.mxu0 0.0
    %1711 = vmatpush.msra.mxu0 0.0
    %1712 = vmatpush.msra.mxu0 0.0
    %1713 = vmatpush.msra.mxu0 %v1689
    %1714 = vmatpush.msra.mxu0 %v1688
    %1715 = vmatpush.msra.mxu0 %v1687
    %1716 = vmatpush.msra.mxu0 %v1686
    %1717 = vmatmul.f32.gmra.mxu0 %v1696
    %v1718 = vpop.f32.mrf.mxu0
    %v1719 = vadd.f32 %v1693, %v1718
    %1720 = vmatmul.f32.gmra.mxu0 %v1699
    %v1721 = vpop.f32.mrf.mxu0
    %v1722 = vadd.f32 %v1693, %v1721
    %1723 = vdwg.mxu0
    %v1724 = vmul.f32 %v1719, %v1719
    %v1725 = vmul.f32 %v1722, %v1722
    %v1726 = vmul.f32 %v1719, %v1724
    %v1727 = vmul.f32 %v1722, %v1725
    %v1728 = vmul.f32 %v1726, 0.044715
    %v1729 = vmul.f32 %v1727, 0.044715
    %v1730 = vadd.f32 %v1719, %v1728
    %v1731 = vadd.f32 %v1722, %v1729
    %v1732 = vmul.f32 %v1730, 0.7978846
    %v1733 = vmul.f32 %v1731, 0.7978846
    %v1734 = vtanh.pop %v1732
    %v1735 = vtanh.pop %v1733
    %v1736 = vadd.f32 %v1734, 1.0
    %v1737 = vadd.f32 %v1735, 1.0
    %v1738 = vmul.f32 %v1736, 0.5
    %v1739 = vmul.f32 %v1737, 0.5
    %v1740 = vmul.f32 %v1719, %v1738
    %v1741 = vmul.f32 %v1722, %v1739
    %s1742 = scalar_lea.vmem %s12, 64
    %v1743 = vld [vmem:[%s1742] sm:$0xff]
    %v1744 = vld [vmem:[%s1742 + $0x8] sm:$0xff]
    %v1745 = vld [vmem:[%s1742 + $0x10] sm:$0xff]
    %v1746 = vld [vmem:[%s1742 + $0x18] sm:$0xff]
    %v1747 = vld [vmem:[%s1742 + $0x20] sm:$0xff]
    %v1748 = vld [vmem:[%s1742 + $0x28] sm:$0xff]
    %v1749 = vld [vmem:[%s1742 + $0x30] sm:$0xff]
    %v1750 = vld [vmem:[%s1742 + $0x38] sm:$0xff]
    %s1751 = scalar_lea.vmem %s13, 1
    %v1752 = vld [vmem:[%s1751] sm:$0x1]
    %v1754 = vperm.slane %v1752, 0
    %v1757 = vsel %vm895, %v1740, 0
    %v1760 = vsel %vm895, %v1741, 0
    %1762 = vmatpush.msra.mxu0 0.0
    %1763 = vmatpush.msra.mxu0 0.0
    %1764 = vmatpush.msra.mxu0 0.0
    %1765 = vmatpush.msra.mxu0 0.0
    %1766 = vmatpush.msra.mxu0 0.0
    %1767 = vmatpush.msra.mxu0 0.0
    %1768 = vmatpush.msra.mxu0 0.0
    %1769 = vmatpush.msra.mxu0 0.0
    %1770 = vmatpush.msra.mxu0 %v1750
    %1771 = vmatpush.msra.mxu0 %v1749
    %1772 = vmatpush.msra.mxu0 %v1748
    %1773 = vmatpush.msra.mxu0 %v1747
    %1774 = vmatpush.msra.mxu0 %v1746
    %1775 = vmatpush.msra.mxu0 %v1745
    %1776 = vmatpush.msra.mxu0 %v1744
    %1777 = vmatpush.msra.mxu0 %v1743
    %1778 = vmatmul.f32.gmra.mxu0 %v1757
    %v1779 = vpop.f32.mrf.mxu0
    %v1780 = vadd.f32 %v1754, %v1779
    %1781 = vmatmul.f32.gmra.mxu0 %v1760
    %v1782 = vpop.f32.mrf.mxu0
    %v1783 = vadd.f32 %v1754, %v1782
    %1784 = vdwg.mxu0
    %v1785 = vadd.f32 %v1780, %v1683
    %v1786 = vadd.f32 %v1783, %v1684
    %s1787 = scalar_lea.vmem %s14, 1
    %v1788 = vld [vmem:[%s1787] sm:$0x1]
    %s1789 = scalar_lea.vmem %s15, 1
    %v1790 = vld [vmem:[%s1789] sm:$0x1]
    %v1791 = vsel %vm64, %v1785, 0.0
    %1792 = vadd.xlane.f32.xlu0 %v1791
    %v1793 = vpop.xlane.xlu0 %1792
    %v1794 = vsel %vm64, %v1786, 0.0
    %1795 = vadd.xlane.f32.xlu0 %v1794
    %v1796 = vpop.xlane.xlu0 %1795
    %v1797 = vmul.f32 %v1793, %v77
    %v1798 = vmul.f32 %v1796, %v77
    %v1799 = vsub.f32 %v1785, %v1797
    %v1800 = vsub.f32 %v1786, %v1798
    %v1801 = vmul.f32 %v1799, %v1799
    %v1802 = vmul.f32 %v1800, %v1800
    %v1803 = vsel %vm64, %v1801, 0.0
    %1804 = vadd.xlane.f32.xlu0 %v1803
    %v1805 = vpop.xlane.xlu0 %1804
    %v1806 = vsel %vm64, %v1802, 0.0
    %1807 = vadd.xlane.f32.xlu0 %v1806
    %v1808 = vpop.xlane.xlu0 %1807
    %v1809 = vmul.f32 %v1805, %v77
    %v1810 = vmul.f32 %v1808, %v77
    %v1811 = vadd.f32 %v1809, 1e-05
    %v1812 = vadd.f32 %v1810, 1e-05
    %v1813 = vrsqrt.pop %v1811
    %v1814 = vmul.f32 %v1813, %v1811
    %v1815 = vmul.f32 %v1814, %v1813
    %v1816 = vmul.f32 0.5, %v1815
    %v1817 = vsub.f32 1.5, %v1816
    %v1818 = vmul.f32 %v1813, %v1817
    %vm1819 = vweird.f32 %v1811
    %vm1820 = vweird.f32 %v1813
    %vm1821 = vmor %vm1819, %vm1820
    %v1822 = vsel %vm1821, %v1813, %v1818
    %v1823 = vrsqrt.pop %v1812
    %v1824 = vmul.f32 %v1823, %v1812
    %v1825 = vmul.f32 %v1824, %v1823
    %v1826 = vmul.f32 0.5, %v1825
    %v1827 = vsub.f32 1.5, %v1826
    %v1828 = vmul.f32 %v1823, %v1827
    %vm1829 = vweird.f32 %v1812
    %vm1830 = vweird.f32 %v1823
    %vm1831 = vmor %vm1829, %vm1830
    %v1832 = vsel %vm1831, %v1823, %v1828
    %v1833 = vmul.f32 %v1799, %v1822
    %v1834 = vmul.f32 %v1800, %v1832
    %v1836 = vperm.slane %v1788, 0
    %v1838 = vmul.f32 %v1833, %v1836
    %v1839 = vmul.f32 %v1834, %v1836
    %v1841 = vperm.slane %v1790, 0
    %v1843 = vadd.f32 %v1838, %v1841
    %v1844 = vadd.f32 %v1839, %v1841
    %v1846 = vrot.slane %v1844, 7
    %vm1848 = vcmask 1040384
    %v1849 = vsel %vm1848, %v1843, %v1846
    %v1850 = vld [vmem:[%s16] sm:$0xff]
    %v1851 = vld [vmem:[%s16 + $0x8] sm:$0xff]
    %v1852 = vld [vmem:[%s16 + $0x10] sm:$0xff]
    %v1853 = vld [vmem:[%s16 + $0x18] sm:$0xff]
    %v1854 = vld [vmem:[%s17] sm:$0x1]
    %v1856 = vperm.slane %v1854, 0
    %v1859 = vsel %vm64, %v1849, 0
    %1861 = vmatpush.msra.mxu0 0.0
    %1862 = vmatpush.msra.mxu0 0.0
    %1863 = vmatpush.msra.mxu0 0.0
    %1864 = vmatpush.msra.mxu0 0.0
    %1865 = vmatpush.msra.mxu0 0.0
    %1866 = vmatpush.msra.mxu0 0.0
    %1867 = vmatpush.msra.mxu0 0.0
    %1868 = vmatpush.msra.mxu0 0.0
    %1869 = vmatpush.msra.mxu0 0.0
    %1870 = vmatpush.msra.mxu0 0.0
    %1871 = vmatpush.msra.mxu0 0.0
    %1872 = vmatpush.msra.mxu0 0.0
    %1873 = vmatpush.msra.mxu0 %v1853
    %1874 = vmatpush.msra.mxu0 %v1852
    %1875 = vmatpush.msra.mxu0 %v1851
    %1876 = vmatpush.msra.mxu0 %v1850
    %1877 = vmatmul.f32.gmra.mxu0 %v1859
    %v1878 = vpop.f32.mrf.mxu0
    %v1879 = vadd.f32 %v1856, %v1878
    %1880 = vdwg.mxu0
    %1881 = vst [vmem:[#allocation2] sm:$0x3] %v1879
    // Predicated region
    $region74: #{bertweet_classifier_forward.1} parent=1 // pred_check
      _
    $region75: #{bertweet_classifier_forward.1} parent=1 // pred_check_branch
      %1883 = sbr.rel (0) target = $region77
    $region76: #{bertweet_classifier_forward.1} parent=1 // pred_region
      %1885 = vsyncadd [#allocation3], 0
      %s1887 = sshll.u32 [#allocation2], 4
      %s1888 = int_to_ptr.vmem [resolvable:$true] %s1887
      %s1889 = sshll.u32 %s18, 4
      %s1890 = int_to_ptr.hbm [resolvable:$true] %s1889
      %1892 = dma.vmem_to_hbm [thread:$0]  %s1888, 32, %s1890, [#allocation3]
    $region77: #{bertweet_classifier_forward.1} parent=1 // pred_fallthru
      _
    // Predicated region
    $region78: #{bertweet_classifier_forward.1} parent=1 // pred_check
      _
    $region79: #{bertweet_classifier_forward.1} parent=1 // pred_check_branch
      %1894 = sbr.rel (0) target = $region81
    $region80: #{bertweet_classifier_forward.1} parent=1 // pred_region
      %1896 = dma.done [#allocation3], 32
    $region81: #{bertweet_classifier_forward.1} parent=1 // pred_fallthru
      _
    %1897 = vsyncpa [#allocation3], 1

</llo_original>
